<compile_context>
chip_gen: v7x
topology: tpu7x:2x2x1
jax: 0.10.0
libtpu: 0.0.40
codegen_flags: <defaults>
</compile_context>

<pallas_src>
import jax
import jax.numpy as jnp
from jax.experimental import pallas as pl
from jax.experimental.pallas import tpu as pltpu

RELU_TH = 0.01  # nn.Threshold(threshold=0.01, value=0)


# ------------------------------ Pallas kernel ------------------------------ #
def sd_lstm_kernel(y_ref, x_ref, c_ref,
                   w1y_ref, w2yT_ref, w1x_ref, w2xT_ref, bias_ref,
                   xo_ref, co_ref):
    # Per grid step (row-stacked batch block of Bblk elements):
    #   y_ref   : (Bblk*F1, F2)                x_ref / c_ref : (Bblk*H1, H2)
    #   w1y_ref : (3, H1, F1)                  w2yT_ref : (F2, 3*H2)   gate-stacked, pre-T
    #   w1x_ref : (3*H1, H1)   gate-stacked    w2xT_ref : (3, H2, H2)  pre-T
    #   bias_ref: (3, Bblk*H1, H2)  folded (b1,b2), path-combined, batch-tiled, f32
    #   xo_ref / co_ref : (Bblk*H1, H2)
    H1 = w1x_ref.shape[1]
    H2 = x_ref.shape[1]
    F1 = w1y_ref.shape[2]
    BH1 = x_ref.shape[0]
    Bblk = BH1 // H1

    f32 = jnp.float32
    cdt = w1x_ref.dtype                      # matmul operand dtype (f32 or bf16)

    # Loads hoisted to the top of the step (weights are grid-resident blocks).
    x_f32 = x_ref[...]                       # (BH1, H2), f32 (used in gate math)
    c_f32 = c_ref[...]
    w1y_all = w1y_ref[...]                   # (3, H1, F1)
    w2yT = w2yT_ref[...]                     # (F2, 3*H2)
    w1x_all = w1x_ref[...]                   # (3*H1, H1)
    w2xT_all = w2xT_ref[...]                 # (3, H2, H2)
    bias_all = bias_ref[...]                 # (3, BH1, H2), f32

    x_mm = x_f32.astype(cdt)
    y_mm = y_ref[...].astype(cdt)            # (Bblk*F1, F2)

    # ---- x path, stage 1: W1x_all @ x_b, batched over Bblk (one einsum) ----
    #   (Bblk, 3H1, H1) x (Bblk, H1, H2) -> (Bblk, 3H1, H2)
    w1x_bc = jnp.broadcast_to(w1x_all[None], (Bblk,) + w1x_all.shape)
    x3 = x_mm.reshape(Bblk, H1, H2)
    t_x = jnp.einsum('bmh,bhk->bmk', w1x_bc, x3, preferred_element_type=f32)

    # ---- y path (reassociated), stage A: one dense gate-stacked dot ----
    #   (Bblk*F1, F2) x (F2, 3*H2) -> (Bblk*F1, 3*H2)
    u_y = jnp.dot(y_mm, w2yT, preferred_element_type=f32)
    u_y3 = u_y.reshape(Bblk, F1, 3 * H2)

    outs = []
    for g in range(3):                       # gates: 0=c, 1=f, 2=g
        # x path, stage 2: dense (Bblk*H1, H2) x (H2, H2) dot.
        t_x_g = t_x[:, g * H1:(g + 1) * H1, :].astype(cdt).reshape(BH1, H2)
        ox = jnp.dot(t_x_g, w2xT_all[g], preferred_element_type=f32)
        # y path, stage B: batched (H1, F1) x (F1, H2) dots (tiny FLOPs).
        u_g = u_y3[:, :, g * H2:(g + 1) * H2].astype(cdt)          # (Bblk, F1, H2)
        w1y_g = jnp.broadcast_to(w1y_all[g].astype(cdt)[None], (Bblk, H1, F1))
        oy = jnp.einsum('bhf,bfk->bhk', w1y_g, u_g,
                        preferred_element_type=f32).reshape(BH1, H2)
        outs.append((oy, ox))

    (cy, cx), (fy, fx), (gy, gx) = outs

    # Gate math in f32 (biases already folded into bias_all).
    c_gate = cy - cx + x_f32 + bias_all[0]
    f_gate = jax.nn.sigmoid(fy + fx + bias_all[1])
    g_gate = jax.nn.sigmoid(gy + gx + bias_all[2])

    c_out = f_gate * c_f32 + g_gate * c_gate
    xo_ref[...] = jnp.where(c_out > RELU_TH, c_out, 0.0)
    co_ref[...] = c_out


# --------------------------------- wrapper ---------------------------------- #
def sd_lstm_pallas(y, x, c, params, *, batch_block=8, compute_dtype=jnp.float32):
    B, F1, F2 = y.shape
    _, H1, H2 = x.shape
    Bblk = batch_block
    assert B % Bblk == 0, "batch_block must divide B"
    assert (Bblk * F1) % 8 == 0 and (Bblk * H1) % 8 == 0, "row blocks must be 8-aligned"

    # Row-stacked 2-D views (free reshapes: batch is the leading dim).
    y2 = y.reshape(B * F1, F2)
    x2 = x.reshape(B * H1, H2)
    c2 = c.reshape(B * H1, H2)

    w1y, b1y, w2y, b2y = params["w1y"], params["b1y"], params["w2y"], params["b2y"]
    w1x, b1x, w2x, b2x = params["w1x"], params["b1x"], params["w2x"], params["b2x"]

    # Gate-stacked / pre-transposed weights (host-side, once). Optional bf16 cast
    # of matmul operands (v6e/v7x); accumulation stays f32 inside the kernel.
    w1y_p = w1y.astype(compute_dtype)                                   # (3, H1, F1)
    w2yT_stk = jnp.concatenate([w2y[g].T for g in range(3)],
                               axis=1).astype(compute_dtype)            # (F2, 3*H2)
    w1x_p = w1x.reshape(3 * H1, H1).astype(compute_dtype)               # (3*H1, H1)
    w2xT_p = jnp.swapaxes(w2x, 1, 2).astype(compute_dtype)              # (3, H2, H2)

    # Fold both Linear_2D biases per gate per path:
    #   (W1 X + b1 1^T) W2^T + 1 b2^T == W1 X W2^T + b1*rowsum(W2)^T + 1 b2^T
    def fold_bias(b1, w2, b2):
        return b1[:, :, None] * jnp.sum(w2, axis=2)[:, None, :] + b2[:, None, :]

    bias_y = fold_bias(b1y, w2y, b2y)                                   # (3, H1, H2)
    bias_x = fold_bias(b1x, w2x, b2x)
    # Combine across y/x paths per the gate equations (c: y - x, f/g: y + x),
    # then pre-tile across the batch block so the kernel adds it directly.
    bias = jnp.stack([bias_y[0] - bias_x[0],
                      bias_y[1] + bias_x[1],
                      bias_y[2] + bias_x[2]], axis=0).astype(jnp.float32)
    bias_t = jnp.tile(bias, (1, Bblk, 1))                               # (3, Bblk*H1, H2)

    grid_spec = pltpu.PrefetchScalarGridSpec(
        num_scalar_prefetch=0,
        grid=(B // Bblk,),
        in_specs=[
            pl.BlockSpec((Bblk * F1, F2), lambda b: (b, 0)),            # y (row-stacked)
            pl.BlockSpec((Bblk * H1, H2), lambda b: (b, 0)),            # x
            pl.BlockSpec((Bblk * H1, H2), lambda b: (b, 0)),            # c
            pl.BlockSpec((3, H1, F1), lambda b: (0, 0, 0)),             # W1y   (resident)
            pl.BlockSpec((F2, 3 * H2), lambda b: (0, 0)),               # W2y^T (resident)
            pl.BlockSpec((3 * H1, H1), lambda b: (0, 0)),               # W1x   (resident)
            pl.BlockSpec((3, H2, H2), lambda b: (0, 0, 0)),             # W2x^T (resident)
            pl.BlockSpec((3, Bblk * H1, H2), lambda b: (0, 0, 0)),      # folded bias
        ],
        out_specs=[
            pl.BlockSpec((Bblk * H1, H2), lambda b: (b, 0)),            # x_out
            pl.BlockSpec((Bblk * H1, H2), lambda b: (b, 0)),            # c_out
        ],
    )

    out_shape = (jax.ShapeDtypeStruct((B * H1, H2), jnp.float32),
                 jax.ShapeDtypeStruct((B * H1, H2), jnp.float32))

    x_out2, c_out2 = pl.pallas_call(
        sd_lstm_kernel,
        grid_spec=grid_spec,
        out_shape=out_shape,
        compiler_params=pltpu.CompilerParams(
            dimension_semantics=("parallel",),
            # Explicit scoped-VMEM budget: safe on all generations incl. v7x
            # (64 MiB physical); per-step footprint here is ~2 MiB, so Bblk can
            # be raised further for realistic B before hitting this limit.
            vmem_limit_bytes=32 * 1024 * 1024),
    )(y2, x2, c2, w1y_p, w2yT_stk, w1x_p, w2xT_p, bias_t)

    return x_out2.reshape(B, H1, H2), c_out2.reshape(B, H1, H2)


# --------------------------- pure-JAX reference ---------------------------- #
def linear_2d_ref(x, w1, b1, w2, b2):
    # Faithful to PyTorch Linear_2D.forward (permute, linear_1, permute, linear_2).
    t = jnp.einsum("bij,oi->boj", x, w1) + b1[None, :, None]
    return jnp.einsum("boj,pj->bop", t, w2) + b2[None, None, :]


def sd_lstm_ref(y, x, c, p):
    outs_y = [linear_2d_ref(y, p["w1y"][g], p["b1y"][g], p["w2y"][g], p["b2y"][g])
              for g in range(3)]
    outs_x = [linear_2d_ref(x, p["w1x"][g], p["b1x"][g], p["w2x"][g], p["b2x"][g])
              for g in range(3)]
    c_gate = outs_y[0] - outs_x[0] + x
    f_gate = jax.nn.sigmoid(outs_y[1] + outs_x[1])
    g_gate = jax.nn.sigmoid(outs_y[2] + outs_x[2])
    c_out = f_gate * c + g_gate * c_gate
    x_out = jnp.where(c_out > RELU_TH, c_out, 0.0)
    return x_out, c_out


# --------------------------------- main ------------------------------------ #
if __name__ == "__main__":
    # Small shapes consistent with SD_LSTM:
    #   y: (B, in_features_1, in_features_2), x/c: (B, hid_features_1, hid_features_2)
    # H2 is a multiple of 128 so outputs are lane-dense; batch_block=8 gives
    # Bblk*F2=128 (v5e MXU column fill) and grid=(4,) -> >=2 steps/TC on v7x.
    B, F1, F2 = 32, 8, 16
    H1, H2 = 32, 128
    BATCH_BLOCK = 8

    key = jax.random.PRNGKey(0)
    ks = jax.random.split(key, 11)
    u = lambda k, shape, s=0.1: jax.random.uniform(k, shape, jnp.float32, -s, s)

    params = {
        # y-path Linear_2D weights (gates stacked: c, f, g)
        "w1y": u(ks[0], (3, H1, F1)),
        "b1y": u(ks[1], (3, H1)),
        "w2y": u(ks[2], (3, H2, F2)),
        "b2y": u(ks[3], (3, H2)),
        # x-path Linear_2D weights (gates stacked: c, f, g)
        "w1x": u(ks[4], (3, H1, H1)),
        "b1x": u(ks[5], (3, H1)),
        "w2x": u(ks[6], (3, H2, H2)),
        "b2x": u(ks[7], (3, H2)),
    }

    y = u(ks[8], (B, F1, F2), 0.5)
    x = u(ks[9], (B, H1, H2), 0.5)
    c = u(ks[10], (B, H1, H2), 0.5)

    # f32 matmul operands: matches the PyTorch reference up to rounding.
    x_out, c_out = sd_lstm_pallas(y, x, c, params, batch_block=BATCH_BLOCK)
    jax.block_until_ready((x_out, c_out))

    x_ref, c_ref = sd_lstm_ref(y, x, c, params)

    assert jnp.allclose(c_out, c_ref, atol=1e-4, rtol=1e-4), "c_out mismatch"
    # x_out check excludes elements whose reference value sits within rounding
    # distance of the 0.01 threshold (hard cutoff can legitimately flip there).
    near_th = jnp.abs(c_ref - RELU_TH) < 1e-4
    x_ok = jnp.where(near_th, True,
                     jnp.isclose(x_out, x_ref, atol=1e-4, rtol=1e-4))
    assert bool(jnp.all(x_ok)), "x_out mismatch"

    # bf16-operand smoke run (v6e/v7x throughput option): loose bound only —
    # the hard 0.01 threshold is rounding-sensitive under bf16 operands.
    xb, cb = sd_lstm_pallas(y, x, c, params, batch_block=BATCH_BLOCK,
                            compute_dtype=jnp.bfloat16)
    jax.block_until_ready((xb, cb))
    assert bool(jnp.all(jnp.isfinite(cb))), "bf16 c_out not finite"
    assert float(jnp.max(jnp.abs(cb - c_ref))) < 0.1, "bf16 c_out far off"

    print("KERNEL_OK")
</pallas_src>

<mosaic_0001>
module attributes {stable_mosaic.version = 11 : i64} {
  func.func @sd_lstm_kernel(%arg0: i32, %arg1: memref<64x16xf32, #tpu.memory_space<vmem>>, %arg2: memref<256x128xf32, #tpu.memory_space<vmem>>, %arg3: memref<256x128xf32, #tpu.memory_space<vmem>>, %arg4: memref<3x32x8xf32, #tpu.memory_space<vmem>>, %arg5: memref<16x384xf32, #tpu.memory_space<vmem>>, %arg6: memref<96x32xf32, #tpu.memory_space<vmem>>, %arg7: memref<3x128x128xf32, #tpu.memory_space<vmem>>, %arg8: memref<3x256x128xf32, #tpu.memory_space<vmem>>, %arg9: memref<256x128xf32, #tpu.memory_space<vmem>>, %arg10: memref<256x128xf32, #tpu.memory_space<vmem>>) attributes {dimension_semantics = [#tpu.dimension_semantics<parallel>], iteration_bounds = array<i64: 4>, scalar_prefetch = 0 : i64, scratch_operands = 0 : i64, tpu.core_type = #tpu.core_type<tc>, window_params = [{transform_indices = @transform_0, window_bounds = array<i64: 64, 16>}, {transform_indices = @transform_1, window_bounds = array<i64: 256, 128>}, {transform_indices = @transform_2, window_bounds = array<i64: 256, 128>}, {pipeline_mode = #tpu.pipeline_mode<synchronous>, transform_indices = @transform_3, window_bounds = array<i64: 3, 32, 8>}, {pipeline_mode = #tpu.pipeline_mode<synchronous>, transform_indices = @transform_4, window_bounds = array<i64: 16, 384>}, {pipeline_mode = #tpu.pipeline_mode<synchronous>, transform_indices = @transform_5, window_bounds = array<i64: 96, 32>}, {pipeline_mode = #tpu.pipeline_mode<synchronous>, transform_indices = @transform_6, window_bounds = array<i64: 3, 128, 128>}, {pipeline_mode = #tpu.pipeline_mode<synchronous>, transform_indices = @transform_7, window_bounds = array<i64: 3, 256, 128>}, {transform_indices = @transform_8, window_bounds = array<i64: 256, 128>}, {transform_indices = @transform_9, window_bounds = array<i64: 256, 128>}]} {
    %c0 = arith.constant 0 : index
    %c0_0 = arith.constant 0 : index
    %0 = vector.load %arg2[%c0, %c0_0] : memref<256x128xf32, #tpu.memory_space<vmem>>, vector<256x128xf32>
    %c0_1 = arith.constant 0 : index
    %c0_2 = arith.constant 0 : index
    %1 = vector.load %arg3[%c0_1, %c0_2] : memref<256x128xf32, #tpu.memory_space<vmem>>, vector<256x128xf32>
    %c0_3 = arith.constant 0 : index
    %c0_4 = arith.constant 0 : index
    %c0_5 = arith.constant 0 : index
    %2 = vector.load %arg4[%c0_3, %c0_4, %c0_5] : memref<3x32x8xf32, #tpu.memory_space<vmem>>, vector<3x32x8xf32>
    %c0_6 = arith.constant 0 : index
    %c0_7 = arith.constant 0 : index
    %3 = vector.load %arg5[%c0_6, %c0_7] : memref<16x384xf32, #tpu.memory_space<vmem>>, vector<16x384xf32>
    %c0_8 = arith.constant 0 : index
    %c0_9 = arith.constant 0 : index
    %4 = vector.load %arg6[%c0_8, %c0_9] : memref<96x32xf32, #tpu.memory_space<vmem>>, vector<96x32xf32>
    %c0_10 = arith.constant 0 : index
    %c0_11 = arith.constant 0 : index
    %c0_12 = arith.constant 0 : index
    %5 = vector.load %arg7[%c0_10, %c0_11, %c0_12] : memref<3x128x128xf32, #tpu.memory_space<vmem>>, vector<3x128x128xf32>
    %c0_13 = arith.constant 0 : index
    %c0_14 = arith.constant 0 : index
    %c0_15 = arith.constant 0 : index
    %6 = vector.load %arg8[%c0_13, %c0_14, %c0_15] : memref<3x256x128xf32, #tpu.memory_space<vmem>>, vector<3x256x128xf32>
    %c0_16 = arith.constant 0 : index
    %c0_17 = arith.constant 0 : index
    %7 = vector.load %arg1[%c0_16, %c0_17] : memref<64x16xf32, #tpu.memory_space<vmem>>, vector<64x16xf32>
    %8 = vector.shape_cast %4 : vector<96x32xf32> to vector<1x96x32xf32>
    %9 = vector.shape_cast %8 : vector<1x96x32xf32> to vector<1x96x32xf32>
    %10 = vector.broadcast %9 : vector<1x96x32xf32> to vector<8x96x32xf32>
    %11 = vector.shape_cast %0 : vector<256x128xf32> to vector<8x32x128xf32>
    "tpu.trace_start"() <{level = 10 : i32, message = "bmh,bhk->bmk"}> : () -> ()
    %cst = arith.constant dense<0.000000e+00> : vector<8x96x128xf32>
    %12 = tpu.matmul %10, %11, %cst {dimension_numbers = #tpu.dot_dimension_numbers<[2], [1], [1], [2], [0, 0, 0, 1, 1, 2], [0], [0]>} : vector<8x96x32xf32>, vector<8x32x128xf32>, vector<8x96x128xf32> -> vector<8x96x128xf32>
    "tpu.trace_stop"() : () -> ()
    %cst_18 = arith.constant dense<0.000000e+00> : vector<64x384xf32>
    %13 = tpu.matmul %7, %3, %cst_18 {dimension_numbers = #tpu.dot_dimension_numbers<[1], [0], [0], [1], [0, 0, 1, 1], [], []>} : vector<64x16xf32>, vector<16x384xf32>, vector<64x384xf32> -> vector<64x384xf32>
    %14 = vector.shape_cast %13 : vector<64x384xf32> to vector<8x8x384xf32>
    %15 = vector.extract_strided_slice %12 {offsets = [0, 0, 0], sizes = [8, 32, 128], strides = [1, 1, 1]} : vector<8x96x128xf32> to vector<8x32x128xf32>
    %16 = vector.shape_cast %15 : vector<8x32x128xf32> to vector<256x128xf32>
    %17 = vector.extract_strided_slice %5 {offsets = [0, 0, 0], sizes = [1, 128, 128], strides = [1, 1, 1]} : vector<3x128x128xf32> to vector<1x128x128xf32>
    %18 = vector.shape_cast %17 : vector<1x128x128xf32> to vector<128x128xf32>
    %cst_19 = arith.constant dense<0.000000e+00> : vector<256x128xf32>
    %19 = tpu.matmul %16, %18, %cst_19 {dimension_numbers = #tpu.dot_dimension_numbers<[1], [0], [0], [1], [0, 0, 1, 1], [], []>} : vector<256x128xf32>, vector<128x128xf32>, vector<256x128xf32> -> vector<256x128xf32>
    %20 = vector.extract_strided_slice %14 {offsets = [0, 0, 0], sizes = [8, 8, 128], strides = [1, 1, 1]} : vector<8x8x384xf32> to vector<8x8x128xf32>
    %21 = vector.extract_strided_slice %2 {offsets = [0, 0, 0], sizes = [1, 32, 8], strides = [1, 1, 1]} : vector<3x32x8xf32> to vector<1x32x8xf32>
    %22 = vector.shape_cast %21 : vector<1x32x8xf32> to vector<32x8xf32>
    %23 = vector.shape_cast %22 : vector<32x8xf32> to vector<1x32x8xf32>
    %24 = vector.shape_cast %23 : vector<1x32x8xf32> to vector<1x32x8xf32>
    %25 = vector.broadcast %24 : vector<1x32x8xf32> to vector<8x32x8xf32>
    "tpu.trace_start"() <{level = 10 : i32, message = "bhf,bfk->bhk"}> : () -> ()
    %cst_20 = arith.constant dense<0.000000e+00> : vector<8x32x128xf32>
    %26 = tpu.matmul %25, %20, %cst_20 {dimension_numbers = #tpu.dot_dimension_numbers<[2], [1], [1], [2], [0, 0, 0, 1, 1, 2], [0], [0]>} : vector<8x32x8xf32>, vector<8x8x128xf32>, vector<8x32x128xf32> -> vector<8x32x128xf32>
    "tpu.trace_stop"() : () -> ()
    %27 = vector.shape_cast %26 : vector<8x32x128xf32> to vector<256x128xf32>
    %28 = vector.extract_strided_slice %12 {offsets = [0, 32, 0], sizes = [8, 32, 128], strides = [1, 1, 1]} : vector<8x96x128xf32> to vector<8x32x128xf32>
    %29 = vector.shape_cast %28 : vector<8x32x128xf32> to vector<256x128xf32>
    %30 = vector.extract_strided_slice %5 {offsets = [1, 0, 0], sizes = [1, 128, 128], strides = [1, 1, 1]} : vector<3x128x128xf32> to vector<1x128x128xf32>
    %31 = vector.shape_cast %30 : vector<1x128x128xf32> to vector<128x128xf32>
    %cst_21 = arith.constant dense<0.000000e+00> : vector<256x128xf32>
    %32 = tpu.matmul %29, %31, %cst_21 {dimension_numbers = #tpu.dot_dimension_numbers<[1], [0], [0], [1], [0, 0, 1, 1], [], []>} : vector<256x128xf32>, vector<128x128xf32>, vector<256x128xf32> -> vector<256x128xf32>
    %33 = vector.extract_strided_slice %14 {offsets = [0, 0, 128], sizes = [8, 8, 128], strides = [1, 1, 1]} : vector<8x8x384xf32> to vector<8x8x128xf32>
    %34 = vector.extract_strided_slice %2 {offsets = [1, 0, 0], sizes = [1, 32, 8], strides = [1, 1, 1]} : vector<3x32x8xf32> to vector<1x32x8xf32>
    %35 = vector.shape_cast %34 : vector<1x32x8xf32> to vector<32x8xf32>
    %36 = vector.shape_cast %35 : vector<32x8xf32> to vector<1x32x8xf32>
    %37 = vector.shape_cast %36 : vector<1x32x8xf32> to vector<1x32x8xf32>
    %38 = vector.broadcast %37 : vector<1x32x8xf32> to vector<8x32x8xf32>
    "tpu.trace_start"() <{level = 10 : i32, message = "bhf,bfk->bhk"}> : () -> ()
    %cst_22 = arith.constant dense<0.000000e+00> : vector<8x32x128xf32>
    %39 = tpu.matmul %38, %33, %cst_22 {dimension_numbers = #tpu.dot_dimension_numbers<[2], [1], [1], [2], [0, 0, 0, 1, 1, 2], [0], [0]>} : vector<8x32x8xf32>, vector<8x8x128xf32>, vector<8x32x128xf32> -> vector<8x32x128xf32>
    "tpu.trace_stop"() : () -> ()
    %40 = vector.shape_cast %39 : vector<8x32x128xf32> to vector<256x128xf32>
    %41 = vector.extract_strided_slice %12 {offsets = [0, 64, 0], sizes = [8, 32, 128], strides = [1, 1, 1]} : vector<8x96x128xf32> to vector<8x32x128xf32>
    %42 = vector.shape_cast %41 : vector<8x32x128xf32> to vector<256x128xf32>
    %43 = vector.extract_strided_slice %5 {offsets = [2, 0, 0], sizes = [1, 128, 128], strides = [1, 1, 1]} : vector<3x128x128xf32> to vector<1x128x128xf32>
    %44 = vector.shape_cast %43 : vector<1x128x128xf32> to vector<128x128xf32>
    %cst_23 = arith.constant dense<0.000000e+00> : vector<256x128xf32>
    %45 = tpu.matmul %42, %44, %cst_23 {dimension_numbers = #tpu.dot_dimension_numbers<[1], [0], [0], [1], [0, 0, 1, 1], [], []>} : vector<256x128xf32>, vector<128x128xf32>, vector<256x128xf32> -> vector<256x128xf32>
    %46 = vector.extract_strided_slice %14 {offsets = [0, 0, 256], sizes = [8, 8, 128], strides = [1, 1, 1]} : vector<8x8x384xf32> to vector<8x8x128xf32>
    %47 = vector.extract_strided_slice %2 {offsets = [2, 0, 0], sizes = [1, 32, 8], strides = [1, 1, 1]} : vector<3x32x8xf32> to vector<1x32x8xf32>
    %48 = vector.shape_cast %47 : vector<1x32x8xf32> to vector<32x8xf32>
    %49 = vector.shape_cast %48 : vector<32x8xf32> to vector<1x32x8xf32>
    %50 = vector.shape_cast %49 : vector<1x32x8xf32> to vector<1x32x8xf32>
    %51 = vector.broadcast %50 : vector<1x32x8xf32> to vector<8x32x8xf32>
    "tpu.trace_start"() <{level = 10 : i32, message = "bhf,bfk->bhk"}> : () -> ()
    %cst_24 = arith.constant dense<0.000000e+00> : vector<8x32x128xf32>
    %52 = tpu.matmul %51, %46, %cst_24 {dimension_numbers = #tpu.dot_dimension_numbers<[2], [1], [1], [2], [0, 0, 0, 1, 1, 2], [0], [0]>} : vector<8x32x8xf32>, vector<8x8x128xf32>, vector<8x32x128xf32> -> vector<8x32x128xf32>
    "tpu.trace_stop"() : () -> ()
    %53 = vector.shape_cast %52 : vector<8x32x128xf32> to vector<256x128xf32>
    %54 = arith.subf %27, %19 : vector<256x128xf32>
    %55 = arith.addf %54, %0 : vector<256x128xf32>
    %56 = vector.extract_strided_slice %6 {offsets = [0, 0, 0], sizes = [1, 256, 128], strides = [1, 1, 1]} : vector<3x256x128xf32> to vector<1x256x128xf32>
    %57 = vector.shape_cast %56 : vector<1x256x128xf32> to vector<256x128xf32>
    %58 = arith.addf %55, %57 : vector<256x128xf32>
    %59 = arith.addf %40, %32 : vector<256x128xf32>
    %60 = vector.extract_strided_slice %6 {offsets = [1, 0, 0], sizes = [1, 256, 128], strides = [1, 1, 1]} : vector<3x256x128xf32> to vector<1x256x128xf32>
    %61 = vector.shape_cast %60 : vector<1x256x128xf32> to vector<256x128xf32>
    %62 = arith.addf %59, %61 : vector<256x128xf32>
    %63 = arith.negf %62 : vector<256x128xf32>
    %64 = math.exp %63 : vector<256x128xf32>
    %cst_25 = arith.constant 1.000000e+00 : f32
    %65 = vector.broadcast %cst_25 : f32 to vector<256x128xf32>
    %66 = arith.addf %65, %64 : vector<256x128xf32>
    %67 = arith.divf %65, %66 : vector<256x128xf32>
    %68 = arith.addf %53, %45 : vector<256x128xf32>
    %69 = vector.extract_strided_slice %6 {offsets = [2, 0, 0], sizes = [1, 256, 128], strides = [1, 1, 1]} : vector<3x256x128xf32> to vector<1x256x128xf32>
    %70 = vector.shape_cast %69 : vector<1x256x128xf32> to vector<256x128xf32>
    %71 = arith.addf %68, %70 : vector<256x128xf32>
    %72 = arith.negf %71 : vector<256x128xf32>
    %73 = math.exp %72 : vector<256x128xf32>
    %cst_26 = arith.constant 1.000000e+00 : f32
    %74 = vector.broadcast %cst_26 : f32 to vector<256x128xf32>
    %75 = arith.addf %74, %73 : vector<256x128xf32>
    %76 = arith.divf %74, %75 : vector<256x128xf32>
    %77 = arith.mulf %67, %1 : vector<256x128xf32>
    %78 = arith.mulf %76, %58 : vector<256x128xf32>
    %79 = arith.addf %77, %78 : vector<256x128xf32>
    %cst_27 = arith.constant 0.00999999977 : f32
    %80 = vector.broadcast %cst_27 : f32 to vector<256x128xf32>
    %81 = arith.cmpf ogt, %79, %80 : vector<256x128xf32>
    %cst_28 = arith.constant 0.000000e+00 : f32
    %82 = vector.broadcast %cst_28 : f32 to vector<256x128xf32>
    %83 = arith.select %81, %79, %82 : vector<256x128xi1>, vector<256x128xf32>
    %c0_29 = arith.constant 0 : index
    %c0_30 = arith.constant 0 : index
    %84 = vector.load %arg9[%c0_29, %c0_30] : memref<256x128xf32, #tpu.memory_space<vmem>>, vector<256x128xf32>
    tpu.vector_store %arg9[%c0_29, %c0_30], %83 {strides = array<i32>} : memref<256x128xf32, #tpu.memory_space<vmem>>, vector<256x128xf32>,
    %c0_31 = arith.constant 0 : index
    %c0_32 = arith.constant 0 : index
    %85 = vector.load %arg10[%c0_31, %c0_32] : memref<256x128xf32, #tpu.memory_space<vmem>>, vector<256x128xf32>
    tpu.vector_store %arg10[%c0_31, %c0_32], %79 {strides = array<i32>} : memref<256x128xf32, #tpu.memory_space<vmem>>, vector<256x128xf32>,
    return
  }
  func.func @transform_0(%arg0: i32) -> (i32, i32) {
    %c0_i32 = arith.constant 0 : i32
    %c0_i32_0 = arith.constant 0 : i32
    return %arg0, %c0_i32 : i32, i32
  }
  func.func @transform_1(%arg0: i32) -> (i32, i32) {
    %c0_i32 = arith.constant 0 : i32
    %c0_i32_0 = arith.constant 0 : i32
    return %arg0, %c0_i32 : i32, i32
  }
  func.func @transform_2(%arg0: i32) -> (i32, i32) {
    %c0_i32 = arith.constant 0 : i32
    %c0_i32_0 = arith.constant 0 : i32
    return %arg0, %c0_i32 : i32, i32
  }
  func.func @transform_3(%arg0: i32) -> (i32, i32, i32) {
    %c0_i32 = arith.constant 0 : i32
    %c0_i32_0 = arith.constant 0 : i32
    %c0_i32_1 = arith.constant 0 : i32
    %c0_i32_2 = arith.constant 0 : i32
    return %c0_i32, %c0_i32_0, %c0_i32_1 : i32, i32, i32
  }
  func.func @transform_4(%arg0: i32) -> (i32, i32) {
    %c0_i32 = arith.constant 0 : i32
    %c0_i32_0 = arith.constant 0 : i32
    %c0_i32_1 = arith.constant 0 : i32
    return %c0_i32, %c0_i32_0 : i32, i32
  }
  func.func @transform_5(%arg0: i32) -> (i32, i32) {
    %c0_i32 = arith.constant 0 : i32
    %c0_i32_0 = arith.constant 0 : i32
    %c0_i32_1 = arith.constant 0 : i32
    return %c0_i32, %c0_i32_0 : i32, i32
  }
  func.func @transform_6(%arg0: i32) -> (i32, i32, i32) {
    %c0_i32 = arith.constant 0 : i32
    %c0_i32_0 = arith.constant 0 : i32
    %c0_i32_1 = arith.constant 0 : i32
    %c0_i32_2 = arith.constant 0 : i32
    return %c0_i32, %c0_i32_0, %c0_i32_1 : i32, i32, i32
  }
  func.func @transform_7(%arg0: i32) -> (i32, i32, i32) {
    %c0_i32 = arith.constant 0 : i32
    %c0_i32_0 = arith.constant 0 : i32
    %c0_i32_1 = arith.constant 0 : i32
    %c0_i32_2 = arith.constant 0 : i32
    return %c0_i32, %c0_i32_0, %c0_i32_1 : i32, i32, i32
  }
  func.func @transform_8(%arg0: i32) -> (i32, i32) {
    %c0_i32 = arith.constant 0 : i32
    %c0_i32_0 = arith.constant 0 : i32
    return %arg0, %c0_i32 : i32, i32
  }
  func.func @transform_9(%arg0: i32) -> (i32, i32) {
    %c0_i32 = arith.constant 0 : i32
    %c0_i32_0 = arith.constant 0 : i32
    return %arg0, %c0_i32 : i32, i32
  }
}

</mosaic_0001>

<llo_original>
// kernel: tpu_custom_call.1
$region0: #{tpu_custom_call.1}
  #allocation0 [shape = 'u32[]', space=smem, size = 0x4, offset = 0x4, fixed_abs, tag = 'smem constant byte address 0x4 - core index']
  #allocation1 [shape = 'u32[144,128]{1,0:T(1,128)}', space=vmem, size = 0x12000, scoped, tag = 'internal scratch']
  %s0 = inlined_call_operand.vmem [shape: f32[256,16], index: 0, kind: input, shape index: {}]
  %s1 = inlined_call_operand.hbm [shape: f32[1024,128], index: 1, kind: input, shape index: {}]
  %s2 = inlined_call_operand.hbm [shape: f32[1024,128], index: 2, kind: input, shape index: {}]
  %s3 = inlined_call_operand.vmem [shape: f32[3,32,8], index: 3, kind: input, shape index: {}]
  %s4 = inlined_call_operand.vmem [shape: f32[16,384], index: 4, kind: input, shape index: {}]
  %s5 = inlined_call_operand.vmem [shape: f32[96,32], index: 5, kind: input, shape index: {}]
  %s6 = inlined_call_operand.vmem [shape: f32[3,128,128], index: 6, kind: input, shape index: {}]
  %s7 = inlined_call_operand.hbm [shape: f32[3,256,128], index: 7, kind: input, shape index: {}]
  %s8 = inlined_call_operand.hbm [shape: f32[1024,128], index: 8, kind: output, shape index: {0}]
  %s9 = inlined_call_operand.hbm [shape: f32[1024,128], index: 9, kind: output, shape index: {1}]
  %10 = xla_tuple %s8, %s9
  %s11 = sld [smem:[#allocation0]]
  $region85: #{tpu_custom_call.1} parent=0
    _
  %s13 = ssub.s32 1, %s11
  %s14 = scalar_select 0, %s13, %s11
  $region1: #{tpu_custom_call.1} parent=0
    #allocation2 [shape = 'u8[262144]{0}', space=vmem, size = 0x40000, scoped, tag = 'input window, operand 1']
    #allocation3 [shape = 's32[2]{0}', space=sflag, size = 0x8, scoped, tag = 'scoped memory for tpu_custom_call.1']
    #allocation4 [shape = 's32[2]{0}', space=sflag, size = 0x8, scoped, tag = 'scoped memory for tpu_custom_call.1']
    #allocation5 [shape = 'u8[262144]{0}', space=vmem, size = 0x40000, scoped, tag = 'input window, operand 2']
    #allocation6 [shape = 's32[2]{0}', space=sflag, size = 0x8, scoped, tag = 'scoped memory for tpu_custom_call.1']
    #allocation7 [shape = 'u8[393216]{0}', space=vmem, size = 0x60000, scoped, tag = 'input window, operand 7, single buffered']
    #allocation8 [shape = 'u8[262144]{0}', space=vmem, size = 0x40000, scoped, tag = 'output window, operand 0']
    #allocation9 [shape = 'u8[262144]{0}', space=vmem, size = 0x40000, scoped, tag = 'output window, operand 1']
    #allocation10 [shape = 's32[2]{0}', space=sflag, size = 0x8, scoped, tag = 'scoped memory for tpu_custom_call.1']
    %15 = vsyncpa [#allocation3], 0
    %s16 = scalar_lea.sflag [#allocation3], 1
    %17 = vsyncpa %s16, 0
    %18 = vsyncpa [#allocation6], 0
    %s19 = scalar_lea.sflag [#allocation6], 1
    %20 = vsyncpa %s19, 0
    %21 = vsyncpa [#allocation4], 0
    %s22 = scalar_lea.sflag [#allocation4], 1
    %23 = vsyncpa %s22, 0
    %24 = vsyncpa [#allocation10], 0
    %s25 = scalar_lea.sflag [#allocation10], 1
    %26 = vsyncpa %s25, 0
    loop: start=0, step=1, limit=6
    $region2: #{tpu_custom_call.1} parent=1 // loop_pre_header
      _
    $region3: #{tpu_custom_call.1} parent=1 // loop_header
      %s28 = sphi 0, %s32
      %p29 = scmp.ge.s32.totalorder %s28, 6
      %s38 = sphi 0, %s40
      %s41 = sphi 0, %s38
      %s42 = sphi 0, %s41
      %s58 = sphi 0, %s42
      %s64 = sphi 0, %s66
      %s67 = sphi 0, %s64
      %s68 = sphi 0, %s67
      %s84 = sphi 0, %s68
      %s90 = sphi 0, %s92
      %s93 = sphi 0, %s90
      %s94 = sphi 0, %s93
      %s110 = sphi 0, %s94
      %s114 = sphi 0, %s114
      %s116 = sphi 0, %s114
      %s117 = sphi 0, %s116
      %s131 = sphi 0, %s117
      %s135 = sphi 0, %s135
      %s137 = sphi 0, %s135
      %s138 = sphi 0, %s137
      %s152 = sphi 0, %s138
      %s156 = sphi 0, %s156
      %s158 = sphi 0, %s156
      %s159 = sphi 0, %s158
      %s173 = sphi 0, %s159
      %s177 = sphi 0, %s177
      %s179 = sphi 0, %s177
      %s180 = sphi 0, %s179
      %s194 = sphi 0, %s180
      %s198 = sphi 0, %s198
      %s200 = sphi 0, %s198
      %s201 = sphi 0, %s200
      %s215 = sphi 0, %s201
      %s221 = sphi 0, %s223
      %s224 = sphi 0, %s221
      %s225 = sphi 0, %s224
      %s241 = sphi 0, %s225
      %s247 = sphi 0, %s249
      %s250 = sphi 0, %s247
      %s251 = sphi 0, %s250
      %s267 = sphi 0, %s251
    $region4: #{tpu_custom_call.1} parent=1 // loop_header_branch
      %31 = sbr.rel (%p29) target = $region8
    $region5: #{tpu_custom_call.1} parent=1 // loop_body
      %s33 = ssub.s32 %s28, 1
      %s34 = ssub.s32 %s28, 2
      %s35 = sadd.s32 %s28, 1
      %s36 = ssub.s32 %s28, %s35
      %p37 = scmp.eq.s32.totalorder %s36, 0
      %s39 = sadd.s32 %s38, 1
      %s40 = scalar_select %p37, %s38, %s39
      %p43 = pneg %p37
      %p44 = scmp.eq.s32.totalorder %s28, 3
      %p45 = por %p43, %p44
      %p46 = scmp.ne.s32.totalorder %s38, %s41
      %p47 = scmp.eq.s32.totalorder %s28, 0
      %p48 = por %p46, %p47
      %p49 = scmp.ne.s32.totalorder %s38, %s41
      %p50 = scmp.eq.s32.totalorder %s33, 3
      %p51 = por %p49, %p50
      %p52 = scmp.ne.s32.totalorder %s41, %s42
      %p53 = scmp.eq.s32.totalorder %s33, 0
      %p54 = por %p52, %p53
      %p55 = scmp.ne.s32.totalorder %s41, %s42
      %p56 = scmp.eq.s32.totalorder %s34, 3
      %p57 = por %p55, %p56
      %p59 = scmp.ne.s32.totalorder %s42, %s58
      %p60 = scmp.eq.s32.totalorder %s34, 0
      %p61 = por %p59, %p60
      %s62 = ssub.s32 %s28, %s35
      %p63 = scmp.eq.s32.totalorder %s62, 0
      %s65 = sadd.s32 %s64, 1
      %s66 = scalar_select %p63, %s64, %s65
      %p69 = pneg %p63
      %p70 = scmp.eq.s32.totalorder %s28, 3
      %p71 = por %p69, %p70
      %p72 = scmp.ne.s32.totalorder %s64, %s67
      %p73 = scmp.eq.s32.totalorder %s28, 0
      %p74 = por %p72, %p73
      %p75 = scmp.ne.s32.totalorder %s64, %s67
      %p76 = scmp.eq.s32.totalorder %s33, 3
      %p77 = por %p75, %p76
      %p78 = scmp.ne.s32.totalorder %s67, %s68
      %p79 = scmp.eq.s32.totalorder %s33, 0
      %p80 = por %p78, %p79
      %p81 = scmp.ne.s32.totalorder %s67, %s68
      %p82 = scmp.eq.s32.totalorder %s34, 3
      %p83 = por %p81, %p82
      %p85 = scmp.ne.s32.totalorder %s68, %s84
      %p86 = scmp.eq.s32.totalorder %s34, 0
      %p87 = por %p85, %p86
      %s88 = ssub.s32 %s28, %s35
      %p89 = scmp.eq.s32.totalorder %s88, 0
      %s91 = sadd.s32 %s90, 1
      %s92 = scalar_select %p89, %s90, %s91
      %p95 = pneg %p89
      %p96 = scmp.eq.s32.totalorder %s28, 3
      %p97 = por %p95, %p96
      %p98 = scmp.ne.s32.totalorder %s90, %s93
      %p99 = scmp.eq.s32.totalorder %s28, 0
      %p100 = por %p98, %p99
      %p101 = scmp.ne.s32.totalorder %s90, %s93
      %p102 = scmp.eq.s32.totalorder %s33, 3
      %p103 = por %p101, %p102
      %p104 = scmp.ne.s32.totalorder %s93, %s94
      %p105 = scmp.eq.s32.totalorder %s33, 0
      %p106 = por %p104, %p105
      %p107 = scmp.ne.s32.totalorder %s93, %s94
      %p108 = scmp.eq.s32.totalorder %s34, 3
      %p109 = por %p107, %p108
      %p111 = scmp.ne.s32.totalorder %s94, %s110
      %p112 = scmp.eq.s32.totalorder %s34, 0
      %p113 = por %p111, %p112
      %s115 = sadd.s32 %s114, 1
      %p118 = scmp.eq.s32.totalorder %s28, 3
      %p119 = scmp.ne.s32.totalorder %s114, %s116
      %p120 = scmp.eq.s32.totalorder %s28, 0
      %p121 = por %p119, %p120
      %p122 = scmp.ne.s32.totalorder %s114, %s116
      %p123 = scmp.eq.s32.totalorder %s33, 3
      %p124 = por %p122, %p123
      %p125 = scmp.ne.s32.totalorder %s116, %s117
      %p126 = scmp.eq.s32.totalorder %s33, 0
      %p127 = por %p125, %p126
      %p128 = scmp.ne.s32.totalorder %s116, %s117
      %p129 = scmp.eq.s32.totalorder %s34, 3
      %p130 = por %p128, %p129
      %p132 = scmp.ne.s32.totalorder %s117, %s131
      %p133 = scmp.eq.s32.totalorder %s34, 0
      %p134 = por %p132, %p133
      %s136 = sadd.s32 %s135, 1
      %p139 = scmp.eq.s32.totalorder %s28, 3
      %p140 = scmp.ne.s32.totalorder %s135, %s137
      %p141 = scmp.eq.s32.totalorder %s28, 0
      %p142 = por %p140, %p141
      %p143 = scmp.ne.s32.totalorder %s135, %s137
      %p144 = scmp.eq.s32.totalorder %s33, 3
      %p145 = por %p143, %p144
      %p146 = scmp.ne.s32.totalorder %s137, %s138
      %p147 = scmp.eq.s32.totalorder %s33, 0
      %p148 = por %p146, %p147
      %p149 = scmp.ne.s32.totalorder %s137, %s138
      %p150 = scmp.eq.s32.totalorder %s34, 3
      %p151 = por %p149, %p150
      %p153 = scmp.ne.s32.totalorder %s138, %s152
      %p154 = scmp.eq.s32.totalorder %s34, 0
      %p155 = por %p153, %p154
      %s157 = sadd.s32 %s156, 1
      %p160 = scmp.eq.s32.totalorder %s28, 3
      %p161 = scmp.ne.s32.totalorder %s156, %s158
      %p162 = scmp.eq.s32.totalorder %s28, 0
      %p163 = por %p161, %p162
      %p164 = scmp.ne.s32.totalorder %s156, %s158
      %p165 = scmp.eq.s32.totalorder %s33, 3
      %p166 = por %p164, %p165
      %p167 = scmp.ne.s32.totalorder %s158, %s159
      %p168 = scmp.eq.s32.totalorder %s33, 0
      %p169 = por %p167, %p168
      %p170 = scmp.ne.s32.totalorder %s158, %s159
      %p171 = scmp.eq.s32.totalorder %s34, 3
      %p172 = por %p170, %p171
      %p174 = scmp.ne.s32.totalorder %s159, %s173
      %p175 = scmp.eq.s32.totalorder %s34, 0
      %p176 = por %p174, %p175
      %s178 = sadd.s32 %s177, 1
      %p181 = scmp.eq.s32.totalorder %s28, 3
      %p182 = scmp.ne.s32.totalorder %s177, %s179
      %p183 = scmp.eq.s32.totalorder %s28, 0
      %p184 = por %p182, %p183
      %p185 = scmp.ne.s32.totalorder %s177, %s179
      %p186 = scmp.eq.s32.totalorder %s33, 3
      %p187 = por %p185, %p186
      %p188 = scmp.ne.s32.totalorder %s179, %s180
      %p189 = scmp.eq.s32.totalorder %s33, 0
      %p190 = por %p188, %p189
      %p191 = scmp.ne.s32.totalorder %s179, %s180
      %p192 = scmp.eq.s32.totalorder %s34, 3
      %p193 = por %p191, %p192
      %p195 = scmp.ne.s32.totalorder %s180, %s194
      %p196 = scmp.eq.s32.totalorder %s34, 0
      %p197 = por %p195, %p196
      %s199 = sadd.s32 %s198, 1
      %p202 = scmp.eq.s32.totalorder %s28, 3
      %p203 = scmp.ne.s32.totalorder %s198, %s200
      %p204 = scmp.eq.s32.totalorder %s28, 0
      %p205 = por %p203, %p204
      %p206 = scmp.ne.s32.totalorder %s198, %s200
      %p207 = scmp.eq.s32.totalorder %s33, 3
      %p208 = por %p206, %p207
      %p209 = scmp.ne.s32.totalorder %s200, %s201
      %p210 = scmp.eq.s32.totalorder %s33, 0
      %p211 = por %p209, %p210
      %p212 = scmp.ne.s32.totalorder %s200, %s201
      %p213 = scmp.eq.s32.totalorder %s34, 3
      %p214 = por %p212, %p213
      %p216 = scmp.ne.s32.totalorder %s201, %s215
      %p217 = scmp.eq.s32.totalorder %s34, 0
      %p218 = por %p216, %p217
      %s219 = ssub.s32 %s28, %s35
      %p220 = scmp.eq.s32.totalorder %s219, 0
      %s222 = sadd.s32 %s221, 1
      %s223 = scalar_select %p220, %s221, %s222
      %p226 = pneg %p220
      %p227 = scmp.eq.s32.totalorder %s28, 3
      %p228 = por %p226, %p227
      %p229 = scmp.ne.s32.totalorder %s221, %s224
      %p230 = scmp.eq.s32.totalorder %s28, 0
      %p231 = por %p229, %p230
      %p232 = scmp.ne.s32.totalorder %s221, %s224
      %p233 = scmp.eq.s32.totalorder %s33, 3
      %p234 = por %p232, %p233
      %p235 = scmp.ne.s32.totalorder %s224, %s225
      %p236 = scmp.eq.s32.totalorder %s33, 0
      %p237 = por %p235, %p236
      %p238 = scmp.ne.s32.totalorder %s224, %s225
      %p239 = scmp.eq.s32.totalorder %s34, 3
      %p240 = por %p238, %p239
      %p242 = scmp.ne.s32.totalorder %s225, %s241
      %p243 = scmp.eq.s32.totalorder %s34, 0
      %p244 = por %p242, %p243
      %s245 = ssub.s32 %s28, %s35
      %p246 = scmp.eq.s32.totalorder %s245, 0
      %s248 = sadd.s32 %s247, 1
      %s249 = scalar_select %p246, %s247, %s248
      %p252 = pneg %p246
      %p253 = scmp.eq.s32.totalorder %s28, 3
      %p254 = por %p252, %p253
      %p255 = scmp.ne.s32.totalorder %s247, %s250
      %p256 = scmp.eq.s32.totalorder %s28, 0
      %p257 = por %p255, %p256
      %p258 = scmp.ne.s32.totalorder %s247, %s250
      %p259 = scmp.eq.s32.totalorder %s33, 3
      %p260 = por %p258, %p259
      %p261 = scmp.ne.s32.totalorder %s250, %s251
      %p262 = scmp.eq.s32.totalorder %s33, 0
      %p263 = por %p261, %p262
      %p264 = scmp.ne.s32.totalorder %s250, %s251
      %p265 = scmp.eq.s32.totalorder %s34, 3
      %p266 = por %p264, %p265
      %p268 = scmp.ne.s32.totalorder %s251, %s267
      %p269 = scmp.eq.s32.totalorder %s34, 0
      %p270 = por %p268, %p269
      %p271 = scmp.le.s32.totalorder 1, %s28
      %p272 = scmp.lt.s32.totalorder %s28, 5
      %p273 = pnand %p271, %p272
      %p274 = pneg %p273
      // Predicated region
      $region9: #{tpu_custom_call.1} parent=5 // pred_check
        _
      $region10: #{tpu_custom_call.1} parent=5 // pred_check_branch
        %276 = sbr.rel (%p273) target = $region12
      $region11: #{tpu_custom_call.1} parent=5 // pred_region
        %s277 = ssub.s32 %s28, 1
        // Predicated region
        $region13: #{tpu_custom_call.1} parent=11 // pred_check
          %p278 = pneg %p127
        $region14: #{tpu_custom_call.1} parent=11 // pred_check_branch
          %280 = sbr.rel (%p278) target = $region16
        $region15: #{tpu_custom_call.1} parent=11 // pred_region
          _
        $region16: #{tpu_custom_call.1} parent=11 // pred_fallthru
          _
        // Predicated region
        $region17: #{tpu_custom_call.1} parent=11 // pred_check
          %p281 = pneg %p148
        $region18: #{tpu_custom_call.1} parent=11 // pred_check_branch
          %283 = sbr.rel (%p281) target = $region20
        $region19: #{tpu_custom_call.1} parent=11 // pred_region
          _
        $region20: #{tpu_custom_call.1} parent=11 // pred_fallthru
          _
        // Predicated region
        $region21: #{tpu_custom_call.1} parent=11 // pred_check
          %p284 = pneg %p169
        $region22: #{tpu_custom_call.1} parent=11 // pred_check_branch
          %286 = sbr.rel (%p284) target = $region24
        $region23: #{tpu_custom_call.1} parent=11 // pred_region
          _
        $region24: #{tpu_custom_call.1} parent=11 // pred_fallthru
          _
        // Predicated region
        $region25: #{tpu_custom_call.1} parent=11 // pred_check
          %p287 = pneg %p190
        $region26: #{tpu_custom_call.1} parent=11 // pred_check_branch
          %289 = sbr.rel (%p287) target = $region28
        $region27: #{tpu_custom_call.1} parent=11 // pred_region
          _
        $region28: #{tpu_custom_call.1} parent=11 // pred_fallthru
          _
        // Predicated region
        $region29: #{tpu_custom_call.1} parent=11 // pred_check
          %p290 = pneg %p211
        $region30: #{tpu_custom_call.1} parent=11 // pred_check_branch
          %292 = sbr.rel (%p290) target = $region32
        $region31: #{tpu_custom_call.1} parent=11 // pred_region
          %s294 = ssub.s32 12288, 12288
          %295 = vsyncadd [#allocation6], %s294
          %s296 = sshll.u32 [#allocation7], 4
          %s297 = int_to_ptr.vmem [resolvable:$true] %s296
          %302 = dma.hbm_to_vmem [thread:$0]  %s7, 12288, %s297, [#allocation6], 128, 128, 8
        $region32: #{tpu_custom_call.1} parent=11 // pred_fallthru
          _
      $region12: #{tpu_custom_call.1} parent=5 // pred_fallthru
        _
      %p303 = scmp.lt.s32.totalorder %s28, 4
      // Predicated region
      $region33: #{tpu_custom_call.1} parent=5 // pred_check
        %p304 = pneg %p303
      $region34: #{tpu_custom_call.1} parent=5 // pred_check_branch
        %306 = sbr.rel (%p304) target = $region36
      $region35: #{tpu_custom_call.1} parent=5 // pred_region
        // Predicated region
        $region37: #{tpu_custom_call.1} parent=35 // pred_check
          %p307 = pneg %p48
        $region38: #{tpu_custom_call.1} parent=35 // pred_check_branch
          %309 = sbr.rel (%p307) target = $region40
        $region39: #{tpu_custom_call.1} parent=35 // pred_region
          %s310 = smul.u32 8, %s28
          %p311 = scmp.lt.s32.totalorder %s310, 31
          %s312 = scalar_select %p311, %s310, 31
          %s313 = smul.addr %s312, 8
          %s314 = scalar_lea.vmem %s0, %s313
          %s315 = smul.u32 8, %s28
        $region40: #{tpu_custom_call.1} parent=35 // pred_fallthru
          _
        // Predicated region
        $region41: #{tpu_custom_call.1} parent=35 // pred_check
          %p316 = pneg %p74
        $region42: #{tpu_custom_call.1} parent=35 // pred_check_branch
          %318 = sbr.rel (%p316) target = $region44
        $region43: #{tpu_custom_call.1} parent=35 // pred_region
          %s319 = sand.u32 %s64, 1
          %s320 = scalar_lea.sflag [#allocation3], %s319
          %s321 = sand.u32 %s64, 1
          %s322 = smul.addr %s321, 256
          %s323 = scalar_lea.vmem [#allocation2], %s322
          %s324 = smul.u32 32, %s28
          %s326 = ssub.s32 4096, 4096
          %327 = vsyncadd %s320, %s326
          %s328 = smul.addr %s324, 128
          %s329 = scalar_lea.hbm %s1, %s328
          %s330 = sshll.u32 %s323, 4
          %s331 = int_to_ptr.vmem [resolvable:$true] %s330
          %336 = dma.hbm_to_vmem [thread:$0]  %s329, 4096, %s331, %s320, 128, 128, 8
        $region44: #{tpu_custom_call.1} parent=35 // pred_fallthru
          _
        // Predicated region
        $region45: #{tpu_custom_call.1} parent=35 // pred_check
          %p337 = pneg %p100
        $region46: #{tpu_custom_call.1} parent=35 // pred_check_branch
          %339 = sbr.rel (%p337) target = $region48
        $region47: #{tpu_custom_call.1} parent=35 // pred_region
          %s340 = sand.u32 %s28, 1
          %s341 = scalar_lea.sflag [#allocation6], %s340
          %s342 = sand.u32 %s90, 1
          %s343 = smul.addr %s342, 256
          %s344 = scalar_lea.vmem [#allocation5], %s343
          %s345 = smul.u32 32, %s28
          %s347 = ssub.s32 4096, 4096
          %348 = vsyncadd %s341, %s347
          %s349 = smul.addr %s345, 128
          %s350 = scalar_lea.hbm %s2, %s349
          %s351 = sshll.u32 %s344, 4
          %s352 = int_to_ptr.vmem [resolvable:$true] %s351
          %357 = dma.hbm_to_vmem [thread:$0]  %s350, 4096, %s352, %s341, 128, 128, 8
        $region48: #{tpu_custom_call.1} parent=35 // pred_fallthru
          _
      $region36: #{tpu_custom_call.1} parent=5 // pred_fallthru
        _
      %p358 = scmp.le.s32.totalorder 1, %s28
      %p359 = scmp.lt.s32.totalorder %s28, 5
      %p360 = pnand %p358, %p359
      %p361 = pneg %p360
      // Predicated region
      $region49: #{tpu_custom_call.1} parent=5 // pred_check
        _
      $region50: #{tpu_custom_call.1} parent=5 // pred_check_branch
        %363 = sbr.rel (%p360) target = $region52
      $region51: #{tpu_custom_call.1} parent=5 // pred_region
        %s364 = ssub.s32 %s28, 1
        %s365 = sand.u32 %s67, 1
        %s366 = scalar_lea.sflag [#allocation3], %s365
        %s367 = sand.u32 %s67, 1
        %s368 = smul.addr %s367, 256
        %s369 = scalar_lea.vmem [#allocation2], %s368
        // Predicated region
        $region53: #{tpu_custom_call.1} parent=51 // pred_check
          %p370 = pneg %p80
        $region54: #{tpu_custom_call.1} parent=51 // pred_check_branch
          %372 = sbr.rel (%p370) target = $region56
        $region55: #{tpu_custom_call.1} parent=51 // pred_region
          %373 = dma.done %s366, 4096
        $region56: #{tpu_custom_call.1} parent=51 // pred_fallthru
          _
        %s374 = sand.u32 %s33, 1
        %s375 = scalar_lea.sflag [#allocation6], %s374
        %s376 = sand.u32 %s93, 1
        %s377 = smul.addr %s376, 256
        %s378 = scalar_lea.vmem [#allocation5], %s377
        // Predicated region
        $region57: #{tpu_custom_call.1} parent=51 // pred_check
          %p379 = pneg %p106
        $region58: #{tpu_custom_call.1} parent=51 // pred_check_branch
          %381 = sbr.rel (%p379) target = $region60
        $region59: #{tpu_custom_call.1} parent=51 // pred_region
          %382 = dma.done %s375, 4096
        $region60: #{tpu_custom_call.1} parent=51 // pred_fallthru
          _
        // Predicated region
        $region61: #{tpu_custom_call.1} parent=51 // pred_check
          %p383 = pneg %p211
        $region62: #{tpu_custom_call.1} parent=51 // pred_check_branch
          %385 = sbr.rel (%p383) target = $region64
        $region63: #{tpu_custom_call.1} parent=51 // pred_region
          %386 = dma.done [#allocation6], 12288
        $region64: #{tpu_custom_call.1} parent=51 // pred_fallthru
          _
        %s387 = smul.u32 8, %s33
        %p388 = scmp.lt.s32.totalorder %s387, 31
        %s389 = scalar_select %p388, %s387, 31
        %s390 = smul.addr %s389, 8
        %s391 = scalar_lea.vmem %s0, %s390
        %p392 = pneg %p54
        %p393 = pneg %p51
        %s394 = sand.u32 %s67, 1
        %s395 = scalar_lea.sflag [#allocation3], %s394
        %s396 = sand.u32 %s67, 1
        %s397 = smul.addr %s396, 256
        %s398 = scalar_lea.vmem [#allocation2], %s397
        %p399 = pneg %p80
        %p400 = pneg %p77
        %s401 = sand.u32 %s33, 1
        %s402 = scalar_lea.sflag [#allocation6], %s401
        %s403 = sand.u32 %s93, 1
        %s404 = smul.addr %s403, 256
        %s405 = scalar_lea.vmem [#allocation5], %s404
        %p406 = pneg %p106
        %p407 = pneg %p103
        %p408 = pneg %p127
        %p409 = pneg %p124
        %p410 = pneg %p148
        %p411 = pneg %p145
        %p412 = pneg %p169
        %p413 = pneg %p166
        %p414 = pneg %p190
        %p415 = pneg %p187
        %p416 = pneg %p211
        %p417 = pneg %p208
        %p418 = pneg %p237
        %p419 = pneg %p234
        %s420 = sand.u32 %s224, 1
        %s421 = scalar_lea.sflag [#allocation4], %s420
        %s422 = sand.u32 %s224, 1
        %s423 = smul.addr %s422, 256
        %s424 = scalar_lea.vmem [#allocation8], %s423
        %p425 = pneg %p263
        %p426 = pneg %p260
        %s427 = sand.u32 %s250, 1
        %s428 = scalar_lea.sflag [#allocation10], %s427
        %s429 = sand.u32 %s250, 1
        %s430 = smul.addr %s429, 256
        %s431 = scalar_lea.vmem [#allocation9], %s430
        %s432 = smul.u32 8, %s33
        %p433 = scmp.lt.s32.totalorder %s432, 31
        %s434 = scalar_select %p433, %s432, 31
        %s435 = smul.addr %s434, 8
        %s436 = scalar_lea.vmem %s0, %s435
        %s437 = smul.u32 8, %s33
        %s438 = smul.u32 32, %s33
        %s439 = smul.u32 32, %s33
        %s440 = smul.u32 32, %s33
        %s441 = smul.u32 32, %s33
        %v442 = vld [vmem:[%s369] sm:$0xff]
        %v443 = vld [vmem:[%s369 + $0x8] sm:$0xff]
        %v444 = vld [vmem:[%s369 + $0x10] sm:$0xff]
        %v445 = vld [vmem:[%s369 + $0x18] sm:$0xff]
        %v446 = vld [vmem:[%s369 + $0x20] sm:$0xff]
        %v447 = vld [vmem:[%s369 + $0x28] sm:$0xff]
        %v448 = vld [vmem:[%s369 + $0x30] sm:$0xff]
        %v449 = vld [vmem:[%s369 + $0x38] sm:$0xff]
        %v450 = vld [vmem:[%s369 + $0x40] sm:$0xff]
        %v451 = vld [vmem:[%s369 + $0x48] sm:$0xff]
        %v452 = vld [vmem:[%s369 + $0x50] sm:$0xff]
        %v453 = vld [vmem:[%s369 + $0x58] sm:$0xff]
        %v454 = vld [vmem:[%s369 + $0x60] sm:$0xff]
        %v455 = vld [vmem:[%s369 + $0x68] sm:$0xff]
        %v456 = vld [vmem:[%s369 + $0x70] sm:$0xff]
        %v457 = vld [vmem:[%s369 + $0x78] sm:$0xff]
        %v458 = vld [vmem:[%s369 + $0x80] sm:$0xff]
        %v459 = vld [vmem:[%s369 + $0x88] sm:$0xff]
        %v460 = vld [vmem:[%s369 + $0x90] sm:$0xff]
        %v461 = vld [vmem:[%s369 + $0x98] sm:$0xff]
        %v462 = vld [vmem:[%s369 + $0xa0] sm:$0xff]
        %v463 = vld [vmem:[%s369 + $0xa8] sm:$0xff]
        %v464 = vld [vmem:[%s369 + $0xb0] sm:$0xff]
        %v465 = vld [vmem:[%s369 + $0xb8] sm:$0xff]
        %v466 = vld [vmem:[%s369 + $0xc0] sm:$0xff]
        %v467 = vld [vmem:[%s369 + $0xc8] sm:$0xff]
        %v468 = vld [vmem:[%s369 + $0xd0] sm:$0xff]
        %v469 = vld [vmem:[%s369 + $0xd8] sm:$0xff]
        %v470 = vld [vmem:[%s369 + $0xe0] sm:$0xff]
        %v471 = vld [vmem:[%s369 + $0xe8] sm:$0xff]
        %v472 = vld [vmem:[%s369 + $0xf0] sm:$0xff]
        %v473 = vld [vmem:[%s369 + $0xf8] sm:$0xff]
        %v474 = vld [vmem:[%s378] sm:$0xff]
        %v475 = vld [vmem:[%s378 + $0x8] sm:$0xff]
        %v476 = vld [vmem:[%s378 + $0x10] sm:$0xff]
        %v477 = vld [vmem:[%s378 + $0x18] sm:$0xff]
        %v478 = vld [vmem:[%s378 + $0x20] sm:$0xff]
        %v479 = vld [vmem:[%s378 + $0x28] sm:$0xff]
        %v480 = vld [vmem:[%s378 + $0x30] sm:$0xff]
        %v481 = vld [vmem:[%s378 + $0x38] sm:$0xff]
        %v482 = vld [vmem:[%s378 + $0x40] sm:$0xff]
        %v483 = vld [vmem:[%s378 + $0x48] sm:$0xff]
        %v484 = vld [vmem:[%s378 + $0x50] sm:$0xff]
        %v485 = vld [vmem:[%s378 + $0x58] sm:$0xff]
        %v486 = vld [vmem:[%s378 + $0x60] sm:$0xff]
        %v487 = vld [vmem:[%s378 + $0x68] sm:$0xff]
        %v488 = vld [vmem:[%s378 + $0x70] sm:$0xff]
        %v489 = vld [vmem:[%s378 + $0x78] sm:$0xff]
        %v490 = vld [vmem:[%s378 + $0x80] sm:$0xff]
        %v491 = vld [vmem:[%s378 + $0x88] sm:$0xff]
        %v492 = vld [vmem:[%s378 + $0x90] sm:$0xff]
        %v493 = vld [vmem:[%s378 + $0x98] sm:$0xff]
        %v494 = vld [vmem:[%s378 + $0xa0] sm:$0xff]
        %v495 = vld [vmem:[%s378 + $0xa8] sm:$0xff]
        %v496 = vld [vmem:[%s378 + $0xb0] sm:$0xff]
        %v497 = vld [vmem:[%s378 + $0xb8] sm:$0xff]
        %v498 = vld [vmem:[%s378 + $0xc0] sm:$0xff]
        %v499 = vld [vmem:[%s378 + $0xc8] sm:$0xff]
        %v500 = vld [vmem:[%s378 + $0xd0] sm:$0xff]
        %v501 = vld [vmem:[%s378 + $0xd8] sm:$0xff]
        %v502 = vld [vmem:[%s378 + $0xe0] sm:$0xff]
        %v503 = vld [vmem:[%s378 + $0xe8] sm:$0xff]
        %v504 = vld [vmem:[%s378 + $0xf0] sm:$0xff]
        %v505 = vld [vmem:[%s378 + $0xf8] sm:$0xff]
        %v506 = vld [vmem:[%s3] sm:$0xff]
        %v507 = vld [vmem:[%s3 + $0x8] sm:$0xff]
        %v508 = vld [vmem:[%s3 + $0x10] sm:$0xff]
        %v509 = vld [vmem:[%s3 + $0x18] sm:$0xff]
        %v510 = vld [vmem:[%s3 + $0x20] sm:$0xff]
        %v511 = vld [vmem:[%s3 + $0x28] sm:$0xff]
        %v512 = vld [vmem:[%s3 + $0x30] sm:$0xff]
        %v513 = vld [vmem:[%s3 + $0x38] sm:$0xff]
        %v514 = vld [vmem:[%s3 + $0x40] sm:$0xff]
        %v515 = vld [vmem:[%s3 + $0x48] sm:$0xff]
        %v516 = vld [vmem:[%s3 + $0x50] sm:$0xff]
        %v517 = vld [vmem:[%s3 + $0x58] sm:$0xff]
        %v518 = vld [vmem:[%s4] sm:$0xff]
        %v519 = vld [vmem:[%s4 + $0x8] sm:$0xff]
        %v520 = vld [vmem:[%s4 + $0x10] sm:$0xff]
        %v521 = vld [vmem:[%s4 + $0x18] sm:$0xff]
        %v522 = vld [vmem:[%s4 + $0x20] sm:$0xff]
        %v523 = vld [vmem:[%s4 + $0x28] sm:$0xff]
        %v524 = vld [vmem:[%s5] sm:$0xff]
        %v525 = vld [vmem:[%s5 + $0x8] sm:$0xff]
        %v526 = vld [vmem:[%s5 + $0x10] sm:$0xff]
        %v527 = vld [vmem:[%s5 + $0x18] sm:$0xff]
        %v528 = vld [vmem:[%s5 + $0x20] sm:$0xff]
        %v529 = vld [vmem:[%s5 + $0x28] sm:$0xff]
        %v530 = vld [vmem:[%s5 + $0x30] sm:$0xff]
        %v531 = vld [vmem:[%s5 + $0x38] sm:$0xff]
        %v532 = vld [vmem:[%s5 + $0x40] sm:$0xff]
        %v533 = vld [vmem:[%s5 + $0x48] sm:$0xff]
        %v534 = vld [vmem:[%s5 + $0x50] sm:$0xff]
        %v535 = vld [vmem:[%s5 + $0x58] sm:$0xff]
        %v536 = vld [vmem:[%s6] sm:$0xff]
        %v537 = vld [vmem:[%s6 + $0x8] sm:$0xff]
        %v538 = vld [vmem:[%s6 + $0x10] sm:$0xff]
        %v539 = vld [vmem:[%s6 + $0x18] sm:$0xff]
        %v540 = vld [vmem:[%s6 + $0x20] sm:$0xff]
        %v541 = vld [vmem:[%s6 + $0x28] sm:$0xff]
        %v542 = vld [vmem:[%s6 + $0x30] sm:$0xff]
        %v543 = vld [vmem:[%s6 + $0x38] sm:$0xff]
        %v544 = vld [vmem:[%s6 + $0x40] sm:$0xff]
        %v545 = vld [vmem:[%s6 + $0x48] sm:$0xff]
        %v546 = vld [vmem:[%s6 + $0x50] sm:$0xff]
        %v547 = vld [vmem:[%s6 + $0x58] sm:$0xff]
        %v548 = vld [vmem:[%s6 + $0x60] sm:$0xff]
        %v549 = vld [vmem:[%s6 + $0x68] sm:$0xff]
        %v550 = vld [vmem:[%s6 + $0x70] sm:$0xff]
        %v551 = vld [vmem:[%s6 + $0x78] sm:$0xff]
        %v552 = vld [vmem:[%s6 + $0x80] sm:$0xff]
        %v553 = vld [vmem:[%s6 + $0x88] sm:$0xff]
        %v554 = vld [vmem:[%s6 + $0x90] sm:$0xff]
        %v555 = vld [vmem:[%s6 + $0x98] sm:$0xff]
        %v556 = vld [vmem:[%s6 + $0xa0] sm:$0xff]
        %v557 = vld [vmem:[%s6 + $0xa8] sm:$0xff]
        %v558 = vld [vmem:[%s6 + $0xb0] sm:$0xff]
        %v559 = vld [vmem:[%s6 + $0xb8] sm:$0xff]
        %v560 = vld [vmem:[%s6 + $0xc0] sm:$0xff]
        %v561 = vld [vmem:[%s6 + $0xc8] sm:$0xff]
        %v562 = vld [vmem:[%s6 + $0xd0] sm:$0xff]
        %v563 = vld [vmem:[%s6 + $0xd8] sm:$0xff]
        %v564 = vld [vmem:[%s6 + $0xe0] sm:$0xff]
        %v565 = vld [vmem:[%s6 + $0xe8] sm:$0xff]
        %v566 = vld [vmem:[%s6 + $0xf0] sm:$0xff]
        %v567 = vld [vmem:[%s6 + $0xf8] sm:$0xff]
        %v568 = vld [vmem:[%s6 + $0x100] sm:$0xff]
        %v569 = vld [vmem:[%s6 + $0x108] sm:$0xff]
        %v570 = vld [vmem:[%s6 + $0x110] sm:$0xff]
        %v571 = vld [vmem:[%s6 + $0x118] sm:$0xff]
        %v572 = vld [vmem:[%s6 + $0x120] sm:$0xff]
        %v573 = vld [vmem:[%s6 + $0x128] sm:$0xff]
        %v574 = vld [vmem:[%s6 + $0x130] sm:$0xff]
        %v575 = vld [vmem:[%s6 + $0x138] sm:$0xff]
        %v576 = vld [vmem:[%s6 + $0x140] sm:$0xff]
        %v577 = vld [vmem:[%s6 + $0x148] sm:$0xff]
        %v578 = vld [vmem:[%s6 + $0x150] sm:$0xff]
        %v579 = vld [vmem:[%s6 + $0x158] sm:$0xff]
        %v580 = vld [vmem:[%s6 + $0x160] sm:$0xff]
        %v581 = vld [vmem:[%s6 + $0x168] sm:$0xff]
        %v582 = vld [vmem:[%s6 + $0x170] sm:$0xff]
        %v583 = vld [vmem:[%s6 + $0x178] sm:$0xff]
        %v584 = vld [vmem:[#allocation7] sm:$0xff]
        %v585 = vld [vmem:[#allocation7 + $0x8] sm:$0xff]
        %v586 = vld [vmem:[#allocation7 + $0x10] sm:$0xff]
        %v587 = vld [vmem:[#allocation7 + $0x18] sm:$0xff]
        %v588 = vld [vmem:[#allocation7 + $0x20] sm:$0xff]
        %v589 = vld [vmem:[#allocation7 + $0x28] sm:$0xff]
        %v590 = vld [vmem:[#allocation7 + $0x30] sm:$0xff]
        %v591 = vld [vmem:[#allocation7 + $0x38] sm:$0xff]
        %v592 = vld [vmem:[#allocation7 + $0x40] sm:$0xff]
        %v593 = vld [vmem:[#allocation7 + $0x48] sm:$0xff]
        %v594 = vld [vmem:[#allocation7 + $0x50] sm:$0xff]
        %v595 = vld [vmem:[#allocation7 + $0x58] sm:$0xff]
        %v596 = vld [vmem:[#allocation7 + $0x60] sm:$0xff]
        %v597 = vld [vmem:[#allocation7 + $0x68] sm:$0xff]
        %v598 = vld [vmem:[#allocation7 + $0x70] sm:$0xff]
        %v599 = vld [vmem:[#allocation7 + $0x78] sm:$0xff]
        %v600 = vld [vmem:[#allocation7 + $0x80] sm:$0xff]
        %v601 = vld [vmem:[#allocation7 + $0x88] sm:$0xff]
        %v602 = vld [vmem:[#allocation7 + $0x90] sm:$0xff]
        %v603 = vld [vmem:[#allocation7 + $0x98] sm:$0xff]
        %v604 = vld [vmem:[#allocation7 + $0xa0] sm:$0xff]
        %v605 = vld [vmem:[#allocation7 + $0xa8] sm:$0xff]
        %v606 = vld [vmem:[#allocation7 + $0xb0] sm:$0xff]
        %v607 = vld [vmem:[#allocation7 + $0xb8] sm:$0xff]
        %v608 = vld [vmem:[#allocation7 + $0xc0] sm:$0xff]
        %v609 = vld [vmem:[#allocation7 + $0xc8] sm:$0xff]
        %v610 = vld [vmem:[#allocation7 + $0xd0] sm:$0xff]
        %v611 = vld [vmem:[#allocation7 + $0xd8] sm:$0xff]
        %v612 = vld [vmem:[#allocation7 + $0xe0] sm:$0xff]
        %v613 = vld [vmem:[#allocation7 + $0xe8] sm:$0xff]
        %v614 = vld [vmem:[#allocation7 + $0xf0] sm:$0xff]
        %v615 = vld [vmem:[#allocation7 + $0xf8] sm:$0xff]
        %v616 = vld [vmem:[#allocation7 + $0x100] sm:$0xff]
        %v617 = vld [vmem:[#allocation7 + $0x108] sm:$0xff]
        %v618 = vld [vmem:[#allocation7 + $0x110] sm:$0xff]
        %v619 = vld [vmem:[#allocation7 + $0x118] sm:$0xff]
        %v620 = vld [vmem:[#allocation7 + $0x120] sm:$0xff]
        %v621 = vld [vmem:[#allocation7 + $0x128] sm:$0xff]
        %v622 = vld [vmem:[#allocation7 + $0x130] sm:$0xff]
        %v623 = vld [vmem:[#allocation7 + $0x138] sm:$0xff]
        %v624 = vld [vmem:[#allocation7 + $0x140] sm:$0xff]
        %v625 = vld [vmem:[#allocation7 + $0x148] sm:$0xff]
        %v626 = vld [vmem:[#allocation7 + $0x150] sm:$0xff]
        %v627 = vld [vmem:[#allocation7 + $0x158] sm:$0xff]
        %v628 = vld [vmem:[#allocation7 + $0x160] sm:$0xff]
        %v629 = vld [vmem:[#allocation7 + $0x168] sm:$0xff]
        %v630 = vld [vmem:[#allocation7 + $0x170] sm:$0xff]
        %v631 = vld [vmem:[#allocation7 + $0x178] sm:$0xff]
        %v632 = vld [vmem:[#allocation7 + $0x180] sm:$0xff]
        %v633 = vld [vmem:[#allocation7 + $0x188] sm:$0xff]
        %v634 = vld [vmem:[#allocation7 + $0x190] sm:$0xff]
        %v635 = vld [vmem:[#allocation7 + $0x198] sm:$0xff]
        %v636 = vld [vmem:[#allocation7 + $0x1a0] sm:$0xff]
        %v637 = vld [vmem:[#allocation7 + $0x1a8] sm:$0xff]
        %v638 = vld [vmem:[#allocation7 + $0x1b0] sm:$0xff]
        %v639 = vld [vmem:[#allocation7 + $0x1b8] sm:$0xff]
        %v640 = vld [vmem:[#allocation7 + $0x1c0] sm:$0xff]
        %v641 = vld [vmem:[#allocation7 + $0x1c8] sm:$0xff]
        %v642 = vld [vmem:[#allocation7 + $0x1d0] sm:$0xff]
        %v643 = vld [vmem:[#allocation7 + $0x1d8] sm:$0xff]
        %v644 = vld [vmem:[#allocation7 + $0x1e0] sm:$0xff]
        %v645 = vld [vmem:[#allocation7 + $0x1e8] sm:$0xff]
        %v646 = vld [vmem:[#allocation7 + $0x1f0] sm:$0xff]
        %v647 = vld [vmem:[#allocation7 + $0x1f8] sm:$0xff]
        %v648 = vld [vmem:[#allocation7 + $0x200] sm:$0xff]
        %v649 = vld [vmem:[#allocation7 + $0x208] sm:$0xff]
        %v650 = vld [vmem:[#allocation7 + $0x210] sm:$0xff]
        %v651 = vld [vmem:[#allocation7 + $0x218] sm:$0xff]
        %v652 = vld [vmem:[#allocation7 + $0x220] sm:$0xff]
        %v653 = vld [vmem:[#allocation7 + $0x228] sm:$0xff]
        %v654 = vld [vmem:[#allocation7 + $0x230] sm:$0xff]
        %v655 = vld [vmem:[#allocation7 + $0x238] sm:$0xff]
        %v656 = vld [vmem:[#allocation7 + $0x240] sm:$0xff]
        %v657 = vld [vmem:[#allocation7 + $0x248] sm:$0xff]
        %v658 = vld [vmem:[#allocation7 + $0x250] sm:$0xff]
        %v659 = vld [vmem:[#allocation7 + $0x258] sm:$0xff]
        %v660 = vld [vmem:[#allocation7 + $0x260] sm:$0xff]
        %v661 = vld [vmem:[#allocation7 + $0x268] sm:$0xff]
        %v662 = vld [vmem:[#allocation7 + $0x270] sm:$0xff]
        %v663 = vld [vmem:[#allocation7 + $0x278] sm:$0xff]
        %v664 = vld [vmem:[#allocation7 + $0x280] sm:$0xff]
        %v665 = vld [vmem:[#allocation7 + $0x288] sm:$0xff]
        %v666 = vld [vmem:[#allocation7 + $0x290] sm:$0xff]
        %v667 = vld [vmem:[#allocation7 + $0x298] sm:$0xff]
        %v668 = vld [vmem:[#allocation7 + $0x2a0] sm:$0xff]
        %v669 = vld [vmem:[#allocation7 + $0x2a8] sm:$0xff]
        %v670 = vld [vmem:[#allocation7 + $0x2b0] sm:$0xff]
        %v671 = vld [vmem:[#allocation7 + $0x2b8] sm:$0xff]
        %v672 = vld [vmem:[#allocation7 + $0x2c0] sm:$0xff]
        %v673 = vld [vmem:[#allocation7 + $0x2c8] sm:$0xff]
        %v674 = vld [vmem:[#allocation7 + $0x2d0] sm:$0xff]
        %v675 = vld [vmem:[#allocation7 + $0x2d8] sm:$0xff]
        %v676 = vld [vmem:[#allocation7 + $0x2e0] sm:$0xff]
        %v677 = vld [vmem:[#allocation7 + $0x2e8] sm:$0xff]
        %v678 = vld [vmem:[#allocation7 + $0x2f0] sm:$0xff]
        %v679 = vld [vmem:[#allocation7 + $0x2f8] sm:$0xff]
        %v680 = vld [vmem:[%s436] sm:$0xff]
        %v681 = vld [vmem:[%s436 + $0x8] sm:$0xff]
        %v682 = vld [vmem:[%s436 + $0x10] sm:$0xff]
        %v683 = vld [vmem:[%s436 + $0x18] sm:$0xff]
        %v684 = vld [vmem:[%s436 + $0x20] sm:$0xff]
        %v685 = vld [vmem:[%s436 + $0x28] sm:$0xff]
        %v686 = vld [vmem:[%s436 + $0x30] sm:$0xff]
        %v687 = vld [vmem:[%s436 + $0x38] sm:$0xff]
        %vm688 = vcmask 261120
        %v690 = vsel %vm688, %v524, 0
        %v693 = vsel %vm688, %v525, 0
        %v696 = vsel %vm688, %v526, 0
        %v699 = vsel %vm688, %v527, 0
        %v702 = vsel %vm688, %v528, 0
        %v705 = vsel %vm688, %v529, 0
        %v708 = vsel %vm688, %v530, 0
        %v711 = vsel %vm688, %v531, 0
        %v714 = vsel %vm688, %v532, 0
        %v717 = vsel %vm688, %v533, 0
        %v720 = vsel %vm688, %v534, 0
        %v723 = vsel %vm688, %v535, 0
        %725 = vmatprep.subr.mxu0 0.0
        %726 = vmatpush1.msra.mxu0 %v442
        %727 = vmatprep.subr.mxu0 0.0
        %728 = vmatpush1.msra.mxu0 %v443
        %729 = vmatprep.subr.mxu0 0.0
        %730 = vmatpush1.msra.mxu0 %v444
        %731 = vmatprep.subr.mxu0 0.0
        %732 = vmatpush1.msra.mxu0 %v445
        %733 = vmatprep.subr.mxu0 0.0
        %734 = vmatpush1.msra.mxu0 0.0
        %735 = vmatprep.subr.mxu0 0.0
        %736 = vmatpush1.msra.mxu0 0.0
        %737 = vmatprep.subr.mxu0 0.0
        %738 = vmatpush1.msra.mxu0 0.0
        %739 = vmatprep.subr.mxu0 0.0
        %740 = vmatpush1.msra.mxu0 0.0
        %741 = vmatprep.subr.mxu0 0.0
        %742 = vmatpush1.msra.mxu0 0.0
        %743 = vmatprep.subr.mxu0 0.0
        %744 = vmatpush1.msra.mxu0 0.0
        %745 = vmatprep.subr.mxu0 0.0
        %746 = vmatpush1.msra.mxu0 0.0
        %747 = vmatprep.subr.mxu0 0.0
        %748 = vmatpush1.msra.mxu0 0.0
        %749 = vmatprep.subr.mxu0 0.0
        %750 = vmatpush1.msra.mxu0 0.0
        %751 = vmatprep.subr.mxu0 0.0
        %752 = vmatpush1.msra.mxu0 0.0
        %753 = vmatprep.subr.mxu0 0.0
        %754 = vmatpush1.msra.mxu0 0.0
        %755 = vmatprep.subr.mxu0 0.0
        %756 = vmatpush1.msra.mxu0 0.0
        %757 = vmatprep.subr.mxu0 0.0
        %758 = vmatpush1.msra.mxu0 0.0
        %759 = vmatprep.subr.mxu0 0.0
        %760 = vmatpush1.msra.mxu0 0.0
        %761 = vmatprep.subr.mxu0 0.0
        %762 = vmatpush1.msra.mxu0 0.0
        %763 = vmatprep.subr.mxu0 0.0
        %764 = vmatpush1.msra.mxu0 0.0
        %765 = vmatprep.subr.mxu0 0.0
        %766 = vmatpush1.msra.mxu0 0.0
        %767 = vmatprep.subr.mxu0 0.0
        %768 = vmatpush1.msra.mxu0 0.0
        %769 = vmatprep.subr.mxu0 0.0
        %770 = vmatpush1.msra.mxu0 0.0
        %771 = vmatprep.subr.mxu0 0.0
        %772 = vmatpush1.msra.mxu0 0.0
        %773 = vmatprep.subr.mxu0 0.0
        %774 = vmatpush1.msra.mxu0 0.0
        %775 = vmatprep.subr.mxu0 0.0
        %776 = vmatpush1.msra.mxu0 0.0
        %777 = vmatprep.subr.mxu0 0.0
        %778 = vmatpush1.msra.mxu0 0.0
        %779 = vmatprep.subr.mxu0 0.0
        %780 = vmatpush1.msra.mxu0 0.0
        %781 = vmatprep.subr.mxu0 0.0
        %782 = vmatpush1.msra.mxu0 0.0
        %783 = vmatprep.subr.mxu0 0.0
        %784 = vmatpush1.msra.mxu0 0.0
        %785 = vmatprep.subr.mxu0 0.0
        %786 = vmatpush1.msra.mxu0 0.0
        %787 = vmatprep.subr.mxu0 0.0
        %788 = vmatpush1.msra.mxu0 0.0
        %789 = vmatprep.mubr.f32.mxu0 0.0
        %790 = vmatmul.mubr.f32.gmra.mrb[0].mxu0 %v690
        %v791 = vpop.f32.mrb[0].mxu0
        %v792 = vadd.f32 0.0, %v791
        %v793 = vpop.f32.mrb[0].mxu0
        %794 = vmatprep.mubr.f32.mxu0 0.0
        %795 = vmatmul.mubr.f32.gmra.mrb[0].mxu0 %v693
        %v796 = vpop.f32.mrb[0].mxu0
        %v797 = vadd.f32 0.0, %v796
        %v798 = vpop.f32.mrb[0].mxu0
        %799 = vmatprep.mubr.f32.mxu0 0.0
        %800 = vmatmul.mubr.f32.gmra.mrb[0].mxu0 %v696
        %v801 = vpop.f32.mrb[0].mxu0
        %v802 = vadd.f32 0.0, %v801
        %v803 = vpop.f32.mrb[0].mxu0
        %804 = vmatprep.mubr.f32.mxu0 0.0
        %805 = vmatmul.mubr.f32.gmra.mrb[0].mxu0 %v699
        %v806 = vpop.f32.mrb[0].mxu0
        %v807 = vadd.f32 0.0, %v806
        %v808 = vpop.f32.mrb[0].mxu0
        %809 = vmatprep.mubr.f32.mxu0 0.0
        %810 = vmatmul.mubr.f32.gmra.mrb[0].mxu0 %v702
        %v811 = vpop.f32.mrb[0].mxu0
        %v812 = vadd.f32 0.0, %v811
        %v813 = vpop.f32.mrb[0].mxu0
        %814 = vmatprep.mubr.f32.mxu0 0.0
        %815 = vmatmul.mubr.f32.gmra.mrb[0].mxu0 %v705
        %v816 = vpop.f32.mrb[0].mxu0
        %v817 = vadd.f32 0.0, %v816
        %v818 = vpop.f32.mrb[0].mxu0
        %819 = vmatprep.mubr.f32.mxu0 0.0
        %820 = vmatmul.mubr.f32.gmra.mrb[0].mxu0 %v708
        %v821 = vpop.f32.mrb[0].mxu0
        %v822 = vadd.f32 0.0, %v821
        %v823 = vpop.f32.mrb[0].mxu0
        %824 = vmatprep.mubr.f32.mxu0 0.0
        %825 = vmatmul.mubr.f32.gmra.mrb[0].mxu0 %v711
        %v826 = vpop.f32.mrb[0].mxu0
        %v827 = vadd.f32 0.0, %v826
        %v828 = vpop.f32.mrb[0].mxu0
        %829 = vmatprep.mubr.f32.mxu0 0.0
        %830 = vmatmul.mubr.f32.gmra.mrb[0].mxu0 %v714
        %v831 = vpop.f32.mrb[0].mxu0
        %v832 = vadd.f32 0.0, %v831
        %v833 = vpop.f32.mrb[0].mxu0
        %834 = vmatprep.mubr.f32.mxu0 0.0
        %835 = vmatmul.mubr.f32.gmra.mrb[0].mxu0 %v717
        %v836 = vpop.f32.mrb[0].mxu0
        %v837 = vadd.f32 0.0, %v836
        %v838 = vpop.f32.mrb[0].mxu0
        %839 = vmatprep.mubr.f32.mxu0 0.0
        %840 = vmatmul.mubr.f32.gmra.mrb[0].mxu0 %v720
        %v841 = vpop.f32.mrb[0].mxu0
        %v842 = vadd.f32 0.0, %v841
        %v843 = vpop.f32.mrb[0].mxu0
        %844 = vmatprep.mubr.f32.mxu0 0.0
        %845 = vmatmul.mubr.f32.gmra.mrb[0].mxu0 %v723
        %v846 = vpop.f32.mrb[0].mxu0
        %v847 = vadd.f32 0.0, %v846
        %v848 = vpop.f32.mrb[0].mxu0
        %849 = vdwg.mxu0
        %850 = vmatprep.subr.mxu0 0.0
        %851 = vmatpush1.msra.mxu0 %v446
        %852 = vmatprep.subr.mxu0 0.0
        %853 = vmatpush1.msra.mxu0 %v447
        %854 = vmatprep.subr.mxu0 0.0
        %855 = vmatpush1.msra.mxu0 %v448
        %856 = vmatprep.subr.mxu0 0.0
        %857 = vmatpush1.msra.mxu0 %v449
        %858 = vmatprep.subr.mxu0 0.0
        %859 = vmatpush1.msra.mxu0 0.0
        %860 = vmatprep.subr.mxu0 0.0
        %861 = vmatpush1.msra.mxu0 0.0
        %862 = vmatprep.subr.mxu0 0.0
        %863 = vmatpush1.msra.mxu0 0.0
        %864 = vmatprep.subr.mxu0 0.0
        %865 = vmatpush1.msra.mxu0 0.0
        %866 = vmatprep.subr.mxu0 0.0
        %867 = vmatpush1.msra.mxu0 0.0
        %868 = vmatprep.subr.mxu0 0.0
        %869 = vmatpush1.msra.mxu0 0.0
        %870 = vmatprep.subr.mxu0 0.0
        %871 = vmatpush1.msra.mxu0 0.0
        %872 = vmatprep.subr.mxu0 0.0
        %873 = vmatpush1.msra.mxu0 0.0
        %874 = vmatprep.subr.mxu0 0.0
        %875 = vmatpush1.msra.mxu0 0.0
        %876 = vmatprep.subr.mxu0 0.0
        %877 = vmatpush1.msra.mxu0 0.0
        %878 = vmatprep.subr.mxu0 0.0
        %879 = vmatpush1.msra.mxu0 0.0
        %880 = vmatprep.subr.mxu0 0.0
        %881 = vmatpush1.msra.mxu0 0.0
        %882 = vmatprep.subr.mxu0 0.0
        %883 = vmatpush1.msra.mxu0 0.0
        %884 = vmatprep.subr.mxu0 0.0
        %885 = vmatpush1.msra.mxu0 0.0
        %886 = vmatprep.subr.mxu0 0.0
        %887 = vmatpush1.msra.mxu0 0.0
        %888 = vmatprep.subr.mxu0 0.0
        %889 = vmatpush1.msra.mxu0 0.0
        %890 = vmatprep.subr.mxu0 0.0
        %891 = vmatpush1.msra.mxu0 0.0
        %892 = vmatprep.subr.mxu0 0.0
        %893 = vmatpush1.msra.mxu0 0.0
        %894 = vmatprep.subr.mxu0 0.0
        %895 = vmatpush1.msra.mxu0 0.0
        %896 = vmatprep.subr.mxu0 0.0
        %897 = vmatpush1.msra.mxu0 0.0
        %898 = vmatprep.subr.mxu0 0.0
        %899 = vmatpush1.msra.mxu0 0.0
        %900 = vmatprep.subr.mxu0 0.0
        %901 = vmatpush1.msra.mxu0 0.0
        %902 = vmatprep.subr.mxu0 0.0
        %903 = vmatpush1.msra.mxu0 0.0
        %904 = vmatprep.subr.mxu0 0.0
        %905 = vmatpush1.msra.mxu0 0.0
        %906 = vmatprep.subr.mxu0 0.0
        %907 = vmatpush1.msra.mxu0 0.0
        %908 = vmatprep.subr.mxu0 0.0
        %909 = vmatpush1.msra.mxu0 0.0
        %910 = vmatprep.subr.mxu0 0.0
        %911 = vmatpush1.msra.mxu0 0.0
        %912 = vmatprep.subr.mxu0 0.0
        %913 = vmatpush1.msra.mxu0 0.0
        %914 = vmatprep.mubr.f32.mxu0 0.0
        %915 = vmatmul.mubr.f32.gmra.mrb[0].mxu0 %v690
        %v916 = vpop.f32.mrb[0].mxu0
        %v917 = vadd.f32 0.0, %v916
        %v918 = vpop.f32.mrb[0].mxu0
        %919 = vmatprep.mubr.f32.mxu0 0.0
        %920 = vmatmul.mubr.f32.gmra.mrb[0].mxu0 %v693
        %v921 = vpop.f32.mrb[0].mxu0
        %v922 = vadd.f32 0.0, %v921
        %v923 = vpop.f32.mrb[0].mxu0
        %924 = vmatprep.mubr.f32.mxu0 0.0
        %925 = vmatmul.mubr.f32.gmra.mrb[0].mxu0 %v696
        %v926 = vpop.f32.mrb[0].mxu0
        %v927 = vadd.f32 0.0, %v926
        %v928 = vpop.f32.mrb[0].mxu0
        %929 = vmatprep.mubr.f32.mxu0 0.0
        %930 = vmatmul.mubr.f32.gmra.mrb[0].mxu0 %v699
        %v931 = vpop.f32.mrb[0].mxu0
        %v932 = vadd.f32 0.0, %v931
        %v933 = vpop.f32.mrb[0].mxu0
        %934 = vmatprep.mubr.f32.mxu0 0.0
        %935 = vmatmul.mubr.f32.gmra.mrb[0].mxu0 %v702
        %v936 = vpop.f32.mrb[0].mxu0
        %v937 = vadd.f32 0.0, %v936
        %v938 = vpop.f32.mrb[0].mxu0
        %939 = vmatprep.mubr.f32.mxu0 0.0
        %940 = vmatmul.mubr.f32.gmra.mrb[0].mxu0 %v705
        %v941 = vpop.f32.mrb[0].mxu0
        %v942 = vadd.f32 0.0, %v941
        %v943 = vpop.f32.mrb[0].mxu0
        %944 = vmatprep.mubr.f32.mxu0 0.0
        %945 = vmatmul.mubr.f32.gmra.mrb[0].mxu0 %v708
        %v946 = vpop.f32.mrb[0].mxu0
        %v947 = vadd.f32 0.0, %v946
        %v948 = vpop.f32.mrb[0].mxu0
        %949 = vmatprep.mubr.f32.mxu0 0.0
        %950 = vmatmul.mubr.f32.gmra.mrb[0].mxu0 %v711
        %v951 = vpop.f32.mrb[0].mxu0
        %v952 = vadd.f32 0.0, %v951
        %v953 = vpop.f32.mrb[0].mxu0
        %954 = vmatprep.mubr.f32.mxu0 0.0
        %955 = vmatmul.mubr.f32.gmra.mrb[0].mxu0 %v714
        %v956 = vpop.f32.mrb[0].mxu0
        %v957 = vadd.f32 0.0, %v956
        %v958 = vpop.f32.mrb[0].mxu0
        %959 = vmatprep.mubr.f32.mxu0 0.0
        %960 = vmatmul.mubr.f32.gmra.mrb[0].mxu0 %v717
        %v961 = vpop.f32.mrb[0].mxu0
        %v962 = vadd.f32 0.0, %v961
        %v963 = vpop.f32.mrb[0].mxu0
        %964 = vmatprep.mubr.f32.mxu0 0.0
        %965 = vmatmul.mubr.f32.gmra.mrb[0].mxu0 %v720
        %v966 = vpop.f32.mrb[0].mxu0
        %v967 = vadd.f32 0.0, %v966
        %v968 = vpop.f32.mrb[0].mxu0
        %969 = vmatprep.mubr.f32.mxu0 0.0
        %970 = vmatmul.mubr.f32.gmra.mrb[0].mxu0 %v723
        %v971 = vpop.f32.mrb[0].mxu0
        %v972 = vadd.f32 0.0, %v971
        %v973 = vpop.f32.mrb[0].mxu0
        %974 = vdwg.mxu0
        %975 = vmatprep.subr.mxu0 0.0
        %976 = vmatpush1.msra.mxu0 %v450
        %977 = vmatprep.subr.mxu0 0.0
        %978 = vmatpush1.msra.mxu0 %v451
        %979 = vmatprep.subr.mxu0 0.0
        %980 = vmatpush1.msra.mxu0 %v452
        %981 = vmatprep.subr.mxu0 0.0
        %982 = vmatpush1.msra.mxu0 %v453
        %983 = vmatprep.subr.mxu0 0.0
        %984 = vmatpush1.msra.mxu0 0.0
        %985 = vmatprep.subr.mxu0 0.0
        %986 = vmatpush1.msra.mxu0 0.0
        %987 = vmatprep.subr.mxu0 0.0
        %988 = vmatpush1.msra.mxu0 0.0
        %989 = vmatprep.subr.mxu0 0.0
        %990 = vmatpush1.msra.mxu0 0.0
        %991 = vmatprep.subr.mxu0 0.0
        %992 = vmatpush1.msra.mxu0 0.0
        %993 = vmatprep.subr.mxu0 0.0
        %994 = vmatpush1.msra.mxu0 0.0
        %995 = vmatprep.subr.mxu0 0.0
        %996 = vmatpush1.msra.mxu0 0.0
        %997 = vmatprep.subr.mxu0 0.0
        %998 = vmatpush1.msra.mxu0 0.0
        %999 = vmatprep.subr.mxu0 0.0
        %1000 = vmatpush1.msra.mxu0 0.0
        %1001 = vmatprep.subr.mxu0 0.0
        %1002 = vmatpush1.msra.mxu0 0.0
        %1003 = vmatprep.subr.mxu0 0.0
        %1004 = vmatpush1.msra.mxu0 0.0
        %1005 = vmatprep.subr.mxu0 0.0
        %1006 = vmatpush1.msra.mxu0 0.0
        %1007 = vmatprep.subr.mxu0 0.0
        %1008 = vmatpush1.msra.mxu0 0.0
        %1009 = vmatprep.subr.mxu0 0.0
        %1010 = vmatpush1.msra.mxu0 0.0
        %1011 = vmatprep.subr.mxu0 0.0
        %1012 = vmatpush1.msra.mxu0 0.0
        %1013 = vmatprep.subr.mxu0 0.0
        %1014 = vmatpush1.msra.mxu0 0.0
        %1015 = vmatprep.subr.mxu0 0.0
        %1016 = vmatpush1.msra.mxu0 0.0
        %1017 = vmatprep.subr.mxu0 0.0
        %1018 = vmatpush1.msra.mxu0 0.0
        %1019 = vmatprep.subr.mxu0 0.0
        %1020 = vmatpush1.msra.mxu0 0.0
        %1021 = vmatprep.subr.mxu0 0.0
        %1022 = vmatpush1.msra.mxu0 0.0
        %1023 = vmatprep.subr.mxu0 0.0
        %1024 = vmatpush1.msra.mxu0 0.0
        %1025 = vmatprep.subr.mxu0 0.0
        %1026 = vmatpush1.msra.mxu0 0.0
        %1027 = vmatprep.subr.mxu0 0.0
        %1028 = vmatpush1.msra.mxu0 0.0
        %1029 = vmatprep.subr.mxu0 0.0
        %1030 = vmatpush1.msra.mxu0 0.0
        %1031 = vmatprep.subr.mxu0 0.0
        %1032 = vmatpush1.msra.mxu0 0.0
        %1033 = vmatprep.subr.mxu0 0.0
        %1034 = vmatpush1.msra.mxu0 0.0
        %1035 = vmatprep.subr.mxu0 0.0
        %1036 = vmatpush1.msra.mxu0 0.0
        %1037 = vmatprep.subr.mxu0 0.0
        %1038 = vmatpush1.msra.mxu0 0.0
        %1039 = vmatprep.mubr.f32.mxu0 0.0
        %1040 = vmatmul.mubr.f32.gmra.mrb[0].mxu0 %v690
        %v1041 = vpop.f32.mrb[0].mxu0
        %v1042 = vadd.f32 0.0, %v1041
        %v1043 = vpop.f32.mrb[0].mxu0
        %1044 = vmatprep.mubr.f32.mxu0 0.0
        %1045 = vmatmul.mubr.f32.gmra.mrb[0].mxu0 %v693
        %v1046 = vpop.f32.mrb[0].mxu0
        %v1047 = vadd.f32 0.0, %v1046
        %v1048 = vpop.f32.mrb[0].mxu0
        %1049 = vmatprep.mubr.f32.mxu0 0.0
        %1050 = vmatmul.mubr.f32.gmra.mrb[0].mxu0 %v696
        %v1051 = vpop.f32.mrb[0].mxu0
        %v1052 = vadd.f32 0.0, %v1051
        %v1053 = vpop.f32.mrb[0].mxu0
        %1054 = vmatprep.mubr.f32.mxu0 0.0
        %1055 = vmatmul.mubr.f32.gmra.mrb[0].mxu0 %v699
        %v1056 = vpop.f32.mrb[0].mxu0
        %v1057 = vadd.f32 0.0, %v1056
        %v1058 = vpop.f32.mrb[0].mxu0
        %1059 = vmatprep.mubr.f32.mxu0 0.0
        %1060 = vmatmul.mubr.f32.gmra.mrb[0].mxu0 %v702
        %v1061 = vpop.f32.mrb[0].mxu0
        %v1062 = vadd.f32 0.0, %v1061
        %v1063 = vpop.f32.mrb[0].mxu0
        %1064 = vmatprep.mubr.f32.mxu0 0.0
        %1065 = vmatmul.mubr.f32.gmra.mrb[0].mxu0 %v705
        %v1066 = vpop.f32.mrb[0].mxu0
        %v1067 = vadd.f32 0.0, %v1066
        %v1068 = vpop.f32.mrb[0].mxu0
        %1069 = vmatprep.mubr.f32.mxu0 0.0
        %1070 = vmatmul.mubr.f32.gmra.mrb[0].mxu0 %v708
        %v1071 = vpop.f32.mrb[0].mxu0
        %v1072 = vadd.f32 0.0, %v1071
        %v1073 = vpop.f32.mrb[0].mxu0
        %1074 = vmatprep.mubr.f32.mxu0 0.0
        %1075 = vmatmul.mubr.f32.gmra.mrb[0].mxu0 %v711
        %v1076 = vpop.f32.mrb[0].mxu0
        %v1077 = vadd.f32 0.0, %v1076
        %v1078 = vpop.f32.mrb[0].mxu0
        %1079 = vmatprep.mubr.f32.mxu0 0.0
        %1080 = vmatmul.mubr.f32.gmra.mrb[0].mxu0 %v714
        %v1081 = vpop.f32.mrb[0].mxu0
        %v1082 = vadd.f32 0.0, %v1081
        %v1083 = vpop.f32.mrb[0].mxu0
        %1084 = vmatprep.mubr.f32.mxu0 0.0
        %1085 = vmatmul.mubr.f32.gmra.mrb[0].mxu0 %v717
        %v1086 = vpop.f32.mrb[0].mxu0
        %v1087 = vadd.f32 0.0, %v1086
        %v1088 = vpop.f32.mrb[0].mxu0
        %1089 = vmatprep.mubr.f32.mxu0 0.0
        %1090 = vmatmul.mubr.f32.gmra.mrb[0].mxu0 %v720
        %v1091 = vpop.f32.mrb[0].mxu0
        %v1092 = vadd.f32 0.0, %v1091
        %v1093 = vpop.f32.mrb[0].mxu0
        %1094 = vmatprep.mubr.f32.mxu0 0.0
        %1095 = vmatmul.mubr.f32.gmra.mrb[0].mxu0 %v723
        %v1096 = vpop.f32.mrb[0].mxu0
        %v1097 = vadd.f32 0.0, %v1096
        %v1098 = vpop.f32.mrb[0].mxu0
        %1099 = vdwg.mxu0
        %1100 = vmatprep.subr.mxu0 0.0
        %1101 = vmatpush1.msra.mxu0 %v454
        %1102 = vmatprep.subr.mxu0 0.0
        %1103 = vmatpush1.msra.mxu0 %v455
        %1104 = vmatprep.subr.mxu0 0.0
        %1105 = vmatpush1.msra.mxu0 %v456
        %1106 = vmatprep.subr.mxu0 0.0
        %1107 = vmatpush1.msra.mxu0 %v457
        %1108 = vmatprep.subr.mxu0 0.0
        %1109 = vmatpush1.msra.mxu0 0.0
        %1110 = vmatprep.subr.mxu0 0.0
        %1111 = vmatpush1.msra.mxu0 0.0
        %1112 = vmatprep.subr.mxu0 0.0
        %1113 = vmatpush1.msra.mxu0 0.0
        %1114 = vmatprep.subr.mxu0 0.0
        %1115 = vmatpush1.msra.mxu0 0.0
        %1116 = vmatprep.subr.mxu0 0.0
        %1117 = vmatpush1.msra.mxu0 0.0
        %1118 = vmatprep.subr.mxu0 0.0
        %1119 = vmatpush1.msra.mxu0 0.0
        %1120 = vmatprep.subr.mxu0 0.0
        %1121 = vmatpush1.msra.mxu0 0.0
        %1122 = vmatprep.subr.mxu0 0.0
        %1123 = vmatpush1.msra.mxu0 0.0
        %1124 = vmatprep.subr.mxu0 0.0
        %1125 = vmatpush1.msra.mxu0 0.0
        %1126 = vmatprep.subr.mxu0 0.0
        %1127 = vmatpush1.msra.mxu0 0.0
        %1128 = vmatprep.subr.mxu0 0.0
        %1129 = vmatpush1.msra.mxu0 0.0
        %1130 = vmatprep.subr.mxu0 0.0
        %1131 = vmatpush1.msra.mxu0 0.0
        %1132 = vmatprep.subr.mxu0 0.0
        %1133 = vmatpush1.msra.mxu0 0.0
        %1134 = vmatprep.subr.mxu0 0.0
        %1135 = vmatpush1.msra.mxu0 0.0
        %1136 = vmatprep.subr.mxu0 0.0
        %1137 = vmatpush1.msra.mxu0 0.0
        %1138 = vmatprep.subr.mxu0 0.0
        %1139 = vmatpush1.msra.mxu0 0.0
        %1140 = vmatprep.subr.mxu0 0.0
        %1141 = vmatpush1.msra.mxu0 0.0
        %1142 = vmatprep.subr.mxu0 0.0
        %1143 = vmatpush1.msra.mxu0 0.0
        %1144 = vmatprep.subr.mxu0 0.0
        %1145 = vmatpush1.msra.mxu0 0.0
        %1146 = vmatprep.subr.mxu0 0.0
        %1147 = vmatpush1.msra.mxu0 0.0
        %1148 = vmatprep.subr.mxu0 0.0
        %1149 = vmatpush1.msra.mxu0 0.0
        %1150 = vmatprep.subr.mxu0 0.0
        %1151 = vmatpush1.msra.mxu0 0.0
        %1152 = vmatprep.subr.mxu0 0.0
        %1153 = vmatpush1.msra.mxu0 0.0
        %1154 = vmatprep.subr.mxu0 0.0
        %1155 = vmatpush1.msra.mxu0 0.0
        %1156 = vmatprep.subr.mxu0 0.0
        %1157 = vmatpush1.msra.mxu0 0.0
        %1158 = vmatprep.subr.mxu0 0.0
        %1159 = vmatpush1.msra.mxu0 0.0
        %1160 = vmatprep.subr.mxu0 0.0
        %1161 = vmatpush1.msra.mxu0 0.0
        %1162 = vmatprep.subr.mxu0 0.0
        %1163 = vmatpush1.msra.mxu0 0.0
        %1164 = vmatprep.mubr.f32.mxu0 0.0
        %1165 = vmatmul.mubr.f32.gmra.mrb[0].mxu0 %v690
        %v1166 = vpop.f32.mrb[0].mxu0
        %v1167 = vadd.f32 0.0, %v1166
        %v1168 = vpop.f32.mrb[0].mxu0
        %1169 = vmatprep.mubr.f32.mxu0 0.0
        %1170 = vmatmul.mubr.f32.gmra.mrb[0].mxu0 %v693
        %v1171 = vpop.f32.mrb[0].mxu0
        %v1172 = vadd.f32 0.0, %v1171
        %v1173 = vpop.f32.mrb[0].mxu0
        %1174 = vmatprep.mubr.f32.mxu0 0.0
        %1175 = vmatmul.mubr.f32.gmra.mrb[0].mxu0 %v696
        %v1176 = vpop.f32.mrb[0].mxu0
        %v1177 = vadd.f32 0.0, %v1176
        %v1178 = vpop.f32.mrb[0].mxu0
        %1179 = vmatprep.mubr.f32.mxu0 0.0
        %1180 = vmatmul.mubr.f32.gmra.mrb[0].mxu0 %v699
        %v1181 = vpop.f32.mrb[0].mxu0
        %v1182 = vadd.f32 0.0, %v1181
        %v1183 = vpop.f32.mrb[0].mxu0
        %1184 = vmatprep.mubr.f32.mxu0 0.0
        %1185 = vmatmul.mubr.f32.gmra.mrb[0].mxu0 %v702
        %v1186 = vpop.f32.mrb[0].mxu0
        %v1187 = vadd.f32 0.0, %v1186
        %v1188 = vpop.f32.mrb[0].mxu0
        %1189 = vmatprep.mubr.f32.mxu0 0.0
        %1190 = vmatmul.mubr.f32.gmra.mrb[0].mxu0 %v705
        %v1191 = vpop.f32.mrb[0].mxu0
        %v1192 = vadd.f32 0.0, %v1191
        %v1193 = vpop.f32.mrb[0].mxu0
        %1194 = vmatprep.mubr.f32.mxu0 0.0
        %1195 = vmatmul.mubr.f32.gmra.mrb[0].mxu0 %v708
        %v1196 = vpop.f32.mrb[0].mxu0
        %v1197 = vadd.f32 0.0, %v1196
        %v1198 = vpop.f32.mrb[0].mxu0
        %1199 = vmatprep.mubr.f32.mxu0 0.0
        %1200 = vmatmul.mubr.f32.gmra.mrb[0].mxu0 %v711
        %v1201 = vpop.f32.mrb[0].mxu0
        %v1202 = vadd.f32 0.0, %v1201
        %v1203 = vpop.f32.mrb[0].mxu0
        %1204 = vmatprep.mubr.f32.mxu0 0.0
        %1205 = vmatmul.mubr.f32.gmra.mrb[0].mxu0 %v714
        %v1206 = vpop.f32.mrb[0].mxu0
        %v1207 = vadd.f32 0.0, %v1206
        %v1208 = vpop.f32.mrb[0].mxu0
        %1209 = vmatprep.mubr.f32.mxu0 0.0
        %1210 = vmatmul.mubr.f32.gmra.mrb[0].mxu0 %v717
        %v1211 = vpop.f32.mrb[0].mxu0
        %v1212 = vadd.f32 0.0, %v1211
        %v1213 = vpop.f32.mrb[0].mxu0
        %1214 = vmatprep.mubr.f32.mxu0 0.0
        %1215 = vmatmul.mubr.f32.gmra.mrb[0].mxu0 %v720
        %v1216 = vpop.f32.mrb[0].mxu0
        %v1217 = vadd.f32 0.0, %v1216
        %v1218 = vpop.f32.mrb[0].mxu0
        %1219 = vmatprep.mubr.f32.mxu0 0.0
        %1220 = vmatmul.mubr.f32.gmra.mrb[0].mxu0 %v723
        %v1221 = vpop.f32.mrb[0].mxu0
        %v1222 = vadd.f32 0.0, %v1221
        %v1223 = vpop.f32.mrb[0].mxu0
        %1224 = vdwg.mxu0
        %1225 = vmatprep.subr.mxu0 0.0
        %1226 = vmatpush1.msra.mxu0 %v458
        %1227 = vmatprep.subr.mxu0 0.0
        %1228 = vmatpush1.msra.mxu0 %v459
        %1229 = vmatprep.subr.mxu0 0.0
        %1230 = vmatpush1.msra.mxu0 %v460
        %1231 = vmatprep.subr.mxu0 0.0
        %1232 = vmatpush1.msra.mxu0 %v461
        %1233 = vmatprep.subr.mxu0 0.0
        %1234 = vmatpush1.msra.mxu0 0.0
        %1235 = vmatprep.subr.mxu0 0.0
        %1236 = vmatpush1.msra.mxu0 0.0
        %1237 = vmatprep.subr.mxu0 0.0
        %1238 = vmatpush1.msra.mxu0 0.0
        %1239 = vmatprep.subr.mxu0 0.0
        %1240 = vmatpush1.msra.mxu0 0.0
        %1241 = vmatprep.subr.mxu0 0.0
        %1242 = vmatpush1.msra.mxu0 0.0
        %1243 = vmatprep.subr.mxu0 0.0
        %1244 = vmatpush1.msra.mxu0 0.0
        %1245 = vmatprep.subr.mxu0 0.0
        %1246 = vmatpush1.msra.mxu0 0.0
        %1247 = vmatprep.subr.mxu0 0.0
        %1248 = vmatpush1.msra.mxu0 0.0
        %1249 = vmatprep.subr.mxu0 0.0
        %1250 = vmatpush1.msra.mxu0 0.0
        %1251 = vmatprep.subr.mxu0 0.0
        %1252 = vmatpush1.msra.mxu0 0.0
        %1253 = vmatprep.subr.mxu0 0.0
        %1254 = vmatpush1.msra.mxu0 0.0
        %1255 = vmatprep.subr.mxu0 0.0
        %1256 = vmatpush1.msra.mxu0 0.0
        %1257 = vmatprep.subr.mxu0 0.0
        %1258 = vmatpush1.msra.mxu0 0.0
        %1259 = vmatprep.subr.mxu0 0.0
        %1260 = vmatpush1.msra.mxu0 0.0
        %1261 = vmatprep.subr.mxu0 0.0
        %1262 = vmatpush1.msra.mxu0 0.0
        %1263 = vmatprep.subr.mxu0 0.0
        %1264 = vmatpush1.msra.mxu0 0.0
        %1265 = vmatprep.subr.mxu0 0.0
        %1266 = vmatpush1.msra.mxu0 0.0
        %1267 = vmatprep.subr.mxu0 0.0
        %1268 = vmatpush1.msra.mxu0 0.0
        %1269 = vmatprep.subr.mxu0 0.0
        %1270 = vmatpush1.msra.mxu0 0.0
        %1271 = vmatprep.subr.mxu0 0.0
        %1272 = vmatpush1.msra.mxu0 0.0
        %1273 = vmatprep.subr.mxu0 0.0
        %1274 = vmatpush1.msra.mxu0 0.0
        %1275 = vmatprep.subr.mxu0 0.0
        %1276 = vmatpush1.msra.mxu0 0.0
        %1277 = vmatprep.subr.mxu0 0.0
        %1278 = vmatpush1.msra.mxu0 0.0
        %1279 = vmatprep.subr.mxu0 0.0
        %1280 = vmatpush1.msra.mxu0 0.0
        %1281 = vmatprep.subr.mxu0 0.0
        %1282 = vmatpush1.msra.mxu0 0.0
        %1283 = vmatprep.subr.mxu0 0.0
        %1284 = vmatpush1.msra.mxu0 0.0
        %1285 = vmatprep.subr.mxu0 0.0
        %1286 = vmatpush1.msra.mxu0 0.0
        %1287 = vmatprep.subr.mxu0 0.0
        %1288 = vmatpush1.msra.mxu0 0.0
        %1289 = vmatprep.mubr.f32.mxu0 0.0
        %1290 = vmatmul.mubr.f32.gmra.mrb[0].mxu0 %v690
        %v1291 = vpop.f32.mrb[0].mxu0
        %v1292 = vadd.f32 0.0, %v1291
        %v1293 = vpop.f32.mrb[0].mxu0
        %1294 = vmatprep.mubr.f32.mxu0 0.0
        %1295 = vmatmul.mubr.f32.gmra.mrb[0].mxu0 %v693
        %v1296 = vpop.f32.mrb[0].mxu0
        %v1297 = vadd.f32 0.0, %v1296
        %v1298 = vpop.f32.mrb[0].mxu0
        %1299 = vmatprep.mubr.f32.mxu0 0.0
        %1300 = vmatmul.mubr.f32.gmra.mrb[0].mxu0 %v696
        %v1301 = vpop.f32.mrb[0].mxu0
        %v1302 = vadd.f32 0.0, %v1301
        %v1303 = vpop.f32.mrb[0].mxu0
        %1304 = vmatprep.mubr.f32.mxu0 0.0
        %1305 = vmatmul.mubr.f32.gmra.mrb[0].mxu0 %v699
        %v1306 = vpop.f32.mrb[0].mxu0
        %v1307 = vadd.f32 0.0, %v1306
        %v1308 = vpop.f32.mrb[0].mxu0
        %1309 = vmatprep.mubr.f32.mxu0 0.0
        %1310 = vmatmul.mubr.f32.gmra.mrb[0].mxu0 %v702
        %v1311 = vpop.f32.mrb[0].mxu0
        %v1312 = vadd.f32 0.0, %v1311
        %v1313 = vpop.f32.mrb[0].mxu0
        %1314 = vmatprep.mubr.f32.mxu0 0.0
        %1315 = vmatmul.mubr.f32.gmra.mrb[0].mxu0 %v705
        %v1316 = vpop.f32.mrb[0].mxu0
        %v1317 = vadd.f32 0.0, %v1316
        %v1318 = vpop.f32.mrb[0].mxu0
        %1319 = vmatprep.mubr.f32.mxu0 0.0
        %1320 = vmatmul.mubr.f32.gmra.mrb[0].mxu0 %v708
        %v1321 = vpop.f32.mrb[0].mxu0
        %v1322 = vadd.f32 0.0, %v1321
        %v1323 = vpop.f32.mrb[0].mxu0
        %1324 = vmatprep.mubr.f32.mxu0 0.0
        %1325 = vmatmul.mubr.f32.gmra.mrb[0].mxu0 %v711
        %v1326 = vpop.f32.mrb[0].mxu0
        %v1327 = vadd.f32 0.0, %v1326
        %v1328 = vpop.f32.mrb[0].mxu0
        %1329 = vmatprep.mubr.f32.mxu0 0.0
        %1330 = vmatmul.mubr.f32.gmra.mrb[0].mxu0 %v714
        %v1331 = vpop.f32.mrb[0].mxu0
        %v1332 = vadd.f32 0.0, %v1331
        %v1333 = vpop.f32.mrb[0].mxu0
        %1334 = vmatprep.mubr.f32.mxu0 0.0
        %1335 = vmatmul.mubr.f32.gmra.mrb[0].mxu0 %v717
        %v1336 = vpop.f32.mrb[0].mxu0
        %v1337 = vadd.f32 0.0, %v1336
        %v1338 = vpop.f32.mrb[0].mxu0
        %1339 = vmatprep.mubr.f32.mxu0 0.0
        %1340 = vmatmul.mubr.f32.gmra.mrb[0].mxu0 %v720
        %v1341 = vpop.f32.mrb[0].mxu0
        %v1342 = vadd.f32 0.0, %v1341
        %v1343 = vpop.f32.mrb[0].mxu0
        %1344 = vmatprep.mubr.f32.mxu0 0.0
        %1345 = vmatmul.mubr.f32.gmra.mrb[0].mxu0 %v723
        %v1346 = vpop.f32.mrb[0].mxu0
        %v1347 = vadd.f32 0.0, %v1346
        %v1348 = vpop.f32.mrb[0].mxu0
        %1349 = vdwg.mxu0
        %1350 = vmatprep.subr.mxu0 0.0
        %1351 = vmatpush1.msra.mxu0 %v462
        %1352 = vmatprep.subr.mxu0 0.0
        %1353 = vmatpush1.msra.mxu0 %v463
        %1354 = vmatprep.subr.mxu0 0.0
        %1355 = vmatpush1.msra.mxu0 %v464
        %1356 = vmatprep.subr.mxu0 0.0
        %1357 = vmatpush1.msra.mxu0 %v465
        %1358 = vmatprep.subr.mxu0 0.0
        %1359 = vmatpush1.msra.mxu0 0.0
        %1360 = vmatprep.subr.mxu0 0.0
        %1361 = vmatpush1.msra.mxu0 0.0
        %1362 = vmatprep.subr.mxu0 0.0
        %1363 = vmatpush1.msra.mxu0 0.0
        %1364 = vmatprep.subr.mxu0 0.0
        %1365 = vmatpush1.msra.mxu0 0.0
        %1366 = vmatprep.subr.mxu0 0.0
        %1367 = vmatpush1.msra.mxu0 0.0
        %1368 = vmatprep.subr.mxu0 0.0
        %1369 = vmatpush1.msra.mxu0 0.0
        %1370 = vmatprep.subr.mxu0 0.0
        %1371 = vmatpush1.msra.mxu0 0.0
        %1372 = vmatprep.subr.mxu0 0.0
        %1373 = vmatpush1.msra.mxu0 0.0
        %1374 = vmatprep.subr.mxu0 0.0
        %1375 = vmatpush1.msra.mxu0 0.0
        %1376 = vmatprep.subr.mxu0 0.0
        %1377 = vmatpush1.msra.mxu0 0.0
        %1378 = vmatprep.subr.mxu0 0.0
        %1379 = vmatpush1.msra.mxu0 0.0
        %1380 = vmatprep.subr.mxu0 0.0
        %1381 = vmatpush1.msra.mxu0 0.0
        %1382 = vmatprep.subr.mxu0 0.0
        %1383 = vmatpush1.msra.mxu0 0.0
        %1384 = vmatprep.subr.mxu0 0.0
        %1385 = vmatpush1.msra.mxu0 0.0
        %1386 = vmatprep.subr.mxu0 0.0
        %1387 = vmatpush1.msra.mxu0 0.0
        %1388 = vmatprep.subr.mxu0 0.0
        %1389 = vmatpush1.msra.mxu0 0.0
        %1390 = vmatprep.subr.mxu0 0.0
        %1391 = vmatpush1.msra.mxu0 0.0
        %1392 = vmatprep.subr.mxu0 0.0
        %1393 = vmatpush1.msra.mxu0 0.0
        %1394 = vmatprep.subr.mxu0 0.0
        %1395 = vmatpush1.msra.mxu0 0.0
        %1396 = vmatprep.subr.mxu0 0.0
        %1397 = vmatpush1.msra.mxu0 0.0
        %1398 = vmatprep.subr.mxu0 0.0
        %1399 = vmatpush1.msra.mxu0 0.0
        %1400 = vmatprep.subr.mxu0 0.0
        %1401 = vmatpush1.msra.mxu0 0.0
        %1402 = vmatprep.subr.mxu0 0.0
        %1403 = vmatpush1.msra.mxu0 0.0
        %1404 = vmatprep.subr.mxu0 0.0
        %1405 = vmatpush1.msra.mxu0 0.0
        %1406 = vmatprep.subr.mxu0 0.0
        %1407 = vmatpush1.msra.mxu0 0.0
        %1408 = vmatprep.subr.mxu0 0.0
        %1409 = vmatpush1.msra.mxu0 0.0
        %1410 = vmatprep.subr.mxu0 0.0
        %1411 = vmatpush1.msra.mxu0 0.0
        %1412 = vmatprep.subr.mxu0 0.0
        %1413 = vmatpush1.msra.mxu0 0.0
        %1414 = vmatprep.mubr.f32.mxu0 0.0
        %1415 = vmatmul.mubr.f32.gmra.mrb[0].mxu0 %v690
        %v1416 = vpop.f32.mrb[0].mxu0
        %v1417 = vadd.f32 0.0, %v1416
        %v1418 = vpop.f32.mrb[0].mxu0
        %1419 = vmatprep.mubr.f32.mxu0 0.0
        %1420 = vmatmul.mubr.f32.gmra.mrb[0].mxu0 %v693
        %v1421 = vpop.f32.mrb[0].mxu0
        %v1422 = vadd.f32 0.0, %v1421
        %v1423 = vpop.f32.mrb[0].mxu0
        %1424 = vmatprep.mubr.f32.mxu0 0.0
        %1425 = vmatmul.mubr.f32.gmra.mrb[0].mxu0 %v696
        %v1426 = vpop.f32.mrb[0].mxu0
        %v1427 = vadd.f32 0.0, %v1426
        %v1428 = vpop.f32.mrb[0].mxu0
        %1429 = vmatprep.mubr.f32.mxu0 0.0
        %1430 = vmatmul.mubr.f32.gmra.mrb[0].mxu0 %v699
        %v1431 = vpop.f32.mrb[0].mxu0
        %v1432 = vadd.f32 0.0, %v1431
        %v1433 = vpop.f32.mrb[0].mxu0
        %1434 = vmatprep.mubr.f32.mxu0 0.0
        %1435 = vmatmul.mubr.f32.gmra.mrb[0].mxu0 %v702
        %v1436 = vpop.f32.mrb[0].mxu0
        %v1437 = vadd.f32 0.0, %v1436
        %v1438 = vpop.f32.mrb[0].mxu0
        %1439 = vmatprep.mubr.f32.mxu0 0.0
        %1440 = vmatmul.mubr.f32.gmra.mrb[0].mxu0 %v705
        %v1441 = vpop.f32.mrb[0].mxu0
        %v1442 = vadd.f32 0.0, %v1441
        %v1443 = vpop.f32.mrb[0].mxu0
        %1444 = vmatprep.mubr.f32.mxu0 0.0
        %1445 = vmatmul.mubr.f32.gmra.mrb[0].mxu0 %v708
        %v1446 = vpop.f32.mrb[0].mxu0
        %v1447 = vadd.f32 0.0, %v1446
        %v1448 = vpop.f32.mrb[0].mxu0
        %1449 = vmatprep.mubr.f32.mxu0 0.0
        %1450 = vmatmul.mubr.f32.gmra.mrb[0].mxu0 %v711
        %v1451 = vpop.f32.mrb[0].mxu0
        %v1452 = vadd.f32 0.0, %v1451
        %v1453 = vpop.f32.mrb[0].mxu0
        %1454 = vmatprep.mubr.f32.mxu0 0.0
        %1455 = vmatmul.mubr.f32.gmra.mrb[0].mxu0 %v714
        %v1456 = vpop.f32.mrb[0].mxu0
        %v1457 = vadd.f32 0.0, %v1456
        %v1458 = vpop.f32.mrb[0].mxu0
        %1459 = vmatprep.mubr.f32.mxu0 0.0
        %1460 = vmatmul.mubr.f32.gmra.mrb[0].mxu0 %v717
        %v1461 = vpop.f32.mrb[0].mxu0
        %v1462 = vadd.f32 0.0, %v1461
        %v1463 = vpop.f32.mrb[0].mxu0
        %1464 = vmatprep.mubr.f32.mxu0 0.0
        %1465 = vmatmul.mubr.f32.gmra.mrb[0].mxu0 %v720
        %v1466 = vpop.f32.mrb[0].mxu0
        %v1467 = vadd.f32 0.0, %v1466
        %v1468 = vpop.f32.mrb[0].mxu0
        %1469 = vmatprep.mubr.f32.mxu0 0.0
        %1470 = vmatmul.mubr.f32.gmra.mrb[0].mxu0 %v723
        %v1471 = vpop.f32.mrb[0].mxu0
        %v1472 = vadd.f32 0.0, %v1471
        %v1473 = vpop.f32.mrb[0].mxu0
        %1474 = vdwg.mxu0
        %1475 = vmatprep.subr.mxu0 0.0
        %1476 = vmatpush1.msra.mxu0 %v466
        %1477 = vmatprep.subr.mxu0 0.0
        %1478 = vmatpush1.msra.mxu0 %v467
        %1479 = vmatprep.subr.mxu0 0.0
        %1480 = vmatpush1.msra.mxu0 %v468
        %1481 = vmatprep.subr.mxu0 0.0
        %1482 = vmatpush1.msra.mxu0 %v469
        %1483 = vmatprep.subr.mxu0 0.0
        %1484 = vmatpush1.msra.mxu0 0.0
        %1485 = vmatprep.subr.mxu0 0.0
        %1486 = vmatpush1.msra.mxu0 0.0
        %1487 = vmatprep.subr.mxu0 0.0
        %1488 = vmatpush1.msra.mxu0 0.0
        %1489 = vmatprep.subr.mxu0 0.0
        %1490 = vmatpush1.msra.mxu0 0.0
        %1491 = vmatprep.subr.mxu0 0.0
        %1492 = vmatpush1.msra.mxu0 0.0
        %1493 = vmatprep.subr.mxu0 0.0
        %1494 = vmatpush1.msra.mxu0 0.0
        %1495 = vmatprep.subr.mxu0 0.0
        %1496 = vmatpush1.msra.mxu0 0.0
        %1497 = vmatprep.subr.mxu0 0.0
        %1498 = vmatpush1.msra.mxu0 0.0
        %1499 = vmatprep.subr.mxu0 0.0
        %1500 = vmatpush1.msra.mxu0 0.0
        %1501 = vmatprep.subr.mxu0 0.0
        %1502 = vmatpush1.msra.mxu0 0.0
        %1503 = vmatprep.subr.mxu0 0.0
        %1504 = vmatpush1.msra.mxu0 0.0
        %1505 = vmatprep.subr.mxu0 0.0
        %1506 = vmatpush1.msra.mxu0 0.0
        %1507 = vmatprep.subr.mxu0 0.0
        %1508 = vmatpush1.msra.mxu0 0.0
        %1509 = vmatprep.subr.mxu0 0.0
        %1510 = vmatpush1.msra.mxu0 0.0
        %1511 = vmatprep.subr.mxu0 0.0
        %1512 = vmatpush1.msra.mxu0 0.0
        %1513 = vmatprep.subr.mxu0 0.0
        %1514 = vmatpush1.msra.mxu0 0.0
        %1515 = vmatprep.subr.mxu0 0.0
        %1516 = vmatpush1.msra.mxu0 0.0
        %1517 = vmatprep.subr.mxu0 0.0
        %1518 = vmatpush1.msra.mxu0 0.0
        %1519 = vmatprep.subr.mxu0 0.0
        %1520 = vmatpush1.msra.mxu0 0.0
        %1521 = vmatprep.subr.mxu0 0.0
        %1522 = vmatpush1.msra.mxu0 0.0
        %1523 = vmatprep.subr.mxu0 0.0
        %1524 = vmatpush1.msra.mxu0 0.0
        %1525 = vmatprep.subr.mxu0 0.0
        %1526 = vmatpush1.msra.mxu0 0.0
        %1527 = vmatprep.subr.mxu0 0.0
        %1528 = vmatpush1.msra.mxu0 0.0
        %1529 = vmatprep.subr.mxu0 0.0
        %1530 = vmatpush1.msra.mxu0 0.0
        %1531 = vmatprep.subr.mxu0 0.0
        %1532 = vmatpush1.msra.mxu0 0.0
        %1533 = vmatprep.subr.mxu0 0.0
        %1534 = vmatpush1.msra.mxu0 0.0
        %1535 = vmatprep.subr.mxu0 0.0
        %1536 = vmatpush1.msra.mxu0 0.0
        %1537 = vmatprep.subr.mxu0 0.0
        %1538 = vmatpush1.msra.mxu0 0.0
        %1539 = vmatprep.mubr.f32.mxu0 0.0
        %1540 = vmatmul.mubr.f32.gmra.mrb[0].mxu0 %v690
        %v1541 = vpop.f32.mrb[0].mxu0
        %v1542 = vadd.f32 0.0, %v1541
        %v1543 = vpop.f32.mrb[0].mxu0
        %1544 = vmatprep.mubr.f32.mxu0 0.0
        %1545 = vmatmul.mubr.f32.gmra.mrb[0].mxu0 %v693
        %v1546 = vpop.f32.mrb[0].mxu0
        %v1547 = vadd.f32 0.0, %v1546
        %v1548 = vpop.f32.mrb[0].mxu0
        %1549 = vmatprep.mubr.f32.mxu0 0.0
        %1550 = vmatmul.mubr.f32.gmra.mrb[0].mxu0 %v696
        %v1551 = vpop.f32.mrb[0].mxu0
        %v1552 = vadd.f32 0.0, %v1551
        %v1553 = vpop.f32.mrb[0].mxu0
        %1554 = vmatprep.mubr.f32.mxu0 0.0
        %1555 = vmatmul.mubr.f32.gmra.mrb[0].mxu0 %v699
        %v1556 = vpop.f32.mrb[0].mxu0
        %v1557 = vadd.f32 0.0, %v1556
        %v1558 = vpop.f32.mrb[0].mxu0
        %1559 = vmatprep.mubr.f32.mxu0 0.0
        %1560 = vmatmul.mubr.f32.gmra.mrb[0].mxu0 %v702
        %v1561 = vpop.f32.mrb[0].mxu0
        %v1562 = vadd.f32 0.0, %v1561
        %v1563 = vpop.f32.mrb[0].mxu0
        %1564 = vmatprep.mubr.f32.mxu0 0.0
        %1565 = vmatmul.mubr.f32.gmra.mrb[0].mxu0 %v705
        %v1566 = vpop.f32.mrb[0].mxu0
        %v1567 = vadd.f32 0.0, %v1566
        %v1568 = vpop.f32.mrb[0].mxu0
        %1569 = vmatprep.mubr.f32.mxu0 0.0
        %1570 = vmatmul.mubr.f32.gmra.mrb[0].mxu0 %v708
        %v1571 = vpop.f32.mrb[0].mxu0
        %v1572 = vadd.f32 0.0, %v1571
        %v1573 = vpop.f32.mrb[0].mxu0
        %1574 = vmatprep.mubr.f32.mxu0 0.0
        %1575 = vmatmul.mubr.f32.gmra.mrb[0].mxu0 %v711
        %v1576 = vpop.f32.mrb[0].mxu0
        %v1577 = vadd.f32 0.0, %v1576
        %v1578 = vpop.f32.mrb[0].mxu0
        %1579 = vmatprep.mubr.f32.mxu0 0.0
        %1580 = vmatmul.mubr.f32.gmra.mrb[0].mxu0 %v714
        %v1581 = vpop.f32.mrb[0].mxu0
        %v1582 = vadd.f32 0.0, %v1581
        %v1583 = vpop.f32.mrb[0].mxu0
        %1584 = vmatprep.mubr.f32.mxu0 0.0
        %1585 = vmatmul.mubr.f32.gmra.mrb[0].mxu0 %v717
        %v1586 = vpop.f32.mrb[0].mxu0
        %v1587 = vadd.f32 0.0, %v1586
        %v1588 = vpop.f32.mrb[0].mxu0
        %1589 = vmatprep.mubr.f32.mxu0 0.0
        %1590 = vmatmul.mubr.f32.gmra.mrb[0].mxu0 %v720
        %v1591 = vpop.f32.mrb[0].mxu0
        %v1592 = vadd.f32 0.0, %v1591
        %v1593 = vpop.f32.mrb[0].mxu0
        %1594 = vmatprep.mubr.f32.mxu0 0.0
        %1595 = vmatmul.mubr.f32.gmra.mrb[0].mxu0 %v723
        %v1596 = vpop.f32.mrb[0].mxu0
        %v1597 = vadd.f32 0.0, %v1596
        %v1598 = vpop.f32.mrb[0].mxu0
        %1599 = vdwg.mxu0
        %1600 = vmatprep.subr.mxu0 0.0
        %1601 = vmatpush1.msra.mxu0 %v470
        %1602 = vmatprep.subr.mxu0 0.0
        %1603 = vmatpush1.msra.mxu0 %v471
        %1604 = vmatprep.subr.mxu0 0.0
        %1605 = vmatpush1.msra.mxu0 %v472
        %1606 = vmatprep.subr.mxu0 0.0
        %1607 = vmatpush1.msra.mxu0 %v473
        %1608 = vmatprep.subr.mxu0 0.0
        %1609 = vmatpush1.msra.mxu0 0.0
        %1610 = vmatprep.subr.mxu0 0.0
        %1611 = vmatpush1.msra.mxu0 0.0
        %1612 = vmatprep.subr.mxu0 0.0
        %1613 = vmatpush1.msra.mxu0 0.0
        %1614 = vmatprep.subr.mxu0 0.0
        %1615 = vmatpush1.msra.mxu0 0.0
        %1616 = vmatprep.subr.mxu0 0.0
        %1617 = vmatpush1.msra.mxu0 0.0
        %1618 = vmatprep.subr.mxu0 0.0
        %1619 = vmatpush1.msra.mxu0 0.0
        %1620 = vmatprep.subr.mxu0 0.0
        %1621 = vmatpush1.msra.mxu0 0.0
        %1622 = vmatprep.subr.mxu0 0.0
        %1623 = vmatpush1.msra.mxu0 0.0
        %1624 = vmatprep.subr.mxu0 0.0
        %1625 = vmatpush1.msra.mxu0 0.0
        %1626 = vmatprep.subr.mxu0 0.0
        %1627 = vmatpush1.msra.mxu0 0.0
        %1628 = vmatprep.subr.mxu0 0.0
        %1629 = vmatpush1.msra.mxu0 0.0
        %1630 = vmatprep.subr.mxu0 0.0
        %1631 = vmatpush1.msra.mxu0 0.0
        %1632 = vmatprep.subr.mxu0 0.0
        %1633 = vmatpush1.msra.mxu0 0.0
        %1634 = vmatprep.subr.mxu0 0.0
        %1635 = vmatpush1.msra.mxu0 0.0
        %1636 = vmatprep.subr.mxu0 0.0
        %1637 = vmatpush1.msra.mxu0 0.0
        %1638 = vmatprep.subr.mxu0 0.0
        %1639 = vmatpush1.msra.mxu0 0.0
        %1640 = vmatprep.subr.mxu0 0.0
        %1641 = vmatpush1.msra.mxu0 0.0
        %1642 = vmatprep.subr.mxu0 0.0
        %1643 = vmatpush1.msra.mxu0 0.0
        %1644 = vmatprep.subr.mxu0 0.0
        %1645 = vmatpush1.msra.mxu0 0.0
        %1646 = vmatprep.subr.mxu0 0.0
        %1647 = vmatpush1.msra.mxu0 0.0
        %1648 = vmatprep.subr.mxu0 0.0
        %1649 = vmatpush1.msra.mxu0 0.0
        %1650 = vmatprep.subr.mxu0 0.0
        %1651 = vmatpush1.msra.mxu0 0.0
        %1652 = vmatprep.subr.mxu0 0.0
        %1653 = vmatpush1.msra.mxu0 0.0
        %1654 = vmatprep.subr.mxu0 0.0
        %1655 = vmatpush1.msra.mxu0 0.0
        %1656 = vmatprep.subr.mxu0 0.0
        %1657 = vmatpush1.msra.mxu0 0.0
        %1658 = vmatprep.subr.mxu0 0.0
        %1659 = vmatpush1.msra.mxu0 0.0
        %1660 = vmatprep.subr.mxu0 0.0
        %1661 = vmatpush1.msra.mxu0 0.0
        %1662 = vmatprep.subr.mxu0 0.0
        %1663 = vmatpush1.msra.mxu0 0.0
        %1664 = vmatprep.mubr.f32.mxu0 0.0
        %1665 = vmatmul.mubr.f32.gmra.mrb[0].mxu0 %v690
        %v1666 = vpop.f32.mrb[0].mxu0
        %v1667 = vadd.f32 0.0, %v1666
        %v1668 = vpop.f32.mrb[0].mxu0
        %1669 = vmatprep.mubr.f32.mxu0 0.0
        %1670 = vmatmul.mubr.f32.gmra.mrb[0].mxu0 %v693
        %v1671 = vpop.f32.mrb[0].mxu0
        %v1672 = vadd.f32 0.0, %v1671
        %v1673 = vpop.f32.mrb[0].mxu0
        %1674 = vmatprep.mubr.f32.mxu0 0.0
        %1675 = vmatmul.mubr.f32.gmra.mrb[0].mxu0 %v696
        %v1676 = vpop.f32.mrb[0].mxu0
        %v1677 = vadd.f32 0.0, %v1676
        %v1678 = vpop.f32.mrb[0].mxu0
        %1679 = vmatprep.mubr.f32.mxu0 0.0
        %1680 = vmatmul.mubr.f32.gmra.mrb[0].mxu0 %v699
        %v1681 = vpop.f32.mrb[0].mxu0
        %v1682 = vadd.f32 0.0, %v1681
        %v1683 = vpop.f32.mrb[0].mxu0
        %1684 = vmatprep.mubr.f32.mxu0 0.0
        %1685 = vmatmul.mubr.f32.gmra.mrb[0].mxu0 %v702
        %v1686 = vpop.f32.mrb[0].mxu0
        %v1687 = vadd.f32 0.0, %v1686
        %v1688 = vpop.f32.mrb[0].mxu0
        %1689 = vmatprep.mubr.f32.mxu0 0.0
        %1690 = vmatmul.mubr.f32.gmra.mrb[0].mxu0 %v705
        %v1691 = vpop.f32.mrb[0].mxu0
        %v1692 = vadd.f32 0.0, %v1691
        %v1693 = vpop.f32.mrb[0].mxu0
        %1694 = vmatprep.mubr.f32.mxu0 0.0
        %1695 = vmatmul.mubr.f32.gmra.mrb[0].mxu0 %v708
        %v1696 = vpop.f32.mrb[0].mxu0
        %v1697 = vadd.f32 0.0, %v1696
        %v1698 = vpop.f32.mrb[0].mxu0
        %1699 = vmatprep.mubr.f32.mxu0 0.0
        %1700 = vmatmul.mubr.f32.gmra.mrb[0].mxu0 %v711
        %v1701 = vpop.f32.mrb[0].mxu0
        %v1702 = vadd.f32 0.0, %v1701
        %v1703 = vpop.f32.mrb[0].mxu0
        %1704 = vmatprep.mubr.f32.mxu0 0.0
        %1705 = vmatmul.mubr.f32.gmra.mrb[0].mxu0 %v714
        %v1706 = vpop.f32.mrb[0].mxu0
        %v1707 = vadd.f32 0.0, %v1706
        %v1708 = vpop.f32.mrb[0].mxu0
        %1709 = vmatprep.mubr.f32.mxu0 0.0
        %1710 = vmatmul.mubr.f32.gmra.mrb[0].mxu0 %v717
        %v1711 = vpop.f32.mrb[0].mxu0
        %v1712 = vadd.f32 0.0, %v1711
        %v1713 = vpop.f32.mrb[0].mxu0
        %1714 = vmatprep.mubr.f32.mxu0 0.0
        %1715 = vmatmul.mubr.f32.gmra.mrb[0].mxu0 %v720
        %v1716 = vpop.f32.mrb[0].mxu0
        %v1717 = vadd.f32 0.0, %v1716
        %v1718 = vpop.f32.mrb[0].mxu0
        %1719 = vmatprep.mubr.f32.mxu0 0.0
        %1720 = vmatmul.mubr.f32.gmra.mrb[0].mxu0 %v723
        %v1721 = vpop.f32.mrb[0].mxu0
        %v1722 = vadd.f32 0.0, %v1721
        %v1723 = vpop.f32.mrb[0].mxu0
        %1724 = vdwg.mxu0
        %vm1725 = vcmask 130048
        %v1727 = vsel %vm1725, %v680, 0
        %v1730 = vsel %vm1725, %v681, 0
        %v1733 = vsel %vm1725, %v682, 0
        %v1736 = vsel %vm1725, %v683, 0
        %v1739 = vsel %vm1725, %v684, 0
        %v1742 = vsel %vm1725, %v685, 0
        %v1745 = vsel %vm1725, %v686, 0
        %v1748 = vsel %vm1725, %v687, 0
        %1750 = vmatprep.subr.mxu0 %v519
        %1751 = vmatpush1.msra.mxu0 %v518
        %1752 = vmatprep.subr.mxu0 %v522
        %1753 = vmatpush1.msra.mxu0 %v521
        %1754 = vmatprep.subr.mxu0 0.0
        %1755 = vmatpush1.msra.mxu0 0.0
        %1756 = vmatprep.subr.mxu0 0.0
        %1757 = vmatpush1.msra.mxu0 0.0
        %1758 = vmatprep.subr.mxu0 0.0
        %1759 = vmatpush1.msra.mxu0 0.0
        %1760 = vmatprep.subr.mxu0 0.0
        %1761 = vmatpush1.msra.mxu0 0.0
        %1762 = vmatprep.subr.mxu0 0.0
        %1763 = vmatpush1.msra.mxu0 0.0
        %1764 = vmatprep.subr.mxu0 0.0
        %1765 = vmatpush1.msra.mxu0 0.0
        %1766 = vmatprep.subr.mxu0 0.0
        %1767 = vmatpush1.msra.mxu0 0.0
        %1768 = vmatprep.subr.mxu0 0.0
        %1769 = vmatpush1.msra.mxu0 0.0
        %1770 = vmatprep.subr.mxu0 0.0
        %1771 = vmatpush1.msra.mxu0 0.0
        %1772 = vmatprep.subr.mxu0 0.0
        %1773 = vmatpush1.msra.mxu0 0.0
        %1774 = vmatprep.subr.mxu0 0.0
        %1775 = vmatpush1.msra.mxu0 0.0
        %1776 = vmatprep.subr.mxu0 0.0
        %1777 = vmatpush1.msra.mxu0 0.0
        %1778 = vmatprep.subr.mxu0 0.0
        %1779 = vmatpush1.msra.mxu0 0.0
        %1780 = vmatprep.subr.mxu0 0.0
        %1781 = vmatpush1.msra.mxu0 0.0
        %1782 = vmatprep.subr.mxu0 0.0
        %1783 = vmatpush1.msra.mxu0 0.0
        %1784 = vmatprep.subr.mxu0 0.0
        %1785 = vmatpush1.msra.mxu0 0.0
        %1786 = vmatprep.subr.mxu0 0.0
        %1787 = vmatpush1.msra.mxu0 0.0
        %1788 = vmatprep.subr.mxu0 0.0
        %1789 = vmatpush1.msra.mxu0 0.0
        %1790 = vmatprep.subr.mxu0 0.0
        %1791 = vmatpush1.msra.mxu0 0.0
        %1792 = vmatprep.subr.mxu0 0.0
        %1793 = vmatpush1.msra.mxu0 0.0
        %1794 = vmatprep.subr.mxu0 0.0
        %1795 = vmatpush1.msra.mxu0 0.0
        %1796 = vmatprep.subr.mxu0 0.0
        %1797 = vmatpush1.msra.mxu0 0.0
        %1798 = vmatprep.subr.mxu0 0.0
        %1799 = vmatpush1.msra.mxu0 0.0
        %1800 = vmatprep.subr.mxu0 0.0
        %1801 = vmatpush1.msra.mxu0 0.0
        %1802 = vmatprep.subr.mxu0 0.0
        %1803 = vmatpush1.msra.mxu0 0.0
        %1804 = vmatprep.subr.mxu0 0.0
        %1805 = vmatpush1.msra.mxu0 0.0
        %1806 = vmatprep.subr.mxu0 0.0
        %1807 = vmatpush1.msra.mxu0 0.0
        %1808 = vmatprep.subr.mxu0 0.0
        %1809 = vmatpush1.msra.mxu0 0.0
        %1810 = vmatprep.subr.mxu0 0.0
        %1811 = vmatpush1.msra.mxu0 0.0
        %1812 = vmatprep.subr.mxu0 0.0
        %1813 = vmatpush1.msra.mxu0 0.0
        %1814 = vmatprep.mubr.f32.mxu0 0.0
        %1815 = vmatmul.mubr.f32.gmra.mrb[0].mxu0 %v1727
        %v1816 = vpop.f32.mrb[0].mxu0
        %v1817 = vadd.f32 0.0, %v1816
        %v1818 = vpop.f32.mrb[0].mxu0
        %v1819 = vadd.f32 0.0, %v1818
        %1820 = vmatprep.mubr.f32.mxu0 0.0
        %1821 = vmatmul.mubr.f32.gmra.mrb[0].mxu0 %v1730
        %v1822 = vpop.f32.mrb[0].mxu0
        %v1823 = vadd.f32 0.0, %v1822
        %v1824 = vpop.f32.mrb[0].mxu0
        %v1825 = vadd.f32 0.0, %v1824
        %1826 = vmatprep.mubr.f32.mxu0 0.0
        %1827 = vmatmul.mubr.f32.gmra.mrb[0].mxu0 %v1733
        %v1828 = vpop.f32.mrb[0].mxu0
        %v1829 = vadd.f32 0.0, %v1828
        %v1830 = vpop.f32.mrb[0].mxu0
        %v1831 = vadd.f32 0.0, %v1830
        %1832 = vmatprep.mubr.f32.mxu0 0.0
        %1833 = vmatmul.mubr.f32.gmra.mrb[0].mxu0 %v1736
        %v1834 = vpop.f32.mrb[0].mxu0
        %v1835 = vadd.f32 0.0, %v1834
        %v1836 = vpop.f32.mrb[0].mxu0
        %v1837 = vadd.f32 0.0, %v1836
        %1838 = vmatprep.mubr.f32.mxu0 0.0
        %1839 = vmatmul.mubr.f32.gmra.mrb[0].mxu0 %v1739
        %v1840 = vpop.f32.mrb[0].mxu0
        %v1841 = vadd.f32 0.0, %v1840
        %v1842 = vpop.f32.mrb[0].mxu0
        %v1843 = vadd.f32 0.0, %v1842
        %1844 = vmatprep.mubr.f32.mxu0 0.0
        %1845 = vmatmul.mubr.f32.gmra.mrb[0].mxu0 %v1742
        %v1846 = vpop.f32.mrb[0].mxu0
        %v1847 = vadd.f32 0.0, %v1846
        %v1848 = vpop.f32.mrb[0].mxu0
        %v1849 = vadd.f32 0.0, %v1848
        %1850 = vmatprep.mubr.f32.mxu0 0.0
        %1851 = vmatmul.mubr.f32.gmra.mrb[0].mxu0 %v1745
        %v1852 = vpop.f32.mrb[0].mxu0
        %v1853 = vadd.f32 0.0, %v1852
        %v1854 = vpop.f32.mrb[0].mxu0
        %v1855 = vadd.f32 0.0, %v1854
        %1856 = vmatprep.mubr.f32.mxu0 0.0
        %1857 = vmatmul.mubr.f32.gmra.mrb[0].mxu0 %v1748
        %v1858 = vpop.f32.mrb[0].mxu0
        %v1859 = vadd.f32 0.0, %v1858
        %v1860 = vpop.f32.mrb[0].mxu0
        %v1861 = vadd.f32 0.0, %v1860
        %1862 = vdwg.mxu0
        %1863 = vmatprep.subr.mxu0 0.0
        %1864 = vmatpush1.msra.mxu0 %v520
        %1865 = vmatprep.subr.mxu0 0.0
        %1866 = vmatpush1.msra.mxu0 %v523
        %1867 = vmatprep.subr.mxu0 0.0
        %1868 = vmatpush1.msra.mxu0 0.0
        %1869 = vmatprep.subr.mxu0 0.0
        %1870 = vmatpush1.msra.mxu0 0.0
        %1871 = vmatprep.subr.mxu0 0.0
        %1872 = vmatpush1.msra.mxu0 0.0
        %1873 = vmatprep.subr.mxu0 0.0
        %1874 = vmatpush1.msra.mxu0 0.0
        %1875 = vmatprep.subr.mxu0 0.0
        %1876 = vmatpush1.msra.mxu0 0.0
        %1877 = vmatprep.subr.mxu0 0.0
        %1878 = vmatpush1.msra.mxu0 0.0
        %1879 = vmatprep.subr.mxu0 0.0
        %1880 = vmatpush1.msra.mxu0 0.0
        %1881 = vmatprep.subr.mxu0 0.0
        %1882 = vmatpush1.msra.mxu0 0.0
        %1883 = vmatprep.subr.mxu0 0.0
        %1884 = vmatpush1.msra.mxu0 0.0
        %1885 = vmatprep.subr.mxu0 0.0
        %1886 = vmatpush1.msra.mxu0 0.0
        %1887 = vmatprep.subr.mxu0 0.0
        %1888 = vmatpush1.msra.mxu0 0.0
        %1889 = vmatprep.subr.mxu0 0.0
        %1890 = vmatpush1.msra.mxu0 0.0
        %1891 = vmatprep.subr.mxu0 0.0
        %1892 = vmatpush1.msra.mxu0 0.0
        %1893 = vmatprep.subr.mxu0 0.0
        %1894 = vmatpush1.msra.mxu0 0.0
        %1895 = vmatprep.subr.mxu0 0.0
        %1896 = vmatpush1.msra.mxu0 0.0
        %1897 = vmatprep.subr.mxu0 0.0
        %1898 = vmatpush1.msra.mxu0 0.0
        %1899 = vmatprep.subr.mxu0 0.0
        %1900 = vmatpush1.msra.mxu0 0.0
        %1901 = vmatprep.subr.mxu0 0.0
        %1902 = vmatpush1.msra.mxu0 0.0
        %1903 = vmatprep.subr.mxu0 0.0
        %1904 = vmatpush1.msra.mxu0 0.0
        %1905 = vmatprep.subr.mxu0 0.0
        %1906 = vmatpush1.msra.mxu0 0.0
        %1907 = vmatprep.subr.mxu0 0.0
        %1908 = vmatpush1.msra.mxu0 0.0
        %1909 = vmatprep.subr.mxu0 0.0
        %1910 = vmatpush1.msra.mxu0 0.0
        %1911 = vmatprep.subr.mxu0 0.0
        %1912 = vmatpush1.msra.mxu0 0.0
        %1913 = vmatprep.subr.mxu0 0.0
        %1914 = vmatpush1.msra.mxu0 0.0
        %1915 = vmatprep.subr.mxu0 0.0
        %1916 = vmatpush1.msra.mxu0 0.0
        %1917 = vmatprep.subr.mxu0 0.0
        %1918 = vmatpush1.msra.mxu0 0.0
        %1919 = vmatprep.subr.mxu0 0.0
        %1920 = vmatpush1.msra.mxu0 0.0
        %1921 = vmatprep.subr.mxu0 0.0
        %1922 = vmatpush1.msra.mxu0 0.0
        %1923 = vmatprep.subr.mxu0 0.0
        %1924 = vmatpush1.msra.mxu0 0.0
        %1925 = vmatprep.subr.mxu0 0.0
        %1926 = vmatpush1.msra.mxu0 0.0
        %1927 = vmatprep.mubr.f32.mxu0 0.0
        %1928 = vmatmul.mubr.f32.gmra.mrb[0].mxu0 %v1727
        %v1929 = vpop.f32.mrb[0].mxu0
        %v1930 = vadd.f32 0.0, %v1929
        %v1931 = vpop.f32.mrb[0].mxu0
        %1932 = vmatprep.mubr.f32.mxu0 0.0
        %1933 = vmatmul.mubr.f32.gmra.mrb[0].mxu0 %v1730
        %v1934 = vpop.f32.mrb[0].mxu0
        %v1935 = vadd.f32 0.0, %v1934
        %v1936 = vpop.f32.mrb[0].mxu0
        %1937 = vmatprep.mubr.f32.mxu0 0.0
        %1938 = vmatmul.mubr.f32.gmra.mrb[0].mxu0 %v1733
        %v1939 = vpop.f32.mrb[0].mxu0
        %v1940 = vadd.f32 0.0, %v1939
        %v1941 = vpop.f32.mrb[0].mxu0
        %1942 = vmatprep.mubr.f32.mxu0 0.0
        %1943 = vmatmul.mubr.f32.gmra.mrb[0].mxu0 %v1736
        %v1944 = vpop.f32.mrb[0].mxu0
        %v1945 = vadd.f32 0.0, %v1944
        %v1946 = vpop.f32.mrb[0].mxu0
        %1947 = vmatprep.mubr.f32.mxu0 0.0
        %1948 = vmatmul.mubr.f32.gmra.mrb[0].mxu0 %v1739
        %v1949 = vpop.f32.mrb[0].mxu0
        %v1950 = vadd.f32 0.0, %v1949
        %v1951 = vpop.f32.mrb[0].mxu0
        %1952 = vmatprep.mubr.f32.mxu0 0.0
        %1953 = vmatmul.mubr.f32.gmra.mrb[0].mxu0 %v1742
        %v1954 = vpop.f32.mrb[0].mxu0
        %v1955 = vadd.f32 0.0, %v1954
        %v1956 = vpop.f32.mrb[0].mxu0
        %1957 = vmatprep.mubr.f32.mxu0 0.0
        %1958 = vmatmul.mubr.f32.gmra.mrb[0].mxu0 %v1745
        %v1959 = vpop.f32.mrb[0].mxu0
        %v1960 = vadd.f32 0.0, %v1959
        %v1961 = vpop.f32.mrb[0].mxu0
        %1962 = vmatprep.mubr.f32.mxu0 0.0
        %1963 = vmatmul.mubr.f32.gmra.mrb[0].mxu0 %v1748
        %v1964 = vpop.f32.mrb[0].mxu0
        %v1965 = vadd.f32 0.0, %v1964
        %v1966 = vpop.f32.mrb[0].mxu0
        %1967 = vdwg.mxu0
        %1968 = vmatprep.subr.mxu0 0.0
        %1969 = vmatpush1.msra.mxu0 %v536
        %1970 = vmatprep.subr.mxu0 0.0
        %1971 = vmatpush1.msra.mxu0 %v537
        %1972 = vmatprep.subr.mxu0 0.0
        %1973 = vmatpush1.msra.mxu0 %v538
        %1974 = vmatprep.subr.mxu0 0.0
        %1975 = vmatpush1.msra.mxu0 %v539
        %1976 = vmatprep.subr.mxu0 0.0
        %1977 = vmatpush1.msra.mxu0 %v540
        %1978 = vmatprep.subr.mxu0 0.0
        %1979 = vmatpush1.msra.mxu0 %v541
        %1980 = vmatprep.subr.mxu0 0.0
        %1981 = vmatpush1.msra.mxu0 %v542
        %1982 = vmatprep.subr.mxu0 0.0
        %1983 = vmatpush1.msra.mxu0 %v543
        %1984 = vmatprep.subr.mxu0 0.0
        %1985 = vmatpush1.msra.mxu0 %v544
        %1986 = vmatprep.subr.mxu0 0.0
        %1987 = vmatpush1.msra.mxu0 %v545
        %1988 = vmatprep.subr.mxu0 0.0
        %1989 = vmatpush1.msra.mxu0 %v546
        %1990 = vmatprep.subr.mxu0 0.0
        %1991 = vmatpush1.msra.mxu0 %v547
        %1992 = vmatprep.subr.mxu0 0.0
        %1993 = vmatpush1.msra.mxu0 %v548
        %1994 = vmatprep.subr.mxu0 0.0
        %1995 = vmatpush1.msra.mxu0 %v549
        %1996 = vmatprep.subr.mxu0 0.0
        %1997 = vmatpush1.msra.mxu0 %v550
        %1998 = vmatprep.subr.mxu0 0.0
        %1999 = vmatpush1.msra.mxu0 %v551
        %2000 = vmatprep.subr.mxu0 0.0
        %2001 = vmatpush1.msra.mxu0 0.0
        %2002 = vmatprep.subr.mxu0 0.0
        %2003 = vmatpush1.msra.mxu0 0.0
        %2004 = vmatprep.subr.mxu0 0.0
        %2005 = vmatpush1.msra.mxu0 0.0
        %2006 = vmatprep.subr.mxu0 0.0
        %2007 = vmatpush1.msra.mxu0 0.0
        %2008 = vmatprep.subr.mxu0 0.0
        %2009 = vmatpush1.msra.mxu0 0.0
        %2010 = vmatprep.subr.mxu0 0.0
        %2011 = vmatpush1.msra.mxu0 0.0
        %2012 = vmatprep.subr.mxu0 0.0
        %2013 = vmatpush1.msra.mxu0 0.0
        %2014 = vmatprep.subr.mxu0 0.0
        %2015 = vmatpush1.msra.mxu0 0.0
        %2016 = vmatprep.subr.mxu0 0.0
        %2017 = vmatpush1.msra.mxu0 0.0
        %2018 = vmatprep.subr.mxu0 0.0
        %2019 = vmatpush1.msra.mxu0 0.0
        %2020 = vmatprep.subr.mxu0 0.0
        %2021 = vmatpush1.msra.mxu0 0.0
        %2022 = vmatprep.subr.mxu0 0.0
        %2023 = vmatpush1.msra.mxu0 0.0
        %2024 = vmatprep.subr.mxu0 0.0
        %2025 = vmatpush1.msra.mxu0 0.0
        %2026 = vmatprep.subr.mxu0 0.0
        %2027 = vmatpush1.msra.mxu0 0.0
        %2028 = vmatprep.subr.mxu0 0.0
        %2029 = vmatpush1.msra.mxu0 0.0
        %2030 = vmatprep.subr.mxu0 0.0
        %2031 = vmatpush1.msra.mxu0 0.0
        %2032 = vmatprep.mubr.f32.mxu0 0.0
        %2033 = vmatmul.mubr.f32.gmra.mrb[0].mxu0 %v792
        %v2034 = vpop.f32.mrb[0].mxu0
        %v2035 = vadd.f32 0.0, %v2034
        %v2036 = vpop.f32.mrb[0].mxu0
        %2037 = vmatprep.mubr.f32.mxu0 0.0
        %2038 = vmatmul.mubr.f32.gmra.mrb[0].mxu0 %v797
        %v2039 = vpop.f32.mrb[0].mxu0
        %v2040 = vadd.f32 0.0, %v2039
        %v2041 = vpop.f32.mrb[0].mxu0
        %2042 = vmatprep.mubr.f32.mxu0 0.0
        %2043 = vmatmul.mubr.f32.gmra.mrb[0].mxu0 %v802
        %v2044 = vpop.f32.mrb[0].mxu0
        %v2045 = vadd.f32 0.0, %v2044
        %v2046 = vpop.f32.mrb[0].mxu0
        %2047 = vmatprep.mubr.f32.mxu0 0.0
        %2048 = vmatmul.mubr.f32.gmra.mrb[0].mxu0 %v807
        %v2049 = vpop.f32.mrb[0].mxu0
        %v2050 = vadd.f32 0.0, %v2049
        %v2051 = vpop.f32.mrb[0].mxu0
        %2052 = vmatprep.mubr.f32.mxu0 0.0
        %2053 = vmatmul.mubr.f32.gmra.mrb[0].mxu0 %v917
        %v2054 = vpop.f32.mrb[0].mxu0
        %v2055 = vadd.f32 0.0, %v2054
        %v2056 = vpop.f32.mrb[0].mxu0
        %2057 = vmatprep.mubr.f32.mxu0 0.0
        %2058 = vmatmul.mubr.f32.gmra.mrb[0].mxu0 %v922
        %v2059 = vpop.f32.mrb[0].mxu0
        %v2060 = vadd.f32 0.0, %v2059
        %v2061 = vpop.f32.mrb[0].mxu0
        %2062 = vmatprep.mubr.f32.mxu0 0.0
        %2063 = vmatmul.mubr.f32.gmra.mrb[0].mxu0 %v927
        %v2064 = vpop.f32.mrb[0].mxu0
        %v2065 = vadd.f32 0.0, %v2064
        %v2066 = vpop.f32.mrb[0].mxu0
        %2067 = vmatprep.mubr.f32.mxu0 0.0
        %2068 = vmatmul.mubr.f32.gmra.mrb[0].mxu0 %v932
        %v2069 = vpop.f32.mrb[0].mxu0
        %v2070 = vadd.f32 0.0, %v2069
        %v2071 = vpop.f32.mrb[0].mxu0
        %2072 = vmatprep.mubr.f32.mxu0 0.0
        %2073 = vmatmul.mubr.f32.gmra.mrb[0].mxu0 %v1042
        %v2074 = vpop.f32.mrb[0].mxu0
        %v2075 = vadd.f32 0.0, %v2074
        %v2076 = vpop.f32.mrb[0].mxu0
        %2077 = vmatprep.mubr.f32.mxu0 0.0
        %2078 = vmatmul.mubr.f32.gmra.mrb[0].mxu0 %v1047
        %v2079 = vpop.f32.mrb[0].mxu0
        %v2080 = vadd.f32 0.0, %v2079
        %v2081 = vpop.f32.mrb[0].mxu0
        %2082 = vmatprep.mubr.f32.mxu0 0.0
        %2083 = vmatmul.mubr.f32.gmra.mrb[0].mxu0 %v1052
        %v2084 = vpop.f32.mrb[0].mxu0
        %v2085 = vadd.f32 0.0, %v2084
        %v2086 = vpop.f32.mrb[0].mxu0
        %2087 = vmatprep.mubr.f32.mxu0 0.0
        %2088 = vmatmul.mubr.f32.gmra.mrb[0].mxu0 %v1057
        %v2089 = vpop.f32.mrb[0].mxu0
        %v2090 = vadd.f32 0.0, %v2089
        %v2091 = vpop.f32.mrb[0].mxu0
        %2092 = vmatprep.mubr.f32.mxu0 0.0
        %2093 = vmatmul.mubr.f32.gmra.mrb[0].mxu0 %v1167
        %v2094 = vpop.f32.mrb[0].mxu0
        %v2095 = vadd.f32 0.0, %v2094
        %v2096 = vpop.f32.mrb[0].mxu0
        %2097 = vmatprep.mubr.f32.mxu0 0.0
        %2098 = vmatmul.mubr.f32.gmra.mrb[0].mxu0 %v1172
        %v2099 = vpop.f32.mrb[0].mxu0
        %v2100 = vadd.f32 0.0, %v2099
        %v2101 = vpop.f32.mrb[0].mxu0
        %2102 = vmatprep.mubr.f32.mxu0 0.0
        %2103 = vmatmul.mubr.f32.gmra.mrb[0].mxu0 %v1177
        %v2104 = vpop.f32.mrb[0].mxu0
        %v2105 = vadd.f32 0.0, %v2104
        %v2106 = vpop.f32.mrb[0].mxu0
        %2107 = vmatprep.mubr.f32.mxu0 0.0
        %2108 = vmatmul.mubr.f32.gmra.mrb[0].mxu0 %v1182
        %v2109 = vpop.f32.mrb[0].mxu0
        %v2110 = vadd.f32 0.0, %v2109
        %v2111 = vpop.f32.mrb[0].mxu0
        %2112 = vmatprep.mubr.f32.mxu0 0.0
        %2113 = vmatmul.mubr.f32.gmra.mrb[0].mxu0 %v1292
        %v2114 = vpop.f32.mrb[0].mxu0
        %v2115 = vadd.f32 0.0, %v2114
        %v2116 = vpop.f32.mrb[0].mxu0
        %2117 = vmatprep.mubr.f32.mxu0 0.0
        %2118 = vmatmul.mubr.f32.gmra.mrb[0].mxu0 %v1297
        %v2119 = vpop.f32.mrb[0].mxu0
        %v2120 = vadd.f32 0.0, %v2119
        %v2121 = vpop.f32.mrb[0].mxu0
        %2122 = vmatprep.mubr.f32.mxu0 0.0
        %2123 = vmatmul.mubr.f32.gmra.mrb[0].mxu0 %v1302
        %v2124 = vpop.f32.mrb[0].mxu0
        %v2125 = vadd.f32 0.0, %v2124
        %v2126 = vpop.f32.mrb[0].mxu0
        %2127 = vmatprep.mubr.f32.mxu0 0.0
        %2128 = vmatmul.mubr.f32.gmra.mrb[0].mxu0 %v1307
        %v2129 = vpop.f32.mrb[0].mxu0
        %v2130 = vadd.f32 0.0, %v2129
        %v2131 = vpop.f32.mrb[0].mxu0
        %2132 = vmatprep.mubr.f32.mxu0 0.0
        %2133 = vmatmul.mubr.f32.gmra.mrb[0].mxu0 %v1417
        %v2134 = vpop.f32.mrb[0].mxu0
        %v2135 = vadd.f32 0.0, %v2134
        %v2136 = vpop.f32.mrb[0].mxu0
        %2137 = vmatprep.mubr.f32.mxu0 0.0
        %2138 = vmatmul.mubr.f32.gmra.mrb[0].mxu0 %v1422
        %v2139 = vpop.f32.mrb[0].mxu0
        %v2140 = vadd.f32 0.0, %v2139
        %v2141 = vpop.f32.mrb[0].mxu0
        %2142 = vmatprep.mubr.f32.mxu0 0.0
        %2143 = vmatmul.mubr.f32.gmra.mrb[0].mxu0 %v1427
        %v2144 = vpop.f32.mrb[0].mxu0
        %v2145 = vadd.f32 0.0, %v2144
        %v2146 = vpop.f32.mrb[0].mxu0
        %2147 = vmatprep.mubr.f32.mxu0 0.0
        %2148 = vmatmul.mubr.f32.gmra.mrb[0].mxu0 %v1432
        %v2149 = vpop.f32.mrb[0].mxu0
        %v2150 = vadd.f32 0.0, %v2149
        %v2151 = vpop.f32.mrb[0].mxu0
        %2152 = vmatprep.mubr.f32.mxu0 0.0
        %2153 = vmatmul.mubr.f32.gmra.mrb[0].mxu0 %v1542
        %v2154 = vpop.f32.mrb[0].mxu0
        %v2155 = vadd.f32 0.0, %v2154
        %v2156 = vpop.f32.mrb[0].mxu0
        %2157 = vmatprep.mubr.f32.mxu0 0.0
        %2158 = vmatmul.mubr.f32.gmra.mrb[0].mxu0 %v1547
        %v2159 = vpop.f32.mrb[0].mxu0
        %v2160 = vadd.f32 0.0, %v2159
        %v2161 = vpop.f32.mrb[0].mxu0
        %2162 = vmatprep.mubr.f32.mxu0 0.0
        %2163 = vmatmul.mubr.f32.gmra.mrb[0].mxu0 %v1552
        %v2164 = vpop.f32.mrb[0].mxu0
        %v2165 = vadd.f32 0.0, %v2164
        %v2166 = vpop.f32.mrb[0].mxu0
        %2167 = vmatprep.mubr.f32.mxu0 0.0
        %2168 = vmatmul.mubr.f32.gmra.mrb[0].mxu0 %v1557
        %v2169 = vpop.f32.mrb[0].mxu0
        %v2170 = vadd.f32 0.0, %v2169
        %v2171 = vpop.f32.mrb[0].mxu0
        %2172 = vmatprep.mubr.f32.mxu0 0.0
        %2173 = vmatmul.mubr.f32.gmra.mrb[0].mxu0 %v1667
        %v2174 = vpop.f32.mrb[0].mxu0
        %v2175 = vadd.f32 0.0, %v2174
        %v2176 = vpop.f32.mrb[0].mxu0
        %2177 = vmatprep.mubr.f32.mxu0 0.0
        %2178 = vmatmul.mubr.f32.gmra.mrb[0].mxu0 %v1672
        %v2179 = vpop.f32.mrb[0].mxu0
        %v2180 = vadd.f32 0.0, %v2179
        %v2181 = vpop.f32.mrb[0].mxu0
        %2182 = vmatprep.mubr.f32.mxu0 0.0
        %2183 = vmatmul.mubr.f32.gmra.mrb[0].mxu0 %v1677
        %v2184 = vpop.f32.mrb[0].mxu0
        %v2185 = vadd.f32 0.0, %v2184
        %v2186 = vpop.f32.mrb[0].mxu0
        %2187 = vmatprep.mubr.f32.mxu0 0.0
        %2188 = vmatmul.mubr.f32.gmra.mrb[0].mxu0 %v1682
        %v2189 = vpop.f32.mrb[0].mxu0
        %v2190 = vadd.f32 0.0, %v2189
        %v2191 = vpop.f32.mrb[0].mxu0
        %2192 = vdwg.mxu0
        %vm2193 = vcmask 64512
        %v2195 = vsel %vm2193, %v506, 0
        %v2198 = vsel %vm2193, %v507, 0
        %v2201 = vsel %vm2193, %v508, 0
        %v2204 = vsel %vm2193, %v509, 0
        %2206 = vmatprep.subr.mxu0 0.0
        %2207 = vmatpush1.msra.mxu0 %v1817
        %2208 = vmatprep.subr.mxu0 0.0
        %2209 = vmatpush1.msra.mxu0 0.0
        %2210 = vmatprep.subr.mxu0 0.0
        %2211 = vmatpush1.msra.mxu0 0.0
        %2212 = vmatprep.subr.mxu0 0.0
        %2213 = vmatpush1.msra.mxu0 0.0
        %2214 = vmatprep.subr.mxu0 0.0
        %2215 = vmatpush1.msra.mxu0 0.0
        %2216 = vmatprep.subr.mxu0 0.0
        %2217 = vmatpush1.msra.mxu0 0.0
        %2218 = vmatprep.subr.mxu0 0.0
        %2219 = vmatpush1.msra.mxu0 0.0
        %2220 = vmatprep.subr.mxu0 0.0
        %2221 = vmatpush1.msra.mxu0 0.0
        %2222 = vmatprep.subr.mxu0 0.0
        %2223 = vmatpush1.msra.mxu0 0.0
        %2224 = vmatprep.subr.mxu0 0.0
        %2225 = vmatpush1.msra.mxu0 0.0
        %2226 = vmatprep.subr.mxu0 0.0
        %2227 = vmatpush1.msra.mxu0 0.0
        %2228 = vmatprep.subr.mxu0 0.0
        %2229 = vmatpush1.msra.mxu0 0.0
        %2230 = vmatprep.subr.mxu0 0.0
        %2231 = vmatpush1.msra.mxu0 0.0
        %2232 = vmatprep.subr.mxu0 0.0
        %2233 = vmatpush1.msra.mxu0 0.0
        %2234 = vmatprep.subr.mxu0 0.0
        %2235 = vmatpush1.msra.mxu0 0.0
        %2236 = vmatprep.subr.mxu0 0.0
        %2237 = vmatpush1.msra.mxu0 0.0
        %2238 = vmatprep.subr.mxu0 0.0
        %2239 = vmatpush1.msra.mxu0 0.0
        %2240 = vmatprep.subr.mxu0 0.0
        %2241 = vmatpush1.msra.mxu0 0.0
        %2242 = vmatprep.subr.mxu0 0.0
        %2243 = vmatpush1.msra.mxu0 0.0
        %2244 = vmatprep.subr.mxu0 0.0
        %2245 = vmatpush1.msra.mxu0 0.0
        %2246 = vmatprep.subr.mxu0 0.0
        %2247 = vmatpush1.msra.mxu0 0.0
        %2248 = vmatprep.subr.mxu0 0.0
        %2249 = vmatpush1.msra.mxu0 0.0
        %2250 = vmatprep.subr.mxu0 0.0
        %2251 = vmatpush1.msra.mxu0 0.0
        %2252 = vmatprep.subr.mxu0 0.0
        %2253 = vmatpush1.msra.mxu0 0.0
        %2254 = vmatprep.subr.mxu0 0.0
        %2255 = vmatpush1.msra.mxu0 0.0
        %2256 = vmatprep.subr.mxu0 0.0
        %2257 = vmatpush1.msra.mxu0 0.0
        %2258 = vmatprep.subr.mxu0 0.0
        %2259 = vmatpush1.msra.mxu0 0.0
        %2260 = vmatprep.subr.mxu0 0.0
        %2261 = vmatpush1.msra.mxu0 0.0
        %2262 = vmatprep.subr.mxu0 0.0
        %2263 = vmatpush1.msra.mxu0 0.0
        %2264 = vmatprep.subr.mxu0 0.0
        %2265 = vmatpush1.msra.mxu0 0.0
        %2266 = vmatprep.subr.mxu0 0.0
        %2267 = vmatpush1.msra.mxu0 0.0
        %2268 = vmatprep.subr.mxu0 0.0
        %2269 = vmatpush1.msra.mxu0 0.0
        %2270 = vmatprep.mubr.f32.mxu0 0.0
        %2271 = vmatmul.mubr.f32.gmra.mrb[0].mxu0 %v2195
        %v2272 = vpop.f32.mrb[0].mxu0
        %v2273 = vadd.f32 0.0, %v2272
        %v2274 = vpop.f32.mrb[0].mxu0
        %2275 = vmatprep.mubr.f32.mxu0 0.0
        %2276 = vmatmul.mubr.f32.gmra.mrb[0].mxu0 %v2198
        %v2277 = vpop.f32.mrb[0].mxu0
        %v2278 = vadd.f32 0.0, %v2277
        %v2279 = vpop.f32.mrb[0].mxu0
        %2280 = vmatprep.mubr.f32.mxu0 0.0
        %2281 = vmatmul.mubr.f32.gmra.mrb[0].mxu0 %v2201
        %v2282 = vpop.f32.mrb[0].mxu0
        %v2283 = vadd.f32 0.0, %v2282
        %v2284 = vpop.f32.mrb[0].mxu0
        %2285 = vmatprep.mubr.f32.mxu0 0.0
        %2286 = vmatmul.mubr.f32.gmra.mrb[0].mxu0 %v2204
        %v2287 = vpop.f32.mrb[0].mxu0
        %v2288 = vadd.f32 0.0, %v2287
        %v2289 = vpop.f32.mrb[0].mxu0
        %2290 = vdwg.mxu0
        %2291 = vmatprep.subr.mxu0 0.0
        %2292 = vmatpush1.msra.mxu0 %v1823
        %2293 = vmatprep.subr.mxu0 0.0
        %2294 = vmatpush1.msra.mxu0 0.0
        %2295 = vmatprep.subr.mxu0 0.0
        %2296 = vmatpush1.msra.mxu0 0.0
        %2297 = vmatprep.subr.mxu0 0.0
        %2298 = vmatpush1.msra.mxu0 0.0
        %2299 = vmatprep.subr.mxu0 0.0
        %2300 = vmatpush1.msra.mxu0 0.0
        %2301 = vmatprep.subr.mxu0 0.0
        %2302 = vmatpush1.msra.mxu0 0.0
        %2303 = vmatprep.subr.mxu0 0.0
        %2304 = vmatpush1.msra.mxu0 0.0
        %2305 = vmatprep.subr.mxu0 0.0
        %2306 = vmatpush1.msra.mxu0 0.0
        %2307 = vmatprep.subr.mxu0 0.0
        %2308 = vmatpush1.msra.mxu0 0.0
        %2309 = vmatprep.subr.mxu0 0.0
        %2310 = vmatpush1.msra.mxu0 0.0
        %2311 = vmatprep.subr.mxu0 0.0
        %2312 = vmatpush1.msra.mxu0 0.0
        %2313 = vmatprep.subr.mxu0 0.0
        %2314 = vmatpush1.msra.mxu0 0.0
        %2315 = vmatprep.subr.mxu0 0.0
        %2316 = vmatpush1.msra.mxu0 0.0
        %2317 = vmatprep.subr.mxu0 0.0
        %2318 = vmatpush1.msra.mxu0 0.0
        %2319 = vmatprep.subr.mxu0 0.0
        %2320 = vmatpush1.msra.mxu0 0.0
        %2321 = vmatprep.subr.mxu0 0.0
        %2322 = vmatpush1.msra.mxu0 0.0
        %2323 = vmatprep.subr.mxu0 0.0
        %2324 = vmatpush1.msra.mxu0 0.0
        %2325 = vmatprep.subr.mxu0 0.0
        %2326 = vmatpush1.msra.mxu0 0.0
        %2327 = vmatprep.subr.mxu0 0.0
        %2328 = vmatpush1.msra.mxu0 0.0
        %2329 = vmatprep.subr.mxu0 0.0
        %2330 = vmatpush1.msra.mxu0 0.0
        %2331 = vmatprep.subr.mxu0 0.0
        %2332 = vmatpush1.msra.mxu0 0.0
        %2333 = vmatprep.subr.mxu0 0.0
        %2334 = vmatpush1.msra.mxu0 0.0
        %2335 = vmatprep.subr.mxu0 0.0
        %2336 = vmatpush1.msra.mxu0 0.0
        %2337 = vmatprep.subr.mxu0 0.0
        %2338 = vmatpush1.msra.mxu0 0.0
        %2339 = vmatprep.subr.mxu0 0.0
        %2340 = vmatpush1.msra.mxu0 0.0
        %2341 = vmatprep.subr.mxu0 0.0
        %2342 = vmatpush1.msra.mxu0 0.0
        %2343 = vmatprep.subr.mxu0 0.0
        %2344 = vmatpush1.msra.mxu0 0.0
        %2345 = vmatprep.subr.mxu0 0.0
        %2346 = vmatpush1.msra.mxu0 0.0
        %2347 = vmatprep.subr.mxu0 0.0
        %2348 = vmatpush1.msra.mxu0 0.0
        %2349 = vmatprep.subr.mxu0 0.0
        %2350 = vmatpush1.msra.mxu0 0.0
        %2351 = vmatprep.subr.mxu0 0.0
        %2352 = vmatpush1.msra.mxu0 0.0
        %2353 = vmatprep.subr.mxu0 0.0
        %2354 = vmatpush1.msra.mxu0 0.0
        %2355 = vmatprep.mubr.f32.mxu0 0.0
        %2356 = vmatmul.mubr.f32.gmra.mrb[0].mxu0 %v2195
        %v2357 = vpop.f32.mrb[0].mxu0
        %v2358 = vadd.f32 0.0, %v2357
        %v2359 = vpop.f32.mrb[0].mxu0
        %2360 = vmatprep.mubr.f32.mxu0 0.0
        %2361 = vmatmul.mubr.f32.gmra.mrb[0].mxu0 %v2198
        %v2362 = vpop.f32.mrb[0].mxu0
        %v2363 = vadd.f32 0.0, %v2362
        %v2364 = vpop.f32.mrb[0].mxu0
        %2365 = vmatprep.mubr.f32.mxu0 0.0
        %2366 = vmatmul.mubr.f32.gmra.mrb[0].mxu0 %v2201
        %v2367 = vpop.f32.mrb[0].mxu0
        %v2368 = vadd.f32 0.0, %v2367
        %v2369 = vpop.f32.mrb[0].mxu0
        %2370 = vmatprep.mubr.f32.mxu0 0.0
        %2371 = vmatmul.mubr.f32.gmra.mrb[0].mxu0 %v2204
        %v2372 = vpop.f32.mrb[0].mxu0
        %v2373 = vadd.f32 0.0, %v2372
        %v2374 = vpop.f32.mrb[0].mxu0
        %2375 = vdwg.mxu0
        %2376 = vmatprep.subr.mxu0 0.0
        %2377 = vmatpush1.msra.mxu0 %v1829
        %2378 = vmatprep.subr.mxu0 0.0
        %2379 = vmatpush1.msra.mxu0 0.0
        %2380 = vmatprep.subr.mxu0 0.0
        %2381 = vmatpush1.msra.mxu0 0.0
        %2382 = vmatprep.subr.mxu0 0.0
        %2383 = vmatpush1.msra.mxu0 0.0
        %2384 = vmatprep.subr.mxu0 0.0
        %2385 = vmatpush1.msra.mxu0 0.0
        %2386 = vmatprep.subr.mxu0 0.0
        %2387 = vmatpush1.msra.mxu0 0.0
        %2388 = vmatprep.subr.mxu0 0.0
        %2389 = vmatpush1.msra.mxu0 0.0
        %2390 = vmatprep.subr.mxu0 0.0
        %2391 = vmatpush1.msra.mxu0 0.0
        %2392 = vmatprep.subr.mxu0 0.0
        %2393 = vmatpush1.msra.mxu0 0.0
        %2394 = vmatprep.subr.mxu0 0.0
        %2395 = vmatpush1.msra.mxu0 0.0
        %2396 = vmatprep.subr.mxu0 0.0
        %2397 = vmatpush1.msra.mxu0 0.0
        %2398 = vmatprep.subr.mxu0 0.0
        %2399 = vmatpush1.msra.mxu0 0.0
        %2400 = vmatprep.subr.mxu0 0.0
        %2401 = vmatpush1.msra.mxu0 0.0
        %2402 = vmatprep.subr.mxu0 0.0
        %2403 = vmatpush1.msra.mxu0 0.0
        %2404 = vmatprep.subr.mxu0 0.0
        %2405 = vmatpush1.msra.mxu0 0.0
        %2406 = vmatprep.subr.mxu0 0.0
        %2407 = vmatpush1.msra.mxu0 0.0
        %2408 = vmatprep.subr.mxu0 0.0
        %2409 = vmatpush1.msra.mxu0 0.0
        %2410 = vmatprep.subr.mxu0 0.0
        %2411 = vmatpush1.msra.mxu0 0.0
        %2412 = vmatprep.subr.mxu0 0.0
        %2413 = vmatpush1.msra.mxu0 0.0
        %2414 = vmatprep.subr.mxu0 0.0
        %2415 = vmatpush1.msra.mxu0 0.0
        %2416 = vmatprep.subr.mxu0 0.0
        %2417 = vmatpush1.msra.mxu0 0.0
        %2418 = vmatprep.subr.mxu0 0.0
        %2419 = vmatpush1.msra.mxu0 0.0
        %2420 = vmatprep.subr.mxu0 0.0
        %2421 = vmatpush1.msra.mxu0 0.0
        %2422 = vmatprep.subr.mxu0 0.0
        %2423 = vmatpush1.msra.mxu0 0.0
        %2424 = vmatprep.subr.mxu0 0.0
        %2425 = vmatpush1.msra.mxu0 0.0
        %2426 = vmatprep.subr.mxu0 0.0
        %2427 = vmatpush1.msra.mxu0 0.0
        %2428 = vmatprep.subr.mxu0 0.0
        %2429 = vmatpush1.msra.mxu0 0.0
        %2430 = vmatprep.subr.mxu0 0.0
        %2431 = vmatpush1.msra.mxu0 0.0
        %2432 = vmatprep.subr.mxu0 0.0
        %2433 = vmatpush1.msra.mxu0 0.0
        %2434 = vmatprep.subr.mxu0 0.0
        %2435 = vmatpush1.msra.mxu0 0.0
        %2436 = vmatprep.subr.mxu0 0.0
        %2437 = vmatpush1.msra.mxu0 0.0
        %2438 = vmatprep.subr.mxu0 0.0
        %2439 = vmatpush1.msra.mxu0 0.0
        %2440 = vmatprep.mubr.f32.mxu0 0.0
        %2441 = vmatmul.mubr.f32.gmra.mrb[0].mxu0 %v2195
        %v2442 = vpop.f32.mrb[0].mxu0
        %v2443 = vadd.f32 0.0, %v2442
        %v2444 = vpop.f32.mrb[0].mxu0
        %2445 = vmatprep.mubr.f32.mxu0 0.0
        %2446 = vmatmul.mubr.f32.gmra.mrb[0].mxu0 %v2198
        %v2447 = vpop.f32.mrb[0].mxu0
        %v2448 = vadd.f32 0.0, %v2447
        %v2449 = vpop.f32.mrb[0].mxu0
        %2450 = vmatprep.mubr.f32.mxu0 0.0
        %2451 = vmatmul.mubr.f32.gmra.mrb[0].mxu0 %v2201
        %v2452 = vpop.f32.mrb[0].mxu0
        %v2453 = vadd.f32 0.0, %v2452
        %v2454 = vpop.f32.mrb[0].mxu0
        %2455 = vmatprep.mubr.f32.mxu0 0.0
        %2456 = vmatmul.mubr.f32.gmra.mrb[0].mxu0 %v2204
        %v2457 = vpop.f32.mrb[0].mxu0
        %v2458 = vadd.f32 0.0, %v2457
        %v2459 = vpop.f32.mrb[0].mxu0
        %2460 = vdwg.mxu0
        %2461 = vmatprep.subr.mxu0 0.0
        %2462 = vmatpush1.msra.mxu0 %v1835
        %2463 = vmatprep.subr.mxu0 0.0
        %2464 = vmatpush1.msra.mxu0 0.0
        %2465 = vmatprep.subr.mxu0 0.0
        %2466 = vmatpush1.msra.mxu0 0.0
        %2467 = vmatprep.subr.mxu0 0.0
        %2468 = vmatpush1.msra.mxu0 0.0
        %2469 = vmatprep.subr.mxu0 0.0
        %2470 = vmatpush1.msra.mxu0 0.0
        %2471 = vmatprep.subr.mxu0 0.0
        %2472 = vmatpush1.msra.mxu0 0.0
        %2473 = vmatprep.subr.mxu0 0.0
        %2474 = vmatpush1.msra.mxu0 0.0
        %2475 = vmatprep.subr.mxu0 0.0
        %2476 = vmatpush1.msra.mxu0 0.0
        %2477 = vmatprep.subr.mxu0 0.0
        %2478 = vmatpush1.msra.mxu0 0.0
        %2479 = vmatprep.subr.mxu0 0.0
        %2480 = vmatpush1.msra.mxu0 0.0
        %2481 = vmatprep.subr.mxu0 0.0
        %2482 = vmatpush1.msra.mxu0 0.0
        %2483 = vmatprep.subr.mxu0 0.0
        %2484 = vmatpush1.msra.mxu0 0.0
        %2485 = vmatprep.subr.mxu0 0.0
        %2486 = vmatpush1.msra.mxu0 0.0
        %2487 = vmatprep.subr.mxu0 0.0
        %2488 = vmatpush1.msra.mxu0 0.0
        %2489 = vmatprep.subr.mxu0 0.0
        %2490 = vmatpush1.msra.mxu0 0.0
        %2491 = vmatprep.subr.mxu0 0.0
        %2492 = vmatpush1.msra.mxu0 0.0
        %2493 = vmatprep.subr.mxu0 0.0
        %2494 = vmatpush1.msra.mxu0 0.0
        %2495 = vmatprep.subr.mxu0 0.0
        %2496 = vmatpush1.msra.mxu0 0.0
        %2497 = vmatprep.subr.mxu0 0.0
        %2498 = vmatpush1.msra.mxu0 0.0
        %2499 = vmatprep.subr.mxu0 0.0
        %2500 = vmatpush1.msra.mxu0 0.0
        %2501 = vmatprep.subr.mxu0 0.0
        %2502 = vmatpush1.msra.mxu0 0.0
        %2503 = vmatprep.subr.mxu0 0.0
        %2504 = vmatpush1.msra.mxu0 0.0
        %2505 = vmatprep.subr.mxu0 0.0
        %2506 = vmatpush1.msra.mxu0 0.0
        %2507 = vmatprep.subr.mxu0 0.0
        %2508 = vmatpush1.msra.mxu0 0.0
        %2509 = vmatprep.subr.mxu0 0.0
        %2510 = vmatpush1.msra.mxu0 0.0
        %2511 = vmatprep.subr.mxu0 0.0
        %2512 = vmatpush1.msra.mxu0 0.0
        %2513 = vmatprep.subr.mxu0 0.0
        %2514 = vmatpush1.msra.mxu0 0.0
        %2515 = vmatprep.subr.mxu0 0.0
        %2516 = vmatpush1.msra.mxu0 0.0
        %2517 = vmatprep.subr.mxu0 0.0
        %2518 = vmatpush1.msra.mxu0 0.0
        %2519 = vmatprep.subr.mxu0 0.0
        %2520 = vmatpush1.msra.mxu0 0.0
        %2521 = vmatprep.subr.mxu0 0.0
        %2522 = vmatpush1.msra.mxu0 0.0
        %2523 = vmatprep.subr.mxu0 0.0
        %2524 = vmatpush1.msra.mxu0 0.0
        %2525 = vmatprep.mubr.f32.mxu0 0.0
        %2526 = vmatmul.mubr.f32.gmra.mrb[0].mxu0 %v2195
        %v2527 = vpop.f32.mrb[0].mxu0
        %v2528 = vadd.f32 0.0, %v2527
        %v2529 = vpop.f32.mrb[0].mxu0
        %2530 = vmatprep.mubr.f32.mxu0 0.0
        %2531 = vmatmul.mubr.f32.gmra.mrb[0].mxu0 %v2198
        %v2532 = vpop.f32.mrb[0].mxu0
        %v2533 = vadd.f32 0.0, %v2532
        %v2534 = vpop.f32.mrb[0].mxu0
        %2535 = vmatprep.mubr.f32.mxu0 0.0
        %2536 = vmatmul.mubr.f32.gmra.mrb[0].mxu0 %v2201
        %v2537 = vpop.f32.mrb[0].mxu0
        %v2538 = vadd.f32 0.0, %v2537
        %v2539 = vpop.f32.mrb[0].mxu0
        %2540 = vmatprep.mubr.f32.mxu0 0.0
        %2541 = vmatmul.mubr.f32.gmra.mrb[0].mxu0 %v2204
        %v2542 = vpop.f32.mrb[0].mxu0
        %v2543 = vadd.f32 0.0, %v2542
        %v2544 = vpop.f32.mrb[0].mxu0
        %2545 = vdwg.mxu0
        %2546 = vmatprep.subr.mxu0 0.0
        %2547 = vmatpush1.msra.mxu0 %v1841
        %2548 = vmatprep.subr.mxu0 0.0
        %2549 = vmatpush1.msra.mxu0 0.0
        %2550 = vmatprep.subr.mxu0 0.0
        %2551 = vmatpush1.msra.mxu0 0.0
        %2552 = vmatprep.subr.mxu0 0.0
        %2553 = vmatpush1.msra.mxu0 0.0
        %2554 = vmatprep.subr.mxu0 0.0
        %2555 = vmatpush1.msra.mxu0 0.0
        %2556 = vmatprep.subr.mxu0 0.0
        %2557 = vmatpush1.msra.mxu0 0.0
        %2558 = vmatprep.subr.mxu0 0.0
        %2559 = vmatpush1.msra.mxu0 0.0
        %2560 = vmatprep.subr.mxu0 0.0
        %2561 = vmatpush1.msra.mxu0 0.0
        %2562 = vmatprep.subr.mxu0 0.0
        %2563 = vmatpush1.msra.mxu0 0.0
        %2564 = vmatprep.subr.mxu0 0.0
        %2565 = vmatpush1.msra.mxu0 0.0
        %2566 = vmatprep.subr.mxu0 0.0
        %2567 = vmatpush1.msra.mxu0 0.0
        %2568 = vmatprep.subr.mxu0 0.0
        %2569 = vmatpush1.msra.mxu0 0.0
        %2570 = vmatprep.subr.mxu0 0.0
        %2571 = vmatpush1.msra.mxu0 0.0
        %2572 = vmatprep.subr.mxu0 0.0
        %2573 = vmatpush1.msra.mxu0 0.0
        %2574 = vmatprep.subr.mxu0 0.0
        %2575 = vmatpush1.msra.mxu0 0.0
        %2576 = vmatprep.subr.mxu0 0.0
        %2577 = vmatpush1.msra.mxu0 0.0
        %2578 = vmatprep.subr.mxu0 0.0
        %2579 = vmatpush1.msra.mxu0 0.0
        %2580 = vmatprep.subr.mxu0 0.0
        %2581 = vmatpush1.msra.mxu0 0.0
        %2582 = vmatprep.subr.mxu0 0.0
        %2583 = vmatpush1.msra.mxu0 0.0
        %2584 = vmatprep.subr.mxu0 0.0
        %2585 = vmatpush1.msra.mxu0 0.0
        %2586 = vmatprep.subr.mxu0 0.0
        %2587 = vmatpush1.msra.mxu0 0.0
        %2588 = vmatprep.subr.mxu0 0.0
        %2589 = vmatpush1.msra.mxu0 0.0
        %2590 = vmatprep.subr.mxu0 0.0
        %2591 = vmatpush1.msra.mxu0 0.0
        %2592 = vmatprep.subr.mxu0 0.0
        %2593 = vmatpush1.msra.mxu0 0.0
        %2594 = vmatprep.subr.mxu0 0.0
        %2595 = vmatpush1.msra.mxu0 0.0
        %2596 = vmatprep.subr.mxu0 0.0
        %2597 = vmatpush1.msra.mxu0 0.0
        %2598 = vmatprep.subr.mxu0 0.0
        %2599 = vmatpush1.msra.mxu0 0.0
        %2600 = vmatprep.subr.mxu0 0.0
        %2601 = vmatpush1.msra.mxu0 0.0
        %2602 = vmatprep.subr.mxu0 0.0
        %2603 = vmatpush1.msra.mxu0 0.0
        %2604 = vmatprep.subr.mxu0 0.0
        %2605 = vmatpush1.msra.mxu0 0.0
        %2606 = vmatprep.subr.mxu0 0.0
        %2607 = vmatpush1.msra.mxu0 0.0
        %2608 = vmatprep.subr.mxu0 0.0
        %2609 = vmatpush1.msra.mxu0 0.0
        %2610 = vmatprep.mubr.f32.mxu0 0.0
        %2611 = vmatmul.mubr.f32.gmra.mrb[0].mxu0 %v2195
        %v2612 = vpop.f32.mrb[0].mxu0
        %v2613 = vadd.f32 0.0, %v2612
        %v2614 = vpop.f32.mrb[0].mxu0
        %2615 = vmatprep.mubr.f32.mxu0 0.0
        %2616 = vmatmul.mubr.f32.gmra.mrb[0].mxu0 %v2198
        %v2617 = vpop.f32.mrb[0].mxu0
        %v2618 = vadd.f32 0.0, %v2617
        %v2619 = vpop.f32.mrb[0].mxu0
        %2620 = vmatprep.mubr.f32.mxu0 0.0
        %2621 = vmatmul.mubr.f32.gmra.mrb[0].mxu0 %v2201
        %v2622 = vpop.f32.mrb[0].mxu0
        %v2623 = vadd.f32 0.0, %v2622
        %v2624 = vpop.f32.mrb[0].mxu0
        %2625 = vmatprep.mubr.f32.mxu0 0.0
        %2626 = vmatmul.mubr.f32.gmra.mrb[0].mxu0 %v2204
        %v2627 = vpop.f32.mrb[0].mxu0
        %v2628 = vadd.f32 0.0, %v2627
        %v2629 = vpop.f32.mrb[0].mxu0
        %2630 = vdwg.mxu0
        %2631 = vmatprep.subr.mxu0 0.0
        %2632 = vmatpush1.msra.mxu0 %v1847
        %2633 = vmatprep.subr.mxu0 0.0
        %2634 = vmatpush1.msra.mxu0 0.0
        %2635 = vmatprep.subr.mxu0 0.0
        %2636 = vmatpush1.msra.mxu0 0.0
        %2637 = vmatprep.subr.mxu0 0.0
        %2638 = vmatpush1.msra.mxu0 0.0
        %2639 = vmatprep.subr.mxu0 0.0
        %2640 = vmatpush1.msra.mxu0 0.0
        %2641 = vmatprep.subr.mxu0 0.0
        %2642 = vmatpush1.msra.mxu0 0.0
        %2643 = vmatprep.subr.mxu0 0.0
        %2644 = vmatpush1.msra.mxu0 0.0
        %2645 = vmatprep.subr.mxu0 0.0
        %2646 = vmatpush1.msra.mxu0 0.0
        %2647 = vmatprep.subr.mxu0 0.0
        %2648 = vmatpush1.msra.mxu0 0.0
        %2649 = vmatprep.subr.mxu0 0.0
        %2650 = vmatpush1.msra.mxu0 0.0
        %2651 = vmatprep.subr.mxu0 0.0
        %2652 = vmatpush1.msra.mxu0 0.0
        %2653 = vmatprep.subr.mxu0 0.0
        %2654 = vmatpush1.msra.mxu0 0.0
        %2655 = vmatprep.subr.mxu0 0.0
        %2656 = vmatpush1.msra.mxu0 0.0
        %2657 = vmatprep.subr.mxu0 0.0
        %2658 = vmatpush1.msra.mxu0 0.0
        %2659 = vmatprep.subr.mxu0 0.0
        %2660 = vmatpush1.msra.mxu0 0.0
        %2661 = vmatprep.subr.mxu0 0.0
        %2662 = vmatpush1.msra.mxu0 0.0
        %2663 = vmatprep.subr.mxu0 0.0
        %2664 = vmatpush1.msra.mxu0 0.0
        %2665 = vmatprep.subr.mxu0 0.0
        %2666 = vmatpush1.msra.mxu0 0.0
        %2667 = vmatprep.subr.mxu0 0.0
        %2668 = vmatpush1.msra.mxu0 0.0
        %2669 = vmatprep.subr.mxu0 0.0
        %2670 = vmatpush1.msra.mxu0 0.0
        %2671 = vmatprep.subr.mxu0 0.0
        %2672 = vmatpush1.msra.mxu0 0.0
        %2673 = vmatprep.subr.mxu0 0.0
        %2674 = vmatpush1.msra.mxu0 0.0
        %2675 = vmatprep.subr.mxu0 0.0
        %2676 = vmatpush1.msra.mxu0 0.0
        %2677 = vmatprep.subr.mxu0 0.0
        %2678 = vmatpush1.msra.mxu0 0.0
        %2679 = vmatprep.subr.mxu0 0.0
        %2680 = vmatpush1.msra.mxu0 0.0
        %2681 = vmatprep.subr.mxu0 0.0
        %2682 = vmatpush1.msra.mxu0 0.0
        %2683 = vmatprep.subr.mxu0 0.0
        %2684 = vmatpush1.msra.mxu0 0.0
        %2685 = vmatprep.subr.mxu0 0.0
        %2686 = vmatpush1.msra.mxu0 0.0
        %2687 = vmatprep.subr.mxu0 0.0
        %2688 = vmatpush1.msra.mxu0 0.0
        %2689 = vmatprep.subr.mxu0 0.0
        %2690 = vmatpush1.msra.mxu0 0.0
        %2691 = vmatprep.subr.mxu0 0.0
        %2692 = vmatpush1.msra.mxu0 0.0
        %2693 = vmatprep.subr.mxu0 0.0
        %2694 = vmatpush1.msra.mxu0 0.0
        %2695 = vmatprep.mubr.f32.mxu0 0.0
        %2696 = vmatmul.mubr.f32.gmra.mrb[0].mxu0 %v2195
        %v2697 = vpop.f32.mrb[0].mxu0
        %v2698 = vadd.f32 0.0, %v2697
        %v2699 = vpop.f32.mrb[0].mxu0
        %2700 = vmatprep.mubr.f32.mxu0 0.0
        %2701 = vmatmul.mubr.f32.gmra.mrb[0].mxu0 %v2198
        %v2702 = vpop.f32.mrb[0].mxu0
        %v2703 = vadd.f32 0.0, %v2702
        %v2704 = vpop.f32.mrb[0].mxu0
        %2705 = vmatprep.mubr.f32.mxu0 0.0
        %2706 = vmatmul.mubr.f32.gmra.mrb[0].mxu0 %v2201
        %v2707 = vpop.f32.mrb[0].mxu0
        %v2708 = vadd.f32 0.0, %v2707
        %v2709 = vpop.f32.mrb[0].mxu0
        %2710 = vmatprep.mubr.f32.mxu0 0.0
        %2711 = vmatmul.mubr.f32.gmra.mrb[0].mxu0 %v2204
        %v2712 = vpop.f32.mrb[0].mxu0
        %v2713 = vadd.f32 0.0, %v2712
        %v2714 = vpop.f32.mrb[0].mxu0
        %2715 = vdwg.mxu0
        %2716 = vmatprep.subr.mxu0 0.0
        %2717 = vmatpush1.msra.mxu0 %v1853
        %2718 = vmatprep.subr.mxu0 0.0
        %2719 = vmatpush1.msra.mxu0 0.0
        %2720 = vmatprep.subr.mxu0 0.0
        %2721 = vmatpush1.msra.mxu0 0.0
        %2722 = vmatprep.subr.mxu0 0.0
        %2723 = vmatpush1.msra.mxu0 0.0
        %2724 = vmatprep.subr.mxu0 0.0
        %2725 = vmatpush1.msra.mxu0 0.0
        %2726 = vmatprep.subr.mxu0 0.0
        %2727 = vmatpush1.msra.mxu0 0.0
        %2728 = vmatprep.subr.mxu0 0.0
        %2729 = vmatpush1.msra.mxu0 0.0
        %2730 = vmatprep.subr.mxu0 0.0
        %2731 = vmatpush1.msra.mxu0 0.0
        %2732 = vmatprep.subr.mxu0 0.0
        %2733 = vmatpush1.msra.mxu0 0.0
        %2734 = vmatprep.subr.mxu0 0.0
        %2735 = vmatpush1.msra.mxu0 0.0
        %2736 = vmatprep.subr.mxu0 0.0
        %2737 = vmatpush1.msra.mxu0 0.0
        %2738 = vmatprep.subr.mxu0 0.0
        %2739 = vmatpush1.msra.mxu0 0.0
        %2740 = vmatprep.subr.mxu0 0.0
        %2741 = vmatpush1.msra.mxu0 0.0
        %2742 = vmatprep.subr.mxu0 0.0
        %2743 = vmatpush1.msra.mxu0 0.0
        %2744 = vmatprep.subr.mxu0 0.0
        %2745 = vmatpush1.msra.mxu0 0.0
        %2746 = vmatprep.subr.mxu0 0.0
        %2747 = vmatpush1.msra.mxu0 0.0
        %2748 = vmatprep.subr.mxu0 0.0
        %2749 = vmatpush1.msra.mxu0 0.0
        %2750 = vmatprep.subr.mxu0 0.0
        %2751 = vmatpush1.msra.mxu0 0.0
        %2752 = vmatprep.subr.mxu0 0.0
        %2753 = vmatpush1.msra.mxu0 0.0
        %2754 = vmatprep.subr.mxu0 0.0
        %2755 = vmatpush1.msra.mxu0 0.0
        %2756 = vmatprep.subr.mxu0 0.0
        %2757 = vmatpush1.msra.mxu0 0.0
        %2758 = vmatprep.subr.mxu0 0.0
        %2759 = vmatpush1.msra.mxu0 0.0
        %2760 = vmatprep.subr.mxu0 0.0
        %2761 = vmatpush1.msra.mxu0 0.0
        %2762 = vmatprep.subr.mxu0 0.0
        %2763 = vmatpush1.msra.mxu0 0.0
        %2764 = vmatprep.subr.mxu0 0.0
        %2765 = vmatpush1.msra.mxu0 0.0
        %2766 = vmatprep.subr.mxu0 0.0
        %2767 = vmatpush1.msra.mxu0 0.0
        %2768 = vmatprep.subr.mxu0 0.0
        %2769 = vmatpush1.msra.mxu0 0.0
        %2770 = vmatprep.subr.mxu0 0.0
        %2771 = vmatpush1.msra.mxu0 0.0
        %2772 = vmatprep.subr.mxu0 0.0
        %2773 = vmatpush1.msra.mxu0 0.0
        %2774 = vmatprep.subr.mxu0 0.0
        %2775 = vmatpush1.msra.mxu0 0.0
        %2776 = vmatprep.subr.mxu0 0.0
        %2777 = vmatpush1.msra.mxu0 0.0
        %2778 = vmatprep.subr.mxu0 0.0
        %2779 = vmatpush1.msra.mxu0 0.0
        %2780 = vmatprep.mubr.f32.mxu0 0.0
        %2781 = vmatmul.mubr.f32.gmra.mrb[0].mxu0 %v2195
        %v2782 = vpop.f32.mrb[0].mxu0
        %v2783 = vadd.f32 0.0, %v2782
        %v2784 = vpop.f32.mrb[0].mxu0
        %2785 = vmatprep.mubr.f32.mxu0 0.0
        %2786 = vmatmul.mubr.f32.gmra.mrb[0].mxu0 %v2198
        %v2787 = vpop.f32.mrb[0].mxu0
        %v2788 = vadd.f32 0.0, %v2787
        %v2789 = vpop.f32.mrb[0].mxu0
        %2790 = vmatprep.mubr.f32.mxu0 0.0
        %2791 = vmatmul.mubr.f32.gmra.mrb[0].mxu0 %v2201
        %v2792 = vpop.f32.mrb[0].mxu0
        %v2793 = vadd.f32 0.0, %v2792
        %v2794 = vpop.f32.mrb[0].mxu0
        %2795 = vmatprep.mubr.f32.mxu0 0.0
        %2796 = vmatmul.mubr.f32.gmra.mrb[0].mxu0 %v2204
        %v2797 = vpop.f32.mrb[0].mxu0
        %v2798 = vadd.f32 0.0, %v2797
        %v2799 = vpop.f32.mrb[0].mxu0
        %2800 = vdwg.mxu0
        %2801 = vmatprep.subr.mxu0 0.0
        %2802 = vmatpush1.msra.mxu0 %v1859
        %2803 = vmatprep.subr.mxu0 0.0
        %2804 = vmatpush1.msra.mxu0 0.0
        %2805 = vmatprep.subr.mxu0 0.0
        %2806 = vmatpush1.msra.mxu0 0.0
        %2807 = vmatprep.subr.mxu0 0.0
        %2808 = vmatpush1.msra.mxu0 0.0
        %2809 = vmatprep.subr.mxu0 0.0
        %2810 = vmatpush1.msra.mxu0 0.0
        %2811 = vmatprep.subr.mxu0 0.0
        %2812 = vmatpush1.msra.mxu0 0.0
        %2813 = vmatprep.subr.mxu0 0.0
        %2814 = vmatpush1.msra.mxu0 0.0
        %2815 = vmatprep.subr.mxu0 0.0
        %2816 = vmatpush1.msra.mxu0 0.0
        %2817 = vmatprep.subr.mxu0 0.0
        %2818 = vmatpush1.msra.mxu0 0.0
        %2819 = vmatprep.subr.mxu0 0.0
        %2820 = vmatpush1.msra.mxu0 0.0
        %2821 = vmatprep.subr.mxu0 0.0
        %2822 = vmatpush1.msra.mxu0 0.0
        %2823 = vmatprep.subr.mxu0 0.0
        %2824 = vmatpush1.msra.mxu0 0.0
        %2825 = vmatprep.subr.mxu0 0.0
        %2826 = vmatpush1.msra.mxu0 0.0
        %2827 = vmatprep.subr.mxu0 0.0
        %2828 = vmatpush1.msra.mxu0 0.0
        %2829 = vmatprep.subr.mxu0 0.0
        %2830 = vmatpush1.msra.mxu0 0.0
        %2831 = vmatprep.subr.mxu0 0.0
        %2832 = vmatpush1.msra.mxu0 0.0
        %2833 = vmatprep.subr.mxu0 0.0
        %2834 = vmatpush1.msra.mxu0 0.0
        %2835 = vmatprep.subr.mxu0 0.0
        %2836 = vmatpush1.msra.mxu0 0.0
        %2837 = vmatprep.subr.mxu0 0.0
        %2838 = vmatpush1.msra.mxu0 0.0
        %2839 = vmatprep.subr.mxu0 0.0
        %2840 = vmatpush1.msra.mxu0 0.0
        %2841 = vmatprep.subr.mxu0 0.0
        %2842 = vmatpush1.msra.mxu0 0.0
        %2843 = vmatprep.subr.mxu0 0.0
        %2844 = vmatpush1.msra.mxu0 0.0
        %2845 = vmatprep.subr.mxu0 0.0
        %2846 = vmatpush1.msra.mxu0 0.0
        %2847 = vmatprep.subr.mxu0 0.0
        %2848 = vmatpush1.msra.mxu0 0.0
        %2849 = vmatprep.subr.mxu0 0.0
        %2850 = vmatpush1.msra.mxu0 0.0
        %2851 = vmatprep.subr.mxu0 0.0
        %2852 = vmatpush1.msra.mxu0 0.0
        %2853 = vmatprep.subr.mxu0 0.0
        %2854 = vmatpush1.msra.mxu0 0.0
        %2855 = vmatprep.subr.mxu0 0.0
        %2856 = vmatpush1.msra.mxu0 0.0
        %2857 = vmatprep.subr.mxu0 0.0
        %2858 = vmatpush1.msra.mxu0 0.0
        %2859 = vmatprep.subr.mxu0 0.0
        %2860 = vmatpush1.msra.mxu0 0.0
        %2861 = vmatprep.subr.mxu0 0.0
        %2862 = vmatpush1.msra.mxu0 0.0
        %2863 = vmatprep.subr.mxu0 0.0
        %2864 = vmatpush1.msra.mxu0 0.0
        %2865 = vmatprep.mubr.f32.mxu0 0.0
        %2866 = vmatmul.mubr.f32.gmra.mrb[0].mxu0 %v2195
        %v2867 = vpop.f32.mrb[0].mxu0
        %v2868 = vadd.f32 0.0, %v2867
        %v2869 = vpop.f32.mrb[0].mxu0
        %2870 = vmatprep.mubr.f32.mxu0 0.0
        %2871 = vmatmul.mubr.f32.gmra.mrb[0].mxu0 %v2198
        %v2872 = vpop.f32.mrb[0].mxu0
        %v2873 = vadd.f32 0.0, %v2872
        %v2874 = vpop.f32.mrb[0].mxu0
        %2875 = vmatprep.mubr.f32.mxu0 0.0
        %2876 = vmatmul.mubr.f32.gmra.mrb[0].mxu0 %v2201
        %v2877 = vpop.f32.mrb[0].mxu0
        %v2878 = vadd.f32 0.0, %v2877
        %v2879 = vpop.f32.mrb[0].mxu0
        %2880 = vmatprep.mubr.f32.mxu0 0.0
        %2881 = vmatmul.mubr.f32.gmra.mrb[0].mxu0 %v2204
        %v2882 = vpop.f32.mrb[0].mxu0
        %v2883 = vadd.f32 0.0, %v2882
        %v2884 = vpop.f32.mrb[0].mxu0
        %2885 = vdwg.mxu0
        %2886 = vmatprep.subr.mxu0 0.0
        %2887 = vmatpush1.msra.mxu0 %v552
        %2888 = vmatprep.subr.mxu0 0.0
        %2889 = vmatpush1.msra.mxu0 %v553
        %2890 = vmatprep.subr.mxu0 0.0
        %2891 = vmatpush1.msra.mxu0 %v554
        %2892 = vmatprep.subr.mxu0 0.0
        %2893 = vmatpush1.msra.mxu0 %v555
        %2894 = vmatprep.subr.mxu0 0.0
        %2895 = vmatpush1.msra.mxu0 %v556
        %2896 = vmatprep.subr.mxu0 0.0
        %2897 = vmatpush1.msra.mxu0 %v557
        %2898 = vmatprep.subr.mxu0 0.0
        %2899 = vmatpush1.msra.mxu0 %v558
        %2900 = vmatprep.subr.mxu0 0.0
        %2901 = vmatpush1.msra.mxu0 %v559
        %2902 = vmatprep.subr.mxu0 0.0
        %2903 = vmatpush1.msra.mxu0 %v560
        %2904 = vmatprep.subr.mxu0 0.0
        %2905 = vmatpush1.msra.mxu0 %v561
        %2906 = vmatprep.subr.mxu0 0.0
        %2907 = vmatpush1.msra.mxu0 %v562
        %2908 = vmatprep.subr.mxu0 0.0
        %2909 = vmatpush1.msra.mxu0 %v563
        %2910 = vmatprep.subr.mxu0 0.0
        %2911 = vmatpush1.msra.mxu0 %v564
        %2912 = vmatprep.subr.mxu0 0.0
        %2913 = vmatpush1.msra.mxu0 %v565
        %2914 = vmatprep.subr.mxu0 0.0
        %2915 = vmatpush1.msra.mxu0 %v566
        %2916 = vmatprep.subr.mxu0 0.0
        %2917 = vmatpush1.msra.mxu0 %v567
        %2918 = vmatprep.subr.mxu0 0.0
        %2919 = vmatpush1.msra.mxu0 0.0
        %2920 = vmatprep.subr.mxu0 0.0
        %2921 = vmatpush1.msra.mxu0 0.0
        %2922 = vmatprep.subr.mxu0 0.0
        %2923 = vmatpush1.msra.mxu0 0.0
        %2924 = vmatprep.subr.mxu0 0.0
        %2925 = vmatpush1.msra.mxu0 0.0
        %2926 = vmatprep.subr.mxu0 0.0
        %2927 = vmatpush1.msra.mxu0 0.0
        %2928 = vmatprep.subr.mxu0 0.0
        %2929 = vmatpush1.msra.mxu0 0.0
        %2930 = vmatprep.subr.mxu0 0.0
        %2931 = vmatpush1.msra.mxu0 0.0
        %2932 = vmatprep.subr.mxu0 0.0
        %2933 = vmatpush1.msra.mxu0 0.0
        %2934 = vmatprep.subr.mxu0 0.0
        %2935 = vmatpush1.msra.mxu0 0.0
        %2936 = vmatprep.subr.mxu0 0.0
        %2937 = vmatpush1.msra.mxu0 0.0
        %2938 = vmatprep.subr.mxu0 0.0
        %2939 = vmatpush1.msra.mxu0 0.0
        %2940 = vmatprep.subr.mxu0 0.0
        %2941 = vmatpush1.msra.mxu0 0.0
        %2942 = vmatprep.subr.mxu0 0.0
        %2943 = vmatpush1.msra.mxu0 0.0
        %2944 = vmatprep.subr.mxu0 0.0
        %2945 = vmatpush1.msra.mxu0 0.0
        %2946 = vmatprep.subr.mxu0 0.0
        %2947 = vmatpush1.msra.mxu0 0.0
        %2948 = vmatprep.subr.mxu0 0.0
        %2949 = vmatpush1.msra.mxu0 0.0
        %2950 = vmatprep.mubr.f32.mxu0 0.0
        %2951 = vmatmul.mubr.f32.gmra.mrb[0].mxu0 %v812
        %v2952 = vpop.f32.mrb[0].mxu0
        %v2953 = vadd.f32 0.0, %v2952
        %v2954 = vpop.f32.mrb[0].mxu0
        %2955 = vmatprep.mubr.f32.mxu0 0.0
        %2956 = vmatmul.mubr.f32.gmra.mrb[0].mxu0 %v817
        %v2957 = vpop.f32.mrb[0].mxu0
        %v2958 = vadd.f32 0.0, %v2957
        %v2959 = vpop.f32.mrb[0].mxu0
        %2960 = vmatprep.mubr.f32.mxu0 0.0
        %2961 = vmatmul.mubr.f32.gmra.mrb[0].mxu0 %v822
        %v2962 = vpop.f32.mrb[0].mxu0
        %v2963 = vadd.f32 0.0, %v2962
        %v2964 = vpop.f32.mrb[0].mxu0
        %2965 = vmatprep.mubr.f32.mxu0 0.0
        %2966 = vmatmul.mubr.f32.gmra.mrb[0].mxu0 %v827
        %v2967 = vpop.f32.mrb[0].mxu0
        %v2968 = vadd.f32 0.0, %v2967
        %v2969 = vpop.f32.mrb[0].mxu0
        %2970 = vmatprep.mubr.f32.mxu0 0.0
        %2971 = vmatmul.mubr.f32.gmra.mrb[0].mxu0 %v937
        %v2972 = vpop.f32.mrb[0].mxu0
        %v2973 = vadd.f32 0.0, %v2972
        %v2974 = vpop.f32.mrb[0].mxu0
        %2975 = vmatprep.mubr.f32.mxu0 0.0
        %2976 = vmatmul.mubr.f32.gmra.mrb[0].mxu0 %v942
        %v2977 = vpop.f32.mrb[0].mxu0
        %v2978 = vadd.f32 0.0, %v2977
        %v2979 = vpop.f32.mrb[0].mxu0
        %2980 = vmatprep.mubr.f32.mxu0 0.0
        %2981 = vmatmul.mubr.f32.gmra.mrb[0].mxu0 %v947
        %v2982 = vpop.f32.mrb[0].mxu0
        %v2983 = vadd.f32 0.0, %v2982
        %v2984 = vpop.f32.mrb[0].mxu0
        %2985 = vmatprep.mubr.f32.mxu0 0.0
        %2986 = vmatmul.mubr.f32.gmra.mrb[0].mxu0 %v952
        %v2987 = vpop.f32.mrb[0].mxu0
        %v2988 = vadd.f32 0.0, %v2987
        %v2989 = vpop.f32.mrb[0].mxu0
        %2990 = vmatprep.mubr.f32.mxu0 0.0
        %2991 = vmatmul.mubr.f32.gmra.mrb[0].mxu0 %v1062
        %v2992 = vpop.f32.mrb[0].mxu0
        %v2993 = vadd.f32 0.0, %v2992
        %v2994 = vpop.f32.mrb[0].mxu0
        %2995 = vmatprep.mubr.f32.mxu0 0.0
        %2996 = vmatmul.mubr.f32.gmra.mrb[0].mxu0 %v1067
        %v2997 = vpop.f32.mrb[0].mxu0
        %v2998 = vadd.f32 0.0, %v2997
        %v2999 = vpop.f32.mrb[0].mxu0
        %3000 = vmatprep.mubr.f32.mxu0 0.0
        %3001 = vmatmul.mubr.f32.gmra.mrb[0].mxu0 %v1072
        %v3002 = vpop.f32.mrb[0].mxu0
        %v3003 = vadd.f32 0.0, %v3002
        %v3004 = vpop.f32.mrb[0].mxu0
        %3005 = vmatprep.mubr.f32.mxu0 0.0
        %3006 = vmatmul.mubr.f32.gmra.mrb[0].mxu0 %v1077
        %v3007 = vpop.f32.mrb[0].mxu0
        %v3008 = vadd.f32 0.0, %v3007
        %v3009 = vpop.f32.mrb[0].mxu0
        %3010 = vmatprep.mubr.f32.mxu0 0.0
        %3011 = vmatmul.mubr.f32.gmra.mrb[0].mxu0 %v1187
        %v3012 = vpop.f32.mrb[0].mxu0
        %v3013 = vadd.f32 0.0, %v3012
        %v3014 = vpop.f32.mrb[0].mxu0
        %3015 = vmatprep.mubr.f32.mxu0 0.0
        %3016 = vmatmul.mubr.f32.gmra.mrb[0].mxu0 %v1192
        %v3017 = vpop.f32.mrb[0].mxu0
        %v3018 = vadd.f32 0.0, %v3017
        %v3019 = vpop.f32.mrb[0].mxu0
        %3020 = vmatprep.mubr.f32.mxu0 0.0
        %3021 = vmatmul.mubr.f32.gmra.mrb[0].mxu0 %v1197
        %v3022 = vpop.f32.mrb[0].mxu0
        %v3023 = vadd.f32 0.0, %v3022
        %v3024 = vpop.f32.mrb[0].mxu0
        %3025 = vmatprep.mubr.f32.mxu0 0.0
        %3026 = vmatmul.mubr.f32.gmra.mrb[0].mxu0 %v1202
        %v3027 = vpop.f32.mrb[0].mxu0
        %v3028 = vadd.f32 0.0, %v3027
        %v3029 = vpop.f32.mrb[0].mxu0
        %3030 = vmatprep.mubr.f32.mxu0 0.0
        %3031 = vmatmul.mubr.f32.gmra.mrb[0].mxu0 %v1312
        %v3032 = vpop.f32.mrb[0].mxu0
        %v3033 = vadd.f32 0.0, %v3032
        %v3034 = vpop.f32.mrb[0].mxu0
        %3035 = vmatprep.mubr.f32.mxu0 0.0
        %3036 = vmatmul.mubr.f32.gmra.mrb[0].mxu0 %v1317
        %v3037 = vpop.f32.mrb[0].mxu0
        %v3038 = vadd.f32 0.0, %v3037
        %v3039 = vpop.f32.mrb[0].mxu0
        %3040 = vmatprep.mubr.f32.mxu0 0.0
        %3041 = vmatmul.mubr.f32.gmra.mrb[0].mxu0 %v1322
        %v3042 = vpop.f32.mrb[0].mxu0
        %v3043 = vadd.f32 0.0, %v3042
        %v3044 = vpop.f32.mrb[0].mxu0
        %3045 = vmatprep.mubr.f32.mxu0 0.0
        %3046 = vmatmul.mubr.f32.gmra.mrb[0].mxu0 %v1327
        %v3047 = vpop.f32.mrb[0].mxu0
        %v3048 = vadd.f32 0.0, %v3047
        %v3049 = vpop.f32.mrb[0].mxu0
        %3050 = vmatprep.mubr.f32.mxu0 0.0
        %3051 = vmatmul.mubr.f32.gmra.mrb[0].mxu0 %v1437
        %v3052 = vpop.f32.mrb[0].mxu0
        %v3053 = vadd.f32 0.0, %v3052
        %v3054 = vpop.f32.mrb[0].mxu0
        %3055 = vmatprep.mubr.f32.mxu0 0.0
        %3056 = vmatmul.mubr.f32.gmra.mrb[0].mxu0 %v1442
        %v3057 = vpop.f32.mrb[0].mxu0
        %v3058 = vadd.f32 0.0, %v3057
        %v3059 = vpop.f32.mrb[0].mxu0
        %3060 = vmatprep.mubr.f32.mxu0 0.0
        %3061 = vmatmul.mubr.f32.gmra.mrb[0].mxu0 %v1447
        %v3062 = vpop.f32.mrb[0].mxu0
        %v3063 = vadd.f32 0.0, %v3062
        %v3064 = vpop.f32.mrb[0].mxu0
        %3065 = vmatprep.mubr.f32.mxu0 0.0
        %3066 = vmatmul.mubr.f32.gmra.mrb[0].mxu0 %v1452
        %v3067 = vpop.f32.mrb[0].mxu0
        %v3068 = vadd.f32 0.0, %v3067
        %v3069 = vpop.f32.mrb[0].mxu0
        %3070 = vmatprep.mubr.f32.mxu0 0.0
        %3071 = vmatmul.mubr.f32.gmra.mrb[0].mxu0 %v1562
        %v3072 = vpop.f32.mrb[0].mxu0
        %v3073 = vadd.f32 0.0, %v3072
        %v3074 = vpop.f32.mrb[0].mxu0
        %3075 = vmatprep.mubr.f32.mxu0 0.0
        %3076 = vmatmul.mubr.f32.gmra.mrb[0].mxu0 %v1567
        %v3077 = vpop.f32.mrb[0].mxu0
        %v3078 = vadd.f32 0.0, %v3077
        %v3079 = vpop.f32.mrb[0].mxu0
        %3080 = vmatprep.mubr.f32.mxu0 0.0
        %3081 = vmatmul.mubr.f32.gmra.mrb[0].mxu0 %v1572
        %v3082 = vpop.f32.mrb[0].mxu0
        %v3083 = vadd.f32 0.0, %v3082
        %v3084 = vpop.f32.mrb[0].mxu0
        %3085 = vmatprep.mubr.f32.mxu0 0.0
        %3086 = vmatmul.mubr.f32.gmra.mrb[0].mxu0 %v1577
        %v3087 = vpop.f32.mrb[0].mxu0
        %v3088 = vadd.f32 0.0, %v3087
        %v3089 = vpop.f32.mrb[0].mxu0
        %3090 = vmatprep.mubr.f32.mxu0 0.0
        %3091 = vmatmul.mubr.f32.gmra.mrb[0].mxu0 %v1687
        %v3092 = vpop.f32.mrb[0].mxu0
        %v3093 = vadd.f32 0.0, %v3092
        %v3094 = vpop.f32.mrb[0].mxu0
        %3095 = vmatprep.mubr.f32.mxu0 0.0
        %3096 = vmatmul.mubr.f32.gmra.mrb[0].mxu0 %v1692
        %v3097 = vpop.f32.mrb[0].mxu0
        %v3098 = vadd.f32 0.0, %v3097
        %v3099 = vpop.f32.mrb[0].mxu0
        %3100 = vmatprep.mubr.f32.mxu0 0.0
        %3101 = vmatmul.mubr.f32.gmra.mrb[0].mxu0 %v1697
        %v3102 = vpop.f32.mrb[0].mxu0
        %v3103 = vadd.f32 0.0, %v3102
        %v3104 = vpop.f32.mrb[0].mxu0
        %3105 = vmatprep.mubr.f32.mxu0 0.0
        %3106 = vmatmul.mubr.f32.gmra.mrb[0].mxu0 %v1702
        %v3107 = vpop.f32.mrb[0].mxu0
        %v3108 = vadd.f32 0.0, %v3107
        %v3109 = vpop.f32.mrb[0].mxu0
        %3110 = vdwg.mxu0
        %v3112 = vsel %vm2193, %v510, 0
        %v3115 = vsel %vm2193, %v511, 0
        %v3118 = vsel %vm2193, %v512, 0
        %v3121 = vsel %vm2193, %v513, 0
        %3123 = vmatprep.subr.mxu0 0.0
        %3124 = vmatpush1.msra.mxu0 %v1819
        %3125 = vmatprep.subr.mxu0 0.0
        %3126 = vmatpush1.msra.mxu0 0.0
        %3127 = vmatprep.subr.mxu0 0.0
        %3128 = vmatpush1.msra.mxu0 0.0
        %3129 = vmatprep.subr.mxu0 0.0
        %3130 = vmatpush1.msra.mxu0 0.0
        %3131 = vmatprep.subr.mxu0 0.0
        %3132 = vmatpush1.msra.mxu0 0.0
        %3133 = vmatprep.subr.mxu0 0.0
        %3134 = vmatpush1.msra.mxu0 0.0
        %3135 = vmatprep.subr.mxu0 0.0
        %3136 = vmatpush1.msra.mxu0 0.0
        %3137 = vmatprep.subr.mxu0 0.0
        %3138 = vmatpush1.msra.mxu0 0.0
        %3139 = vmatprep.subr.mxu0 0.0
        %3140 = vmatpush1.msra.mxu0 0.0
        %3141 = vmatprep.subr.mxu0 0.0
        %3142 = vmatpush1.msra.mxu0 0.0
        %3143 = vmatprep.subr.mxu0 0.0
        %3144 = vmatpush1.msra.mxu0 0.0
        %3145 = vmatprep.subr.mxu0 0.0
        %3146 = vmatpush1.msra.mxu0 0.0
        %3147 = vmatprep.subr.mxu0 0.0
        %3148 = vmatpush1.msra.mxu0 0.0
        %3149 = vmatprep.subr.mxu0 0.0
        %3150 = vmatpush1.msra.mxu0 0.0
        %3151 = vmatprep.subr.mxu0 0.0
        %3152 = vmatpush1.msra.mxu0 0.0
        %3153 = vmatprep.subr.mxu0 0.0
        %3154 = vmatpush1.msra.mxu0 0.0
        %3155 = vmatprep.subr.mxu0 0.0
        %3156 = vmatpush1.msra.mxu0 0.0
        %3157 = vmatprep.subr.mxu0 0.0
        %3158 = vmatpush1.msra.mxu0 0.0
        %3159 = vmatprep.subr.mxu0 0.0
        %3160 = vmatpush1.msra.mxu0 0.0
        %3161 = vmatprep.subr.mxu0 0.0
        %3162 = vmatpush1.msra.mxu0 0.0
        %3163 = vmatprep.subr.mxu0 0.0
        %3164 = vmatpush1.msra.mxu0 0.0
        %3165 = vmatprep.subr.mxu0 0.0
        %3166 = vmatpush1.msra.mxu0 0.0
        %3167 = vmatprep.subr.mxu0 0.0
        %3168 = vmatpush1.msra.mxu0 0.0
        %3169 = vmatprep.subr.mxu0 0.0
        %3170 = vmatpush1.msra.mxu0 0.0
        %3171 = vmatprep.subr.mxu0 0.0
        %3172 = vmatpush1.msra.mxu0 0.0
        %3173 = vmatprep.subr.mxu0 0.0
        %3174 = vmatpush1.msra.mxu0 0.0
        %3175 = vmatprep.subr.mxu0 0.0
        %3176 = vmatpush1.msra.mxu0 0.0
        %3177 = vmatprep.subr.mxu0 0.0
        %3178 = vmatpush1.msra.mxu0 0.0
        %3179 = vmatprep.subr.mxu0 0.0
        %3180 = vmatpush1.msra.mxu0 0.0
        %3181 = vmatprep.subr.mxu0 0.0
        %3182 = vmatpush1.msra.mxu0 0.0
        %3183 = vmatprep.subr.mxu0 0.0
        %3184 = vmatpush1.msra.mxu0 0.0
        %3185 = vmatprep.subr.mxu0 0.0
        %3186 = vmatpush1.msra.mxu0 0.0
        %3187 = vmatprep.mubr.f32.mxu0 0.0
        %3188 = vmatmul.mubr.f32.gmra.mrb[0].mxu0 %v3112
        %v3189 = vpop.f32.mrb[0].mxu0
        %v3190 = vadd.f32 0.0, %v3189
        %v3191 = vpop.f32.mrb[0].mxu0
        %3192 = vmatprep.mubr.f32.mxu0 0.0
        %3193 = vmatmul.mubr.f32.gmra.mrb[0].mxu0 %v3115
        %v3194 = vpop.f32.mrb[0].mxu0
        %v3195 = vadd.f32 0.0, %v3194
        %v3196 = vpop.f32.mrb[0].mxu0
        %3197 = vmatprep.mubr.f32.mxu0 0.0
        %3198 = vmatmul.mubr.f32.gmra.mrb[0].mxu0 %v3118
        %v3199 = vpop.f32.mrb[0].mxu0
        %v3200 = vadd.f32 0.0, %v3199
        %v3201 = vpop.f32.mrb[0].mxu0
        %3202 = vmatprep.mubr.f32.mxu0 0.0
        %3203 = vmatmul.mubr.f32.gmra.mrb[0].mxu0 %v3121
        %v3204 = vpop.f32.mrb[0].mxu0
        %v3205 = vadd.f32 0.0, %v3204
        %v3206 = vpop.f32.mrb[0].mxu0
        %3207 = vdwg.mxu0
        %3208 = vmatprep.subr.mxu0 0.0
        %3209 = vmatpush1.msra.mxu0 %v1825
        %3210 = vmatprep.subr.mxu0 0.0
        %3211 = vmatpush1.msra.mxu0 0.0
        %3212 = vmatprep.subr.mxu0 0.0
        %3213 = vmatpush1.msra.mxu0 0.0
        %3214 = vmatprep.subr.mxu0 0.0
        %3215 = vmatpush1.msra.mxu0 0.0
        %3216 = vmatprep.subr.mxu0 0.0
        %3217 = vmatpush1.msra.mxu0 0.0
        %3218 = vmatprep.subr.mxu0 0.0
        %3219 = vmatpush1.msra.mxu0 0.0
        %3220 = vmatprep.subr.mxu0 0.0
        %3221 = vmatpush1.msra.mxu0 0.0
        %3222 = vmatprep.subr.mxu0 0.0
        %3223 = vmatpush1.msra.mxu0 0.0
        %3224 = vmatprep.subr.mxu0 0.0
        %3225 = vmatpush1.msra.mxu0 0.0
        %3226 = vmatprep.subr.mxu0 0.0
        %3227 = vmatpush1.msra.mxu0 0.0
        %3228 = vmatprep.subr.mxu0 0.0
        %3229 = vmatpush1.msra.mxu0 0.0
        %3230 = vmatprep.subr.mxu0 0.0
        %3231 = vmatpush1.msra.mxu0 0.0
        %3232 = vmatprep.subr.mxu0 0.0
        %3233 = vmatpush1.msra.mxu0 0.0
        %3234 = vmatprep.subr.mxu0 0.0
        %3235 = vmatpush1.msra.mxu0 0.0
        %3236 = vmatprep.subr.mxu0 0.0
        %3237 = vmatpush1.msra.mxu0 0.0
        %3238 = vmatprep.subr.mxu0 0.0
        %3239 = vmatpush1.msra.mxu0 0.0
        %3240 = vmatprep.subr.mxu0 0.0
        %3241 = vmatpush1.msra.mxu0 0.0
        %3242 = vmatprep.subr.mxu0 0.0
        %3243 = vmatpush1.msra.mxu0 0.0
        %3244 = vmatprep.subr.mxu0 0.0
        %3245 = vmatpush1.msra.mxu0 0.0
        %3246 = vmatprep.subr.mxu0 0.0
        %3247 = vmatpush1.msra.mxu0 0.0
        %3248 = vmatprep.subr.mxu0 0.0
        %3249 = vmatpush1.msra.mxu0 0.0
        %3250 = vmatprep.subr.mxu0 0.0
        %3251 = vmatpush1.msra.mxu0 0.0
        %3252 = vmatprep.subr.mxu0 0.0
        %3253 = vmatpush1.msra.mxu0 0.0
        %3254 = vmatprep.subr.mxu0 0.0
        %3255 = vmatpush1.msra.mxu0 0.0
        %3256 = vmatprep.subr.mxu0 0.0
        %3257 = vmatpush1.msra.mxu0 0.0
        %3258 = vmatprep.subr.mxu0 0.0
        %3259 = vmatpush1.msra.mxu0 0.0
        %3260 = vmatprep.subr.mxu0 0.0
        %3261 = vmatpush1.msra.mxu0 0.0
        %3262 = vmatprep.subr.mxu0 0.0
        %3263 = vmatpush1.msra.mxu0 0.0
        %3264 = vmatprep.subr.mxu0 0.0
        %3265 = vmatpush1.msra.mxu0 0.0
        %3266 = vmatprep.subr.mxu0 0.0
        %3267 = vmatpush1.msra.mxu0 0.0
        %3268 = vmatprep.subr.mxu0 0.0
        %3269 = vmatpush1.msra.mxu0 0.0
        %3270 = vmatprep.subr.mxu0 0.0
        %3271 = vmatpush1.msra.mxu0 0.0
        %3272 = vmatprep.mubr.f32.mxu0 0.0
        %3273 = vmatmul.mubr.f32.gmra.mrb[0].mxu0 %v3112
        %v3274 = vpop.f32.mrb[0].mxu0
        %v3275 = vadd.f32 0.0, %v3274
        %v3276 = vpop.f32.mrb[0].mxu0
        %3277 = vmatprep.mubr.f32.mxu0 0.0
        %3278 = vmatmul.mubr.f32.gmra.mrb[0].mxu0 %v3115
        %v3279 = vpop.f32.mrb[0].mxu0
        %v3280 = vadd.f32 0.0, %v3279
        %v3281 = vpop.f32.mrb[0].mxu0
        %3282 = vmatprep.mubr.f32.mxu0 0.0
        %3283 = vmatmul.mubr.f32.gmra.mrb[0].mxu0 %v3118
        %v3284 = vpop.f32.mrb[0].mxu0
        %v3285 = vadd.f32 0.0, %v3284
        %v3286 = vpop.f32.mrb[0].mxu0
        %3287 = vmatprep.mubr.f32.mxu0 0.0
        %3288 = vmatmul.mubr.f32.gmra.mrb[0].mxu0 %v3121
        %v3289 = vpop.f32.mrb[0].mxu0
        %v3290 = vadd.f32 0.0, %v3289
        %v3291 = vpop.f32.mrb[0].mxu0
        %3292 = vdwg.mxu0
        %3293 = vmatprep.subr.mxu0 0.0
        %3294 = vmatpush1.msra.mxu0 %v1831
        %3295 = vmatprep.subr.mxu0 0.0
        %3296 = vmatpush1.msra.mxu0 0.0
        %3297 = vmatprep.subr.mxu0 0.0
        %3298 = vmatpush1.msra.mxu0 0.0
        %3299 = vmatprep.subr.mxu0 0.0
        %3300 = vmatpush1.msra.mxu0 0.0
        %3301 = vmatprep.subr.mxu0 0.0
        %3302 = vmatpush1.msra.mxu0 0.0
        %3303 = vmatprep.subr.mxu0 0.0
        %3304 = vmatpush1.msra.mxu0 0.0
        %3305 = vmatprep.subr.mxu0 0.0
        %3306 = vmatpush1.msra.mxu0 0.0
        %3307 = vmatprep.subr.mxu0 0.0
        %3308 = vmatpush1.msra.mxu0 0.0
        %3309 = vmatprep.subr.mxu0 0.0
        %3310 = vmatpush1.msra.mxu0 0.0
        %3311 = vmatprep.subr.mxu0 0.0
        %3312 = vmatpush1.msra.mxu0 0.0
        %3313 = vmatprep.subr.mxu0 0.0
        %3314 = vmatpush1.msra.mxu0 0.0
        %3315 = vmatprep.subr.mxu0 0.0
        %3316 = vmatpush1.msra.mxu0 0.0
        %3317 = vmatprep.subr.mxu0 0.0
        %3318 = vmatpush1.msra.mxu0 0.0
        %3319 = vmatprep.subr.mxu0 0.0
        %3320 = vmatpush1.msra.mxu0 0.0
        %3321 = vmatprep.subr.mxu0 0.0
        %3322 = vmatpush1.msra.mxu0 0.0
        %3323 = vmatprep.subr.mxu0 0.0
        %3324 = vmatpush1.msra.mxu0 0.0
        %3325 = vmatprep.subr.mxu0 0.0
        %3326 = vmatpush1.msra.mxu0 0.0
        %3327 = vmatprep.subr.mxu0 0.0
        %3328 = vmatpush1.msra.mxu0 0.0
        %3329 = vmatprep.subr.mxu0 0.0
        %3330 = vmatpush1.msra.mxu0 0.0
        %3331 = vmatprep.subr.mxu0 0.0
        %3332 = vmatpush1.msra.mxu0 0.0
        %3333 = vmatprep.subr.mxu0 0.0
        %3334 = vmatpush1.msra.mxu0 0.0
        %3335 = vmatprep.subr.mxu0 0.0
        %3336 = vmatpush1.msra.mxu0 0.0
        %3337 = vmatprep.subr.mxu0 0.0
        %3338 = vmatpush1.msra.mxu0 0.0
        %3339 = vmatprep.subr.mxu0 0.0
        %3340 = vmatpush1.msra.mxu0 0.0
        %3341 = vmatprep.subr.mxu0 0.0
        %3342 = vmatpush1.msra.mxu0 0.0
        %3343 = vmatprep.subr.mxu0 0.0
        %3344 = vmatpush1.msra.mxu0 0.0
        %3345 = vmatprep.subr.mxu0 0.0
        %3346 = vmatpush1.msra.mxu0 0.0
        %3347 = vmatprep.subr.mxu0 0.0
        %3348 = vmatpush1.msra.mxu0 0.0
        %3349 = vmatprep.subr.mxu0 0.0
        %3350 = vmatpush1.msra.mxu0 0.0
        %3351 = vmatprep.subr.mxu0 0.0
        %3352 = vmatpush1.msra.mxu0 0.0
        %3353 = vmatprep.subr.mxu0 0.0
        %3354 = vmatpush1.msra.mxu0 0.0
        %3355 = vmatprep.subr.mxu0 0.0
        %3356 = vmatpush1.msra.mxu0 0.0
        %3357 = vmatprep.mubr.f32.mxu0 0.0
        %3358 = vmatmul.mubr.f32.gmra.mrb[0].mxu0 %v3112
        %v3359 = vpop.f32.mrb[0].mxu0
        %v3360 = vadd.f32 0.0, %v3359
        %v3361 = vpop.f32.mrb[0].mxu0
        %3362 = vmatprep.mubr.f32.mxu0 0.0
        %3363 = vmatmul.mubr.f32.gmra.mrb[0].mxu0 %v3115
        %v3364 = vpop.f32.mrb[0].mxu0
        %v3365 = vadd.f32 0.0, %v3364
        %v3366 = vpop.f32.mrb[0].mxu0
        %3367 = vmatprep.mubr.f32.mxu0 0.0
        %3368 = vmatmul.mubr.f32.gmra.mrb[0].mxu0 %v3118
        %v3369 = vpop.f32.mrb[0].mxu0
        %v3370 = vadd.f32 0.0, %v3369
        %v3371 = vpop.f32.mrb[0].mxu0
        %3372 = vmatprep.mubr.f32.mxu0 0.0
        %3373 = vmatmul.mubr.f32.gmra.mrb[0].mxu0 %v3121
        %v3374 = vpop.f32.mrb[0].mxu0
        %v3375 = vadd.f32 0.0, %v3374
        %v3376 = vpop.f32.mrb[0].mxu0
        %3377 = vdwg.mxu0
        %3378 = vmatprep.subr.mxu0 0.0
        %3379 = vmatpush1.msra.mxu0 %v1837
        %3380 = vmatprep.subr.mxu0 0.0
        %3381 = vmatpush1.msra.mxu0 0.0
        %3382 = vmatprep.subr.mxu0 0.0
        %3383 = vmatpush1.msra.mxu0 0.0
        %3384 = vmatprep.subr.mxu0 0.0
        %3385 = vmatpush1.msra.mxu0 0.0
        %3386 = vmatprep.subr.mxu0 0.0
        %3387 = vmatpush1.msra.mxu0 0.0
        %3388 = vmatprep.subr.mxu0 0.0
        %3389 = vmatpush1.msra.mxu0 0.0
        %3390 = vmatprep.subr.mxu0 0.0
        %3391 = vmatpush1.msra.mxu0 0.0
        %3392 = vmatprep.subr.mxu0 0.0
        %3393 = vmatpush1.msra.mxu0 0.0
        %3394 = vmatprep.subr.mxu0 0.0
        %3395 = vmatpush1.msra.mxu0 0.0
        %3396 = vmatprep.subr.mxu0 0.0
        %3397 = vmatpush1.msra.mxu0 0.0
        %3398 = vmatprep.subr.mxu0 0.0
        %3399 = vmatpush1.msra.mxu0 0.0
        %3400 = vmatprep.subr.mxu0 0.0
        %3401 = vmatpush1.msra.mxu0 0.0
        %3402 = vmatprep.subr.mxu0 0.0
        %3403 = vmatpush1.msra.mxu0 0.0
        %3404 = vmatprep.subr.mxu0 0.0
        %3405 = vmatpush1.msra.mxu0 0.0
        %3406 = vmatprep.subr.mxu0 0.0
        %3407 = vmatpush1.msra.mxu0 0.0
        %3408 = vmatprep.subr.mxu0 0.0
        %3409 = vmatpush1.msra.mxu0 0.0
        %3410 = vmatprep.subr.mxu0 0.0
        %3411 = vmatpush1.msra.mxu0 0.0
        %3412 = vmatprep.subr.mxu0 0.0
        %3413 = vmatpush1.msra.mxu0 0.0
        %3414 = vmatprep.subr.mxu0 0.0
        %3415 = vmatpush1.msra.mxu0 0.0
        %3416 = vmatprep.subr.mxu0 0.0
        %3417 = vmatpush1.msra.mxu0 0.0
        %3418 = vmatprep.subr.mxu0 0.0
        %3419 = vmatpush1.msra.mxu0 0.0
        %3420 = vmatprep.subr.mxu0 0.0
        %3421 = vmatpush1.msra.mxu0 0.0
        %3422 = vmatprep.subr.mxu0 0.0
        %3423 = vmatpush1.msra.mxu0 0.0
        %3424 = vmatprep.subr.mxu0 0.0
        %3425 = vmatpush1.msra.mxu0 0.0
        %3426 = vmatprep.subr.mxu0 0.0
        %3427 = vmatpush1.msra.mxu0 0.0
        %3428 = vmatprep.subr.mxu0 0.0
        %3429 = vmatpush1.msra.mxu0 0.0
        %3430 = vmatprep.subr.mxu0 0.0
        %3431 = vmatpush1.msra.mxu0 0.0
        %3432 = vmatprep.subr.mxu0 0.0
        %3433 = vmatpush1.msra.mxu0 0.0
        %3434 = vmatprep.subr.mxu0 0.0
        %3435 = vmatpush1.msra.mxu0 0.0
        %3436 = vmatprep.subr.mxu0 0.0
        %3437 = vmatpush1.msra.mxu0 0.0
        %3438 = vmatprep.subr.mxu0 0.0
        %3439 = vmatpush1.msra.mxu0 0.0
        %3440 = vmatprep.subr.mxu0 0.0
        %3441 = vmatpush1.msra.mxu0 0.0
        %3442 = vmatprep.mubr.f32.mxu0 0.0
        %3443 = vmatmul.mubr.f32.gmra.mrb[0].mxu0 %v3112
        %v3444 = vpop.f32.mrb[0].mxu0
        %v3445 = vadd.f32 0.0, %v3444
        %v3446 = vpop.f32.mrb[0].mxu0
        %3447 = vmatprep.mubr.f32.mxu0 0.0
        %3448 = vmatmul.mubr.f32.gmra.mrb[0].mxu0 %v3115
        %v3449 = vpop.f32.mrb[0].mxu0
        %v3450 = vadd.f32 0.0, %v3449
        %v3451 = vpop.f32.mrb[0].mxu0
        %3452 = vmatprep.mubr.f32.mxu0 0.0
        %3453 = vmatmul.mubr.f32.gmra.mrb[0].mxu0 %v3118
        %v3454 = vpop.f32.mrb[0].mxu0
        %v3455 = vadd.f32 0.0, %v3454
        %v3456 = vpop.f32.mrb[0].mxu0
        %3457 = vmatprep.mubr.f32.mxu0 0.0
        %3458 = vmatmul.mubr.f32.gmra.mrb[0].mxu0 %v3121
        %v3459 = vpop.f32.mrb[0].mxu0
        %v3460 = vadd.f32 0.0, %v3459
        %v3461 = vpop.f32.mrb[0].mxu0
        %3462 = vdwg.mxu0
        %3463 = vmatprep.subr.mxu0 0.0
        %3464 = vmatpush1.msra.mxu0 %v1843
        %3465 = vmatprep.subr.mxu0 0.0
        %3466 = vmatpush1.msra.mxu0 0.0
        %3467 = vmatprep.subr.mxu0 0.0
        %3468 = vmatpush1.msra.mxu0 0.0
        %3469 = vmatprep.subr.mxu0 0.0
        %3470 = vmatpush1.msra.mxu0 0.0
        %3471 = vmatprep.subr.mxu0 0.0
        %3472 = vmatpush1.msra.mxu0 0.0
        %3473 = vmatprep.subr.mxu0 0.0
        %3474 = vmatpush1.msra.mxu0 0.0
        %3475 = vmatprep.subr.mxu0 0.0
        %3476 = vmatpush1.msra.mxu0 0.0
        %3477 = vmatprep.subr.mxu0 0.0
        %3478 = vmatpush1.msra.mxu0 0.0
        %3479 = vmatprep.subr.mxu0 0.0
        %3480 = vmatpush1.msra.mxu0 0.0
        %3481 = vmatprep.subr.mxu0 0.0
        %3482 = vmatpush1.msra.mxu0 0.0
        %3483 = vmatprep.subr.mxu0 0.0
        %3484 = vmatpush1.msra.mxu0 0.0
        %3485 = vmatprep.subr.mxu0 0.0
        %3486 = vmatpush1.msra.mxu0 0.0
        %3487 = vmatprep.subr.mxu0 0.0
        %3488 = vmatpush1.msra.mxu0 0.0
        %3489 = vmatprep.subr.mxu0 0.0
        %3490 = vmatpush1.msra.mxu0 0.0
        %3491 = vmatprep.subr.mxu0 0.0
        %3492 = vmatpush1.msra.mxu0 0.0
        %3493 = vmatprep.subr.mxu0 0.0
        %3494 = vmatpush1.msra.mxu0 0.0
        %3495 = vmatprep.subr.mxu0 0.0
        %3496 = vmatpush1.msra.mxu0 0.0
        %3497 = vmatprep.subr.mxu0 0.0
        %3498 = vmatpush1.msra.mxu0 0.0
        %3499 = vmatprep.subr.mxu0 0.0
        %3500 = vmatpush1.msra.mxu0 0.0
        %3501 = vmatprep.subr.mxu0 0.0
        %3502 = vmatpush1.msra.mxu0 0.0
        %3503 = vmatprep.subr.mxu0 0.0
        %3504 = vmatpush1.msra.mxu0 0.0
        %3505 = vmatprep.subr.mxu0 0.0
        %3506 = vmatpush1.msra.mxu0 0.0
        %3507 = vmatprep.subr.mxu0 0.0
        %3508 = vmatpush1.msra.mxu0 0.0
        %3509 = vmatprep.subr.mxu0 0.0
        %3510 = vmatpush1.msra.mxu0 0.0
        %3511 = vmatprep.subr.mxu0 0.0
        %3512 = vmatpush1.msra.mxu0 0.0
        %3513 = vmatprep.subr.mxu0 0.0
        %3514 = vmatpush1.msra.mxu0 0.0
        %3515 = vmatprep.subr.mxu0 0.0
        %3516 = vmatpush1.msra.mxu0 0.0
        %3517 = vmatprep.subr.mxu0 0.0
        %3518 = vmatpush1.msra.mxu0 0.0
        %3519 = vmatprep.subr.mxu0 0.0
        %3520 = vmatpush1.msra.mxu0 0.0
        %3521 = vmatprep.subr.mxu0 0.0
        %3522 = vmatpush1.msra.mxu0 0.0
        %3523 = vmatprep.subr.mxu0 0.0
        %3524 = vmatpush1.msra.mxu0 0.0
        %3525 = vmatprep.subr.mxu0 0.0
        %3526 = vmatpush1.msra.mxu0 0.0
        %3527 = vmatprep.mubr.f32.mxu0 0.0
        %3528 = vmatmul.mubr.f32.gmra.mrb[0].mxu0 %v3112
        %v3529 = vpop.f32.mrb[0].mxu0
        %v3530 = vadd.f32 0.0, %v3529
        %v3531 = vpop.f32.mrb[0].mxu0
        %3532 = vmatprep.mubr.f32.mxu0 0.0
        %3533 = vmatmul.mubr.f32.gmra.mrb[0].mxu0 %v3115
        %v3534 = vpop.f32.mrb[0].mxu0
        %v3535 = vadd.f32 0.0, %v3534
        %v3536 = vpop.f32.mrb[0].mxu0
        %3537 = vmatprep.mubr.f32.mxu0 0.0
        %3538 = vmatmul.mubr.f32.gmra.mrb[0].mxu0 %v3118
        %v3539 = vpop.f32.mrb[0].mxu0
        %v3540 = vadd.f32 0.0, %v3539
        %v3541 = vpop.f32.mrb[0].mxu0
        %3542 = vmatprep.mubr.f32.mxu0 0.0
        %3543 = vmatmul.mubr.f32.gmra.mrb[0].mxu0 %v3121
        %v3544 = vpop.f32.mrb[0].mxu0
        %v3545 = vadd.f32 0.0, %v3544
        %v3546 = vpop.f32.mrb[0].mxu0
        %3547 = vdwg.mxu0
        %3548 = vmatprep.subr.mxu0 0.0
        %3549 = vmatpush1.msra.mxu0 %v1849
        %3550 = vmatprep.subr.mxu0 0.0
        %3551 = vmatpush1.msra.mxu0 0.0
        %3552 = vmatprep.subr.mxu0 0.0
        %3553 = vmatpush1.msra.mxu0 0.0
        %3554 = vmatprep.subr.mxu0 0.0
        %3555 = vmatpush1.msra.mxu0 0.0
        %3556 = vmatprep.subr.mxu0 0.0
        %3557 = vmatpush1.msra.mxu0 0.0
        %3558 = vmatprep.subr.mxu0 0.0
        %3559 = vmatpush1.msra.mxu0 0.0
        %3560 = vmatprep.subr.mxu0 0.0
        %3561 = vmatpush1.msra.mxu0 0.0
        %3562 = vmatprep.subr.mxu0 0.0
        %3563 = vmatpush1.msra.mxu0 0.0
        %3564 = vmatprep.subr.mxu0 0.0
        %3565 = vmatpush1.msra.mxu0 0.0
        %3566 = vmatprep.subr.mxu0 0.0
        %3567 = vmatpush1.msra.mxu0 0.0
        %3568 = vmatprep.subr.mxu0 0.0
        %3569 = vmatpush1.msra.mxu0 0.0
        %3570 = vmatprep.subr.mxu0 0.0
        %3571 = vmatpush1.msra.mxu0 0.0
        %3572 = vmatprep.subr.mxu0 0.0
        %3573 = vmatpush1.msra.mxu0 0.0
        %3574 = vmatprep.subr.mxu0 0.0
        %3575 = vmatpush1.msra.mxu0 0.0
        %3576 = vmatprep.subr.mxu0 0.0
        %3577 = vmatpush1.msra.mxu0 0.0
        %3578 = vmatprep.subr.mxu0 0.0
        %3579 = vmatpush1.msra.mxu0 0.0
        %3580 = vmatprep.subr.mxu0 0.0
        %3581 = vmatpush1.msra.mxu0 0.0
        %3582 = vmatprep.subr.mxu0 0.0
        %3583 = vmatpush1.msra.mxu0 0.0
        %3584 = vmatprep.subr.mxu0 0.0
        %3585 = vmatpush1.msra.mxu0 0.0
        %3586 = vmatprep.subr.mxu0 0.0
        %3587 = vmatpush1.msra.mxu0 0.0
        %3588 = vmatprep.subr.mxu0 0.0
        %3589 = vmatpush1.msra.mxu0 0.0
        %3590 = vmatprep.subr.mxu0 0.0
        %3591 = vmatpush1.msra.mxu0 0.0
        %3592 = vmatprep.subr.mxu0 0.0
        %3593 = vmatpush1.msra.mxu0 0.0
        %3594 = vmatprep.subr.mxu0 0.0
        %3595 = vmatpush1.msra.mxu0 0.0
        %3596 = vmatprep.subr.mxu0 0.0
        %3597 = vmatpush1.msra.mxu0 0.0
        %3598 = vmatprep.subr.mxu0 0.0
        %3599 = vmatpush1.msra.mxu0 0.0
        %3600 = vmatprep.subr.mxu0 0.0
        %3601 = vmatpush1.msra.mxu0 0.0
        %3602 = vmatprep.subr.mxu0 0.0
        %3603 = vmatpush1.msra.mxu0 0.0
        %3604 = vmatprep.subr.mxu0 0.0
        %3605 = vmatpush1.msra.mxu0 0.0
        %3606 = vmatprep.subr.mxu0 0.0
        %3607 = vmatpush1.msra.mxu0 0.0
        %3608 = vmatprep.subr.mxu0 0.0
        %3609 = vmatpush1.msra.mxu0 0.0
        %3610 = vmatprep.subr.mxu0 0.0
        %3611 = vmatpush1.msra.mxu0 0.0
        %3612 = vmatprep.mubr.f32.mxu0 0.0
        %3613 = vmatmul.mubr.f32.gmra.mrb[0].mxu0 %v3112
        %v3614 = vpop.f32.mrb[0].mxu0
        %v3615 = vadd.f32 0.0, %v3614
        %v3616 = vpop.f32.mrb[0].mxu0
        %3617 = vmatprep.mubr.f32.mxu0 0.0
        %3618 = vmatmul.mubr.f32.gmra.mrb[0].mxu0 %v3115
        %v3619 = vpop.f32.mrb[0].mxu0
        %v3620 = vadd.f32 0.0, %v3619
        %v3621 = vpop.f32.mrb[0].mxu0
        %3622 = vmatprep.mubr.f32.mxu0 0.0
        %3623 = vmatmul.mubr.f32.gmra.mrb[0].mxu0 %v3118
        %v3624 = vpop.f32.mrb[0].mxu0
        %v3625 = vadd.f32 0.0, %v3624
        %v3626 = vpop.f32.mrb[0].mxu0
        %3627 = vmatprep.mubr.f32.mxu0 0.0
        %3628 = vmatmul.mubr.f32.gmra.mrb[0].mxu0 %v3121
        %v3629 = vpop.f32.mrb[0].mxu0
        %v3630 = vadd.f32 0.0, %v3629
        %v3631 = vpop.f32.mrb[0].mxu0
        %3632 = vdwg.mxu0
        %3633 = vmatprep.subr.mxu0 0.0
        %3634 = vmatpush1.msra.mxu0 %v1855
        %3635 = vmatprep.subr.mxu0 0.0
        %3636 = vmatpush1.msra.mxu0 0.0
        %3637 = vmatprep.subr.mxu0 0.0
        %3638 = vmatpush1.msra.mxu0 0.0
        %3639 = vmatprep.subr.mxu0 0.0
        %3640 = vmatpush1.msra.mxu0 0.0
        %3641 = vmatprep.subr.mxu0 0.0
        %3642 = vmatpush1.msra.mxu0 0.0
        %3643 = vmatprep.subr.mxu0 0.0
        %3644 = vmatpush1.msra.mxu0 0.0
        %3645 = vmatprep.subr.mxu0 0.0
        %3646 = vmatpush1.msra.mxu0 0.0
        %3647 = vmatprep.subr.mxu0 0.0
        %3648 = vmatpush1.msra.mxu0 0.0
        %3649 = vmatprep.subr.mxu0 0.0
        %3650 = vmatpush1.msra.mxu0 0.0
        %3651 = vmatprep.subr.mxu0 0.0
        %3652 = vmatpush1.msra.mxu0 0.0
        %3653 = vmatprep.subr.mxu0 0.0
        %3654 = vmatpush1.msra.mxu0 0.0
        %3655 = vmatprep.subr.mxu0 0.0
        %3656 = vmatpush1.msra.mxu0 0.0
        %3657 = vmatprep.subr.mxu0 0.0
        %3658 = vmatpush1.msra.mxu0 0.0
        %3659 = vmatprep.subr.mxu0 0.0
        %3660 = vmatpush1.msra.mxu0 0.0
        %3661 = vmatprep.subr.mxu0 0.0
        %3662 = vmatpush1.msra.mxu0 0.0
        %3663 = vmatprep.subr.mxu0 0.0
        %3664 = vmatpush1.msra.mxu0 0.0
        %3665 = vmatprep.subr.mxu0 0.0
        %3666 = vmatpush1.msra.mxu0 0.0
        %3667 = vmatprep.subr.mxu0 0.0
        %3668 = vmatpush1.msra.mxu0 0.0
        %3669 = vmatprep.subr.mxu0 0.0
        %3670 = vmatpush1.msra.mxu0 0.0
        %3671 = vmatprep.subr.mxu0 0.0
        %3672 = vmatpush1.msra.mxu0 0.0
        %3673 = vmatprep.subr.mxu0 0.0
        %3674 = vmatpush1.msra.mxu0 0.0
        %3675 = vmatprep.subr.mxu0 0.0
        %3676 = vmatpush1.msra.mxu0 0.0
        %3677 = vmatprep.subr.mxu0 0.0
        %3678 = vmatpush1.msra.mxu0 0.0
        %3679 = vmatprep.subr.mxu0 0.0
        %3680 = vmatpush1.msra.mxu0 0.0
        %3681 = vmatprep.subr.mxu0 0.0
        %3682 = vmatpush1.msra.mxu0 0.0
        %3683 = vmatprep.subr.mxu0 0.0
        %3684 = vmatpush1.msra.mxu0 0.0
        %3685 = vmatprep.subr.mxu0 0.0
        %3686 = vmatpush1.msra.mxu0 0.0
        %3687 = vmatprep.subr.mxu0 0.0
        %3688 = vmatpush1.msra.mxu0 0.0
        %3689 = vmatprep.subr.mxu0 0.0
        %3690 = vmatpush1.msra.mxu0 0.0
        %3691 = vmatprep.subr.mxu0 0.0
        %3692 = vmatpush1.msra.mxu0 0.0
        %3693 = vmatprep.subr.mxu0 0.0
        %3694 = vmatpush1.msra.mxu0 0.0
        %3695 = vmatprep.subr.mxu0 0.0
        %3696 = vmatpush1.msra.mxu0 0.0
        %3697 = vmatprep.mubr.f32.mxu0 0.0
        %3698 = vmatmul.mubr.f32.gmra.mrb[0].mxu0 %v3112
        %v3699 = vpop.f32.mrb[0].mxu0
        %v3700 = vadd.f32 0.0, %v3699
        %v3701 = vpop.f32.mrb[0].mxu0
        %3702 = vmatprep.mubr.f32.mxu0 0.0
        %3703 = vmatmul.mubr.f32.gmra.mrb[0].mxu0 %v3115
        %v3704 = vpop.f32.mrb[0].mxu0
        %v3705 = vadd.f32 0.0, %v3704
        %v3706 = vpop.f32.mrb[0].mxu0
        %3707 = vmatprep.mubr.f32.mxu0 0.0
        %3708 = vmatmul.mubr.f32.gmra.mrb[0].mxu0 %v3118
        %v3709 = vpop.f32.mrb[0].mxu0
        %v3710 = vadd.f32 0.0, %v3709
        %v3711 = vpop.f32.mrb[0].mxu0
        %3712 = vmatprep.mubr.f32.mxu0 0.0
        %3713 = vmatmul.mubr.f32.gmra.mrb[0].mxu0 %v3121
        %v3714 = vpop.f32.mrb[0].mxu0
        %v3715 = vadd.f32 0.0, %v3714
        %v3716 = vpop.f32.mrb[0].mxu0
        %3717 = vdwg.mxu0
        %3718 = vmatprep.subr.mxu0 0.0
        %3719 = vmatpush1.msra.mxu0 %v1861
        %3720 = vmatprep.subr.mxu0 0.0
        %3721 = vmatpush1.msra.mxu0 0.0
        %3722 = vmatprep.subr.mxu0 0.0
        %3723 = vmatpush1.msra.mxu0 0.0
        %3724 = vmatprep.subr.mxu0 0.0
        %3725 = vmatpush1.msra.mxu0 0.0
        %3726 = vmatprep.subr.mxu0 0.0
        %3727 = vmatpush1.msra.mxu0 0.0
        %3728 = vmatprep.subr.mxu0 0.0
        %3729 = vmatpush1.msra.mxu0 0.0
        %3730 = vmatprep.subr.mxu0 0.0
        %3731 = vmatpush1.msra.mxu0 0.0
        %3732 = vmatprep.subr.mxu0 0.0
        %3733 = vmatpush1.msra.mxu0 0.0
        %3734 = vmatprep.subr.mxu0 0.0
        %3735 = vmatpush1.msra.mxu0 0.0
        %3736 = vmatprep.subr.mxu0 0.0
        %3737 = vmatpush1.msra.mxu0 0.0
        %3738 = vmatprep.subr.mxu0 0.0
        %3739 = vmatpush1.msra.mxu0 0.0
        %3740 = vmatprep.subr.mxu0 0.0
        %3741 = vmatpush1.msra.mxu0 0.0
        %3742 = vmatprep.subr.mxu0 0.0
        %3743 = vmatpush1.msra.mxu0 0.0
        %3744 = vmatprep.subr.mxu0 0.0
        %3745 = vmatpush1.msra.mxu0 0.0
        %3746 = vmatprep.subr.mxu0 0.0
        %3747 = vmatpush1.msra.mxu0 0.0
        %3748 = vmatprep.subr.mxu0 0.0
        %3749 = vmatpush1.msra.mxu0 0.0
        %3750 = vmatprep.subr.mxu0 0.0
        %3751 = vmatpush1.msra.mxu0 0.0
        %3752 = vmatprep.subr.mxu0 0.0
        %3753 = vmatpush1.msra.mxu0 0.0
        %3754 = vmatprep.subr.mxu0 0.0
        %3755 = vmatpush1.msra.mxu0 0.0
        %3756 = vmatprep.subr.mxu0 0.0
        %3757 = vmatpush1.msra.mxu0 0.0
        %3758 = vmatprep.subr.mxu0 0.0
        %3759 = vmatpush1.msra.mxu0 0.0
        %3760 = vmatprep.subr.mxu0 0.0
        %3761 = vmatpush1.msra.mxu0 0.0
        %3762 = vmatprep.subr.mxu0 0.0
        %3763 = vmatpush1.msra.mxu0 0.0
        %3764 = vmatprep.subr.mxu0 0.0
        %3765 = vmatpush1.msra.mxu0 0.0
        %3766 = vmatprep.subr.mxu0 0.0
        %3767 = vmatpush1.msra.mxu0 0.0
        %3768 = vmatprep.subr.mxu0 0.0
        %3769 = vmatpush1.msra.mxu0 0.0
        %3770 = vmatprep.subr.mxu0 0.0
        %3771 = vmatpush1.msra.mxu0 0.0
        %3772 = vmatprep.subr.mxu0 0.0
        %3773 = vmatpush1.msra.mxu0 0.0
        %3774 = vmatprep.subr.mxu0 0.0
        %3775 = vmatpush1.msra.mxu0 0.0
        %3776 = vmatprep.subr.mxu0 0.0
        %3777 = vmatpush1.msra.mxu0 0.0
        %3778 = vmatprep.subr.mxu0 0.0
        %3779 = vmatpush1.msra.mxu0 0.0
        %3780 = vmatprep.subr.mxu0 0.0
        %3781 = vmatpush1.msra.mxu0 0.0
        %3782 = vmatprep.mubr.f32.mxu0 0.0
        %3783 = vmatmul.mubr.f32.gmra.mrb[0].mxu0 %v3112
        %v3784 = vpop.f32.mrb[0].mxu0
        %v3785 = vadd.f32 0.0, %v3784
        %v3786 = vpop.f32.mrb[0].mxu0
        %3787 = vmatprep.mubr.f32.mxu0 0.0
        %3788 = vmatmul.mubr.f32.gmra.mrb[0].mxu0 %v3115
        %v3789 = vpop.f32.mrb[0].mxu0
        %v3790 = vadd.f32 0.0, %v3789
        %v3791 = vpop.f32.mrb[0].mxu0
        %3792 = vmatprep.mubr.f32.mxu0 0.0
        %3793 = vmatmul.mubr.f32.gmra.mrb[0].mxu0 %v3118
        %v3794 = vpop.f32.mrb[0].mxu0
        %v3795 = vadd.f32 0.0, %v3794
        %v3796 = vpop.f32.mrb[0].mxu0
        %3797 = vmatprep.mubr.f32.mxu0 0.0
        %3798 = vmatmul.mubr.f32.gmra.mrb[0].mxu0 %v3121
        %v3799 = vpop.f32.mrb[0].mxu0
        %v3800 = vadd.f32 0.0, %v3799
        %v3801 = vpop.f32.mrb[0].mxu0
        %3802 = vdwg.mxu0
        %3803 = vmatprep.subr.mxu0 0.0
        %3804 = vmatpush1.msra.mxu0 %v568
        %3805 = vmatprep.subr.mxu0 0.0
        %3806 = vmatpush1.msra.mxu0 %v569
        %3807 = vmatprep.subr.mxu0 0.0
        %3808 = vmatpush1.msra.mxu0 %v570
        %3809 = vmatprep.subr.mxu0 0.0
        %3810 = vmatpush1.msra.mxu0 %v571
        %3811 = vmatprep.subr.mxu0 0.0
        %3812 = vmatpush1.msra.mxu0 %v572
        %3813 = vmatprep.subr.mxu0 0.0
        %3814 = vmatpush1.msra.mxu0 %v573
        %3815 = vmatprep.subr.mxu0 0.0
        %3816 = vmatpush1.msra.mxu0 %v574
        %3817 = vmatprep.subr.mxu0 0.0
        %3818 = vmatpush1.msra.mxu0 %v575
        %3819 = vmatprep.subr.mxu0 0.0
        %3820 = vmatpush1.msra.mxu0 %v576
        %3821 = vmatprep.subr.mxu0 0.0
        %3822 = vmatpush1.msra.mxu0 %v577
        %3823 = vmatprep.subr.mxu0 0.0
        %3824 = vmatpush1.msra.mxu0 %v578
        %3825 = vmatprep.subr.mxu0 0.0
        %3826 = vmatpush1.msra.mxu0 %v579
        %3827 = vmatprep.subr.mxu0 0.0
        %3828 = vmatpush1.msra.mxu0 %v580
        %3829 = vmatprep.subr.mxu0 0.0
        %3830 = vmatpush1.msra.mxu0 %v581
        %3831 = vmatprep.subr.mxu0 0.0
        %3832 = vmatpush1.msra.mxu0 %v582
        %3833 = vmatprep.subr.mxu0 0.0
        %3834 = vmatpush1.msra.mxu0 %v583
        %3835 = vmatprep.subr.mxu0 0.0
        %3836 = vmatpush1.msra.mxu0 0.0
        %3837 = vmatprep.subr.mxu0 0.0
        %3838 = vmatpush1.msra.mxu0 0.0
        %3839 = vmatprep.subr.mxu0 0.0
        %3840 = vmatpush1.msra.mxu0 0.0
        %3841 = vmatprep.subr.mxu0 0.0
        %3842 = vmatpush1.msra.mxu0 0.0
        %3843 = vmatprep.subr.mxu0 0.0
        %3844 = vmatpush1.msra.mxu0 0.0
        %3845 = vmatprep.subr.mxu0 0.0
        %3846 = vmatpush1.msra.mxu0 0.0
        %3847 = vmatprep.subr.mxu0 0.0
        %3848 = vmatpush1.msra.mxu0 0.0
        %3849 = vmatprep.subr.mxu0 0.0
        %3850 = vmatpush1.msra.mxu0 0.0
        %3851 = vmatprep.subr.mxu0 0.0
        %3852 = vmatpush1.msra.mxu0 0.0
        %3853 = vmatprep.subr.mxu0 0.0
        %3854 = vmatpush1.msra.mxu0 0.0
        %3855 = vmatprep.subr.mxu0 0.0
        %3856 = vmatpush1.msra.mxu0 0.0
        %3857 = vmatprep.subr.mxu0 0.0
        %3858 = vmatpush1.msra.mxu0 0.0
        %3859 = vmatprep.subr.mxu0 0.0
        %3860 = vmatpush1.msra.mxu0 0.0
        %3861 = vmatprep.subr.mxu0 0.0
        %3862 = vmatpush1.msra.mxu0 0.0
        %3863 = vmatprep.subr.mxu0 0.0
        %3864 = vmatpush1.msra.mxu0 0.0
        %3865 = vmatprep.subr.mxu0 0.0
        %3866 = vmatpush1.msra.mxu0 0.0
        %3867 = vmatprep.mubr.f32.mxu0 0.0
        %3868 = vmatmul.mubr.f32.gmra.mrb[0].mxu0 %v832
        %v3869 = vpop.f32.mrb[0].mxu0
        %v3870 = vadd.f32 0.0, %v3869
        %v3871 = vpop.f32.mrb[0].mxu0
        %3872 = vmatprep.mubr.f32.mxu0 0.0
        %3873 = vmatmul.mubr.f32.gmra.mrb[0].mxu0 %v837
        %v3874 = vpop.f32.mrb[0].mxu0
        %v3875 = vadd.f32 0.0, %v3874
        %v3876 = vpop.f32.mrb[0].mxu0
        %3877 = vmatprep.mubr.f32.mxu0 0.0
        %3878 = vmatmul.mubr.f32.gmra.mrb[0].mxu0 %v842
        %v3879 = vpop.f32.mrb[0].mxu0
        %v3880 = vadd.f32 0.0, %v3879
        %v3881 = vpop.f32.mrb[0].mxu0
        %3882 = vmatprep.mubr.f32.mxu0 0.0
        %3883 = vmatmul.mubr.f32.gmra.mrb[0].mxu0 %v847
        %v3884 = vpop.f32.mrb[0].mxu0
        %v3885 = vadd.f32 0.0, %v3884
        %v3886 = vpop.f32.mrb[0].mxu0
        %3887 = vmatprep.mubr.f32.mxu0 0.0
        %3888 = vmatmul.mubr.f32.gmra.mrb[0].mxu0 %v957
        %v3889 = vpop.f32.mrb[0].mxu0
        %v3890 = vadd.f32 0.0, %v3889
        %v3891 = vpop.f32.mrb[0].mxu0
        %3892 = vmatprep.mubr.f32.mxu0 0.0
        %3893 = vmatmul.mubr.f32.gmra.mrb[0].mxu0 %v962
        %v3894 = vpop.f32.mrb[0].mxu0
        %v3895 = vadd.f32 0.0, %v3894
        %v3896 = vpop.f32.mrb[0].mxu0
        %3897 = vmatprep.mubr.f32.mxu0 0.0
        %3898 = vmatmul.mubr.f32.gmra.mrb[0].mxu0 %v967
        %v3899 = vpop.f32.mrb[0].mxu0
        %v3900 = vadd.f32 0.0, %v3899
        %v3901 = vpop.f32.mrb[0].mxu0
        %3902 = vmatprep.mubr.f32.mxu0 0.0
        %3903 = vmatmul.mubr.f32.gmra.mrb[0].mxu0 %v972
        %v3904 = vpop.f32.mrb[0].mxu0
        %v3905 = vadd.f32 0.0, %v3904
        %v3906 = vpop.f32.mrb[0].mxu0
        %3907 = vmatprep.mubr.f32.mxu0 0.0
        %3908 = vmatmul.mubr.f32.gmra.mrb[0].mxu0 %v1082
        %v3909 = vpop.f32.mrb[0].mxu0
        %v3910 = vadd.f32 0.0, %v3909
        %v3911 = vpop.f32.mrb[0].mxu0
        %3912 = vmatprep.mubr.f32.mxu0 0.0
        %3913 = vmatmul.mubr.f32.gmra.mrb[0].mxu0 %v1087
        %v3914 = vpop.f32.mrb[0].mxu0
        %v3915 = vadd.f32 0.0, %v3914
        %v3916 = vpop.f32.mrb[0].mxu0
        %3917 = vmatprep.mubr.f32.mxu0 0.0
        %3918 = vmatmul.mubr.f32.gmra.mrb[0].mxu0 %v1092
        %v3919 = vpop.f32.mrb[0].mxu0
        %v3920 = vadd.f32 0.0, %v3919
        %v3921 = vpop.f32.mrb[0].mxu0
        %3922 = vmatprep.mubr.f32.mxu0 0.0
        %3923 = vmatmul.mubr.f32.gmra.mrb[0].mxu0 %v1097
        %v3924 = vpop.f32.mrb[0].mxu0
        %v3925 = vadd.f32 0.0, %v3924
        %v3926 = vpop.f32.mrb[0].mxu0
        %3927 = vmatprep.mubr.f32.mxu0 0.0
        %3928 = vmatmul.mubr.f32.gmra.mrb[0].mxu0 %v1207
        %v3929 = vpop.f32.mrb[0].mxu0
        %v3930 = vadd.f32 0.0, %v3929
        %v3931 = vpop.f32.mrb[0].mxu0
        %3932 = vmatprep.mubr.f32.mxu0 0.0
        %3933 = vmatmul.mubr.f32.gmra.mrb[0].mxu0 %v1212
        %v3934 = vpop.f32.mrb[0].mxu0
        %v3935 = vadd.f32 0.0, %v3934
        %v3936 = vpop.f32.mrb[0].mxu0
        %3937 = vmatprep.mubr.f32.mxu0 0.0
        %3938 = vmatmul.mubr.f32.gmra.mrb[0].mxu0 %v1217
        %v3939 = vpop.f32.mrb[0].mxu0
        %v3940 = vadd.f32 0.0, %v3939
        %v3941 = vpop.f32.mrb[0].mxu0
        %3942 = vmatprep.mubr.f32.mxu0 0.0
        %3943 = vmatmul.mubr.f32.gmra.mrb[0].mxu0 %v1222
        %v3944 = vpop.f32.mrb[0].mxu0
        %v3945 = vadd.f32 0.0, %v3944
        %v3946 = vpop.f32.mrb[0].mxu0
        %3947 = vmatprep.mubr.f32.mxu0 0.0
        %3948 = vmatmul.mubr.f32.gmra.mrb[0].mxu0 %v1332
        %v3949 = vpop.f32.mrb[0].mxu0
        %v3950 = vadd.f32 0.0, %v3949
        %v3951 = vpop.f32.mrb[0].mxu0
        %3952 = vmatprep.mubr.f32.mxu0 0.0
        %3953 = vmatmul.mubr.f32.gmra.mrb[0].mxu0 %v1337
        %v3954 = vpop.f32.mrb[0].mxu0
        %v3955 = vadd.f32 0.0, %v3954
        %v3956 = vpop.f32.mrb[0].mxu0
        %3957 = vmatprep.mubr.f32.mxu0 0.0
        %3958 = vmatmul.mubr.f32.gmra.mrb[0].mxu0 %v1342
        %v3959 = vpop.f32.mrb[0].mxu0
        %v3960 = vadd.f32 0.0, %v3959
        %v3961 = vpop.f32.mrb[0].mxu0
        %3962 = vmatprep.mubr.f32.mxu0 0.0
        %3963 = vmatmul.mubr.f32.gmra.mrb[0].mxu0 %v1347
        %v3964 = vpop.f32.mrb[0].mxu0
        %v3965 = vadd.f32 0.0, %v3964
        %v3966 = vpop.f32.mrb[0].mxu0
        %3967 = vmatprep.mubr.f32.mxu0 0.0
        %3968 = vmatmul.mubr.f32.gmra.mrb[0].mxu0 %v1457
        %v3969 = vpop.f32.mrb[0].mxu0
        %v3970 = vadd.f32 0.0, %v3969
        %v3971 = vpop.f32.mrb[0].mxu0
        %3972 = vmatprep.mubr.f32.mxu0 0.0
        %3973 = vmatmul.mubr.f32.gmra.mrb[0].mxu0 %v1462
        %v3974 = vpop.f32.mrb[0].mxu0
        %v3975 = vadd.f32 0.0, %v3974
        %v3976 = vpop.f32.mrb[0].mxu0
        %3977 = vmatprep.mubr.f32.mxu0 0.0
        %3978 = vmatmul.mubr.f32.gmra.mrb[0].mxu0 %v1467
        %v3979 = vpop.f32.mrb[0].mxu0
        %v3980 = vadd.f32 0.0, %v3979
        %v3981 = vpop.f32.mrb[0].mxu0
        %3982 = vmatprep.mubr.f32.mxu0 0.0
        %3983 = vmatmul.mubr.f32.gmra.mrb[0].mxu0 %v1472
        %v3984 = vpop.f32.mrb[0].mxu0
        %v3985 = vadd.f32 0.0, %v3984
        %v3986 = vpop.f32.mrb[0].mxu0
        %3987 = vmatprep.mubr.f32.mxu0 0.0
        %3988 = vmatmul.mubr.f32.gmra.mrb[0].mxu0 %v1582
        %v3989 = vpop.f32.mrb[0].mxu0
        %v3990 = vadd.f32 0.0, %v3989
        %v3991 = vpop.f32.mrb[0].mxu0
        %3992 = vmatprep.mubr.f32.mxu0 0.0
        %3993 = vmatmul.mubr.f32.gmra.mrb[0].mxu0 %v1587
        %v3994 = vpop.f32.mrb[0].mxu0
        %v3995 = vadd.f32 0.0, %v3994
        %v3996 = vpop.f32.mrb[0].mxu0
        %3997 = vmatprep.mubr.f32.mxu0 0.0
        %3998 = vmatmul.mubr.f32.gmra.mrb[0].mxu0 %v1592
        %v3999 = vpop.f32.mrb[0].mxu0
        %v4000 = vadd.f32 0.0, %v3999
        %v4001 = vpop.f32.mrb[0].mxu0
        %4002 = vmatprep.mubr.f32.mxu0 0.0
        %4003 = vmatmul.mubr.f32.gmra.mrb[0].mxu0 %v1597
        %v4004 = vpop.f32.mrb[0].mxu0
        %v4005 = vadd.f32 0.0, %v4004
        %v4006 = vpop.f32.mrb[0].mxu0
        %4007 = vmatprep.mubr.f32.mxu0 0.0
        %4008 = vmatmul.mubr.f32.gmra.mrb[0].mxu0 %v1707
        %v4009 = vpop.f32.mrb[0].mxu0
        %v4010 = vadd.f32 0.0, %v4009
        %v4011 = vpop.f32.mrb[0].mxu0
        %4012 = vmatprep.mubr.f32.mxu0 0.0
        %4013 = vmatmul.mubr.f32.gmra.mrb[0].mxu0 %v1712
        %v4014 = vpop.f32.mrb[0].mxu0
        %v4015 = vadd.f32 0.0, %v4014
        %v4016 = vpop.f32.mrb[0].mxu0
        %4017 = vmatprep.mubr.f32.mxu0 0.0
        %4018 = vmatmul.mubr.f32.gmra.mrb[0].mxu0 %v1717
        %v4019 = vpop.f32.mrb[0].mxu0
        %v4020 = vadd.f32 0.0, %v4019
        %v4021 = vpop.f32.mrb[0].mxu0
        %4022 = vmatprep.mubr.f32.mxu0 0.0
        %4023 = vmatmul.mubr.f32.gmra.mrb[0].mxu0 %v1722
        %v4024 = vpop.f32.mrb[0].mxu0
        %v4025 = vadd.f32 0.0, %v4024
        %v4026 = vpop.f32.mrb[0].mxu0
        %4027 = vdwg.mxu0
        %v4029 = vsel %vm2193, %v514, 0
        %v4032 = vsel %vm2193, %v515, 0
        %v4035 = vsel %vm2193, %v516, 0
        %v4038 = vsel %vm2193, %v517, 0
        %4040 = vmatprep.subr.mxu0 0.0
        %4041 = vmatpush1.msra.mxu0 %v1930
        %4042 = vmatprep.subr.mxu0 0.0
        %4043 = vmatpush1.msra.mxu0 0.0
        %4044 = vmatprep.subr.mxu0 0.0
        %4045 = vmatpush1.msra.mxu0 0.0
        %4046 = vmatprep.subr.mxu0 0.0
        %4047 = vmatpush1.msra.mxu0 0.0
        %4048 = vmatprep.subr.mxu0 0.0
        %4049 = vmatpush1.msra.mxu0 0.0
        %4050 = vmatprep.subr.mxu0 0.0
        %4051 = vmatpush1.msra.mxu0 0.0
        %4052 = vmatprep.subr.mxu0 0.0
        %4053 = vmatpush1.msra.mxu0 0.0
        %4054 = vmatprep.subr.mxu0 0.0
        %4055 = vmatpush1.msra.mxu0 0.0
        %4056 = vmatprep.subr.mxu0 0.0
        %4057 = vmatpush1.msra.mxu0 0.0
        %4058 = vmatprep.subr.mxu0 0.0
        %4059 = vmatpush1.msra.mxu0 0.0
        %4060 = vmatprep.subr.mxu0 0.0
        %4061 = vmatpush1.msra.mxu0 0.0
        %4062 = vmatprep.subr.mxu0 0.0
        %4063 = vmatpush1.msra.mxu0 0.0
        %4064 = vmatprep.subr.mxu0 0.0
        %4065 = vmatpush1.msra.mxu0 0.0
        %4066 = vmatprep.subr.mxu0 0.0
        %4067 = vmatpush1.msra.mxu0 0.0
        %4068 = vmatprep.subr.mxu0 0.0
        %4069 = vmatpush1.msra.mxu0 0.0
        %4070 = vmatprep.subr.mxu0 0.0
        %4071 = vmatpush1.msra.mxu0 0.0
        %4072 = vmatprep.subr.mxu0 0.0
        %4073 = vmatpush1.msra.mxu0 0.0
        %4074 = vmatprep.subr.mxu0 0.0
        %4075 = vmatpush1.msra.mxu0 0.0
        %4076 = vmatprep.subr.mxu0 0.0
        %4077 = vmatpush1.msra.mxu0 0.0
        %4078 = vmatprep.subr.mxu0 0.0
        %4079 = vmatpush1.msra.mxu0 0.0
        %4080 = vmatprep.subr.mxu0 0.0
        %4081 = vmatpush1.msra.mxu0 0.0
        %4082 = vmatprep.subr.mxu0 0.0
        %4083 = vmatpush1.msra.mxu0 0.0
        %4084 = vmatprep.subr.mxu0 0.0
        %4085 = vmatpush1.msra.mxu0 0.0
        %4086 = vmatprep.subr.mxu0 0.0
        %4087 = vmatpush1.msra.mxu0 0.0
        %4088 = vmatprep.subr.mxu0 0.0
        %4089 = vmatpush1.msra.mxu0 0.0
        %4090 = vmatprep.subr.mxu0 0.0
        %4091 = vmatpush1.msra.mxu0 0.0
        %4092 = vmatprep.subr.mxu0 0.0
        %4093 = vmatpush1.msra.mxu0 0.0
        %4094 = vmatprep.subr.mxu0 0.0
        %4095 = vmatpush1.msra.mxu0 0.0
        %4096 = vmatprep.subr.mxu0 0.0
        %4097 = vmatpush1.msra.mxu0 0.0
        %4098 = vmatprep.subr.mxu0 0.0
        %4099 = vmatpush1.msra.mxu0 0.0
        %4100 = vmatprep.subr.mxu0 0.0
        %4101 = vmatpush1.msra.mxu0 0.0
        %4102 = vmatprep.subr.mxu0 0.0
        %4103 = vmatpush1.msra.mxu0 0.0
        %4104 = vmatprep.mubr.f32.mxu0 0.0
        %4105 = vmatmul.mubr.f32.gmra.mrb[0].mxu0 %v4029
        %v4106 = vpop.f32.mrb[0].mxu0
        %v4107 = vadd.f32 0.0, %v4106
        %v4108 = vpop.f32.mrb[0].mxu0
        %4109 = vmatprep.mubr.f32.mxu0 0.0
        %4110 = vmatmul.mubr.f32.gmra.mrb[0].mxu0 %v4032
        %v4111 = vpop.f32.mrb[0].mxu0
        %v4112 = vadd.f32 0.0, %v4111
        %v4113 = vpop.f32.mrb[0].mxu0
        %4114 = vmatprep.mubr.f32.mxu0 0.0
        %4115 = vmatmul.mubr.f32.gmra.mrb[0].mxu0 %v4035
        %v4116 = vpop.f32.mrb[0].mxu0
        %v4117 = vadd.f32 0.0, %v4116
        %v4118 = vpop.f32.mrb[0].mxu0
        %4119 = vmatprep.mubr.f32.mxu0 0.0
        %4120 = vmatmul.mubr.f32.gmra.mrb[0].mxu0 %v4038
        %v4121 = vpop.f32.mrb[0].mxu0
        %v4122 = vadd.f32 0.0, %v4121
        %v4123 = vpop.f32.mrb[0].mxu0
        %4124 = vdwg.mxu0
        %4125 = vmatprep.subr.mxu0 0.0
        %4126 = vmatpush1.msra.mxu0 %v1935
        %4127 = vmatprep.subr.mxu0 0.0
        %4128 = vmatpush1.msra.mxu0 0.0
        %4129 = vmatprep.subr.mxu0 0.0
        %4130 = vmatpush1.msra.mxu0 0.0
        %4131 = vmatprep.subr.mxu0 0.0
        %4132 = vmatpush1.msra.mxu0 0.0
        %4133 = vmatprep.subr.mxu0 0.0
        %4134 = vmatpush1.msra.mxu0 0.0
        %4135 = vmatprep.subr.mxu0 0.0
        %4136 = vmatpush1.msra.mxu0 0.0
        %4137 = vmatprep.subr.mxu0 0.0
        %4138 = vmatpush1.msra.mxu0 0.0
        %4139 = vmatprep.subr.mxu0 0.0
        %4140 = vmatpush1.msra.mxu0 0.0
        %4141 = vmatprep.subr.mxu0 0.0
        %4142 = vmatpush1.msra.mxu0 0.0
        %4143 = vmatprep.subr.mxu0 0.0
        %4144 = vmatpush1.msra.mxu0 0.0
        %4145 = vmatprep.subr.mxu0 0.0
        %4146 = vmatpush1.msra.mxu0 0.0
        %4147 = vmatprep.subr.mxu0 0.0
        %4148 = vmatpush1.msra.mxu0 0.0
        %4149 = vmatprep.subr.mxu0 0.0
        %4150 = vmatpush1.msra.mxu0 0.0
        %4151 = vmatprep.subr.mxu0 0.0
        %4152 = vmatpush1.msra.mxu0 0.0
        %4153 = vmatprep.subr.mxu0 0.0
        %4154 = vmatpush1.msra.mxu0 0.0
        %4155 = vmatprep.subr.mxu0 0.0
        %4156 = vmatpush1.msra.mxu0 0.0
        %4157 = vmatprep.subr.mxu0 0.0
        %4158 = vmatpush1.msra.mxu0 0.0
        %4159 = vmatprep.subr.mxu0 0.0
        %4160 = vmatpush1.msra.mxu0 0.0
        %4161 = vmatprep.subr.mxu0 0.0
        %4162 = vmatpush1.msra.mxu0 0.0
        %4163 = vmatprep.subr.mxu0 0.0
        %4164 = vmatpush1.msra.mxu0 0.0
        %4165 = vmatprep.subr.mxu0 0.0
        %4166 = vmatpush1.msra.mxu0 0.0
        %4167 = vmatprep.subr.mxu0 0.0
        %4168 = vmatpush1.msra.mxu0 0.0
        %4169 = vmatprep.subr.mxu0 0.0
        %4170 = vmatpush1.msra.mxu0 0.0
        %4171 = vmatprep.subr.mxu0 0.0
        %4172 = vmatpush1.msra.mxu0 0.0
        %4173 = vmatprep.subr.mxu0 0.0
        %4174 = vmatpush1.msra.mxu0 0.0
        %4175 = vmatprep.subr.mxu0 0.0
        %4176 = vmatpush1.msra.mxu0 0.0
        %4177 = vmatprep.subr.mxu0 0.0
        %4178 = vmatpush1.msra.mxu0 0.0
        %4179 = vmatprep.subr.mxu0 0.0
        %4180 = vmatpush1.msra.mxu0 0.0
        %4181 = vmatprep.subr.mxu0 0.0
        %4182 = vmatpush1.msra.mxu0 0.0
        %4183 = vmatprep.subr.mxu0 0.0
        %4184 = vmatpush1.msra.mxu0 0.0
        %4185 = vmatprep.subr.mxu0 0.0
        %4186 = vmatpush1.msra.mxu0 0.0
        %4187 = vmatprep.subr.mxu0 0.0
        %4188 = vmatpush1.msra.mxu0 0.0
        %4189 = vmatprep.mubr.f32.mxu0 0.0
        %4190 = vmatmul.mubr.f32.gmra.mrb[0].mxu0 %v4029
        %v4191 = vpop.f32.mrb[0].mxu0
        %v4192 = vadd.f32 0.0, %v4191
        %v4193 = vpop.f32.mrb[0].mxu0
        %4194 = vmatprep.mubr.f32.mxu0 0.0
        %4195 = vmatmul.mubr.f32.gmra.mrb[0].mxu0 %v4032
        %v4196 = vpop.f32.mrb[0].mxu0
        %v4197 = vadd.f32 0.0, %v4196
        %v4198 = vpop.f32.mrb[0].mxu0
        %4199 = vmatprep.mubr.f32.mxu0 0.0
        %4200 = vmatmul.mubr.f32.gmra.mrb[0].mxu0 %v4035
        %v4201 = vpop.f32.mrb[0].mxu0
        %v4202 = vadd.f32 0.0, %v4201
        %v4203 = vpop.f32.mrb[0].mxu0
        %4204 = vmatprep.mubr.f32.mxu0 0.0
        %4205 = vmatmul.mubr.f32.gmra.mrb[0].mxu0 %v4038
        %v4206 = vpop.f32.mrb[0].mxu0
        %v4207 = vadd.f32 0.0, %v4206
        %v4208 = vpop.f32.mrb[0].mxu0
        %4209 = vdwg.mxu0
        %4210 = vmatprep.subr.mxu0 0.0
        %4211 = vmatpush1.msra.mxu0 %v1940
        %4212 = vmatprep.subr.mxu0 0.0
        %4213 = vmatpush1.msra.mxu0 0.0
        %4214 = vmatprep.subr.mxu0 0.0
        %4215 = vmatpush1.msra.mxu0 0.0
        %4216 = vmatprep.subr.mxu0 0.0
        %4217 = vmatpush1.msra.mxu0 0.0
        %4218 = vmatprep.subr.mxu0 0.0
        %4219 = vmatpush1.msra.mxu0 0.0
        %4220 = vmatprep.subr.mxu0 0.0
        %4221 = vmatpush1.msra.mxu0 0.0
        %4222 = vmatprep.subr.mxu0 0.0
        %4223 = vmatpush1.msra.mxu0 0.0
        %4224 = vmatprep.subr.mxu0 0.0
        %4225 = vmatpush1.msra.mxu0 0.0
        %4226 = vmatprep.subr.mxu0 0.0
        %4227 = vmatpush1.msra.mxu0 0.0
        %4228 = vmatprep.subr.mxu0 0.0
        %4229 = vmatpush1.msra.mxu0 0.0
        %4230 = vmatprep.subr.mxu0 0.0
        %4231 = vmatpush1.msra.mxu0 0.0
        %4232 = vmatprep.subr.mxu0 0.0
        %4233 = vmatpush1.msra.mxu0 0.0
        %4234 = vmatprep.subr.mxu0 0.0
        %4235 = vmatpush1.msra.mxu0 0.0
        %4236 = vmatprep.subr.mxu0 0.0
        %4237 = vmatpush1.msra.mxu0 0.0
        %4238 = vmatprep.subr.mxu0 0.0
        %4239 = vmatpush1.msra.mxu0 0.0
        %4240 = vmatprep.subr.mxu0 0.0
        %4241 = vmatpush1.msra.mxu0 0.0
        %4242 = vmatprep.subr.mxu0 0.0
        %4243 = vmatpush1.msra.mxu0 0.0
        %4244 = vmatprep.subr.mxu0 0.0
        %4245 = vmatpush1.msra.mxu0 0.0
        %4246 = vmatprep.subr.mxu0 0.0
        %4247 = vmatpush1.msra.mxu0 0.0
        %4248 = vmatprep.subr.mxu0 0.0
        %4249 = vmatpush1.msra.mxu0 0.0
        %4250 = vmatprep.subr.mxu0 0.0
        %4251 = vmatpush1.msra.mxu0 0.0
        %4252 = vmatprep.subr.mxu0 0.0
        %4253 = vmatpush1.msra.mxu0 0.0
        %4254 = vmatprep.subr.mxu0 0.0
        %4255 = vmatpush1.msra.mxu0 0.0
        %4256 = vmatprep.subr.mxu0 0.0
        %4257 = vmatpush1.msra.mxu0 0.0
        %4258 = vmatprep.subr.mxu0 0.0
        %4259 = vmatpush1.msra.mxu0 0.0
        %4260 = vmatprep.subr.mxu0 0.0
        %4261 = vmatpush1.msra.mxu0 0.0
        %4262 = vmatprep.subr.mxu0 0.0
        %4263 = vmatpush1.msra.mxu0 0.0
        %4264 = vmatprep.subr.mxu0 0.0
        %4265 = vmatpush1.msra.mxu0 0.0
        %4266 = vmatprep.subr.mxu0 0.0
        %4267 = vmatpush1.msra.mxu0 0.0
        %4268 = vmatprep.subr.mxu0 0.0
        %4269 = vmatpush1.msra.mxu0 0.0
        %4270 = vmatprep.subr.mxu0 0.0
        %4271 = vmatpush1.msra.mxu0 0.0
        %4272 = vmatprep.subr.mxu0 0.0
        %4273 = vmatpush1.msra.mxu0 0.0
        %4274 = vmatprep.mubr.f32.mxu0 0.0
        %4275 = vmatmul.mubr.f32.gmra.mrb[0].mxu0 %v4029
        %v4276 = vpop.f32.mrb[0].mxu0
        %v4277 = vadd.f32 0.0, %v4276
        %v4278 = vpop.f32.mrb[0].mxu0
        %4279 = vmatprep.mubr.f32.mxu0 0.0
        %4280 = vmatmul.mubr.f32.gmra.mrb[0].mxu0 %v4032
        %v4281 = vpop.f32.mrb[0].mxu0
        %v4282 = vadd.f32 0.0, %v4281
        %v4283 = vpop.f32.mrb[0].mxu0
        %4284 = vmatprep.mubr.f32.mxu0 0.0
        %4285 = vmatmul.mubr.f32.gmra.mrb[0].mxu0 %v4035
        %v4286 = vpop.f32.mrb[0].mxu0
        %v4287 = vadd.f32 0.0, %v4286
        %v4288 = vpop.f32.mrb[0].mxu0
        %4289 = vmatprep.mubr.f32.mxu0 0.0
        %4290 = vmatmul.mubr.f32.gmra.mrb[0].mxu0 %v4038
        %v4291 = vpop.f32.mrb[0].mxu0
        %v4292 = vadd.f32 0.0, %v4291
        %v4293 = vpop.f32.mrb[0].mxu0
        %4294 = vdwg.mxu0
        %4295 = vmatprep.subr.mxu0 0.0
        %4296 = vmatpush1.msra.mxu0 %v1945
        %4297 = vmatprep.subr.mxu0 0.0
        %4298 = vmatpush1.msra.mxu0 0.0
        %4299 = vmatprep.subr.mxu0 0.0
        %4300 = vmatpush1.msra.mxu0 0.0
        %4301 = vmatprep.subr.mxu0 0.0
        %4302 = vmatpush1.msra.mxu0 0.0
        %4303 = vmatprep.subr.mxu0 0.0
        %4304 = vmatpush1.msra.mxu0 0.0
        %4305 = vmatprep.subr.mxu0 0.0
        %4306 = vmatpush1.msra.mxu0 0.0
        %4307 = vmatprep.subr.mxu0 0.0
        %4308 = vmatpush1.msra.mxu0 0.0
        %4309 = vmatprep.subr.mxu0 0.0
        %4310 = vmatpush1.msra.mxu0 0.0
        %4311 = vmatprep.subr.mxu0 0.0
        %4312 = vmatpush1.msra.mxu0 0.0
        %4313 = vmatprep.subr.mxu0 0.0
        %4314 = vmatpush1.msra.mxu0 0.0
        %4315 = vmatprep.subr.mxu0 0.0
        %4316 = vmatpush1.msra.mxu0 0.0
        %4317 = vmatprep.subr.mxu0 0.0
        %4318 = vmatpush1.msra.mxu0 0.0
        %4319 = vmatprep.subr.mxu0 0.0
        %4320 = vmatpush1.msra.mxu0 0.0
        %4321 = vmatprep.subr.mxu0 0.0
        %4322 = vmatpush1.msra.mxu0 0.0
        %4323 = vmatprep.subr.mxu0 0.0
        %4324 = vmatpush1.msra.mxu0 0.0
        %4325 = vmatprep.subr.mxu0 0.0
        %4326 = vmatpush1.msra.mxu0 0.0
        %4327 = vmatprep.subr.mxu0 0.0
        %4328 = vmatpush1.msra.mxu0 0.0
        %4329 = vmatprep.subr.mxu0 0.0
        %4330 = vmatpush1.msra.mxu0 0.0
        %4331 = vmatprep.subr.mxu0 0.0
        %4332 = vmatpush1.msra.mxu0 0.0
        %4333 = vmatprep.subr.mxu0 0.0
        %4334 = vmatpush1.msra.mxu0 0.0
        %4335 = vmatprep.subr.mxu0 0.0
        %4336 = vmatpush1.msra.mxu0 0.0
        %4337 = vmatprep.subr.mxu0 0.0
        %4338 = vmatpush1.msra.mxu0 0.0
        %4339 = vmatprep.subr.mxu0 0.0
        %4340 = vmatpush1.msra.mxu0 0.0
        %4341 = vmatprep.subr.mxu0 0.0
        %4342 = vmatpush1.msra.mxu0 0.0
        %4343 = vmatprep.subr.mxu0 0.0
        %4344 = vmatpush1.msra.mxu0 0.0
        %4345 = vmatprep.subr.mxu0 0.0
        %4346 = vmatpush1.msra.mxu0 0.0
        %4347 = vmatprep.subr.mxu0 0.0
        %4348 = vmatpush1.msra.mxu0 0.0
        %4349 = vmatprep.subr.mxu0 0.0
        %4350 = vmatpush1.msra.mxu0 0.0
        %4351 = vmatprep.subr.mxu0 0.0
        %4352 = vmatpush1.msra.mxu0 0.0
        %4353 = vmatprep.subr.mxu0 0.0
        %4354 = vmatpush1.msra.mxu0 0.0
        %4355 = vmatprep.subr.mxu0 0.0
        %4356 = vmatpush1.msra.mxu0 0.0
        %4357 = vmatprep.subr.mxu0 0.0
        %4358 = vmatpush1.msra.mxu0 0.0
        %4359 = vmatprep.mubr.f32.mxu0 0.0
        %4360 = vmatmul.mubr.f32.gmra.mrb[0].mxu0 %v4029
        %v4361 = vpop.f32.mrb[0].mxu0
        %v4362 = vadd.f32 0.0, %v4361
        %v4363 = vpop.f32.mrb[0].mxu0
        %4364 = vmatprep.mubr.f32.mxu0 0.0
        %4365 = vmatmul.mubr.f32.gmra.mrb[0].mxu0 %v4032
        %v4366 = vpop.f32.mrb[0].mxu0
        %v4367 = vadd.f32 0.0, %v4366
        %v4368 = vpop.f32.mrb[0].mxu0
        %4369 = vmatprep.mubr.f32.mxu0 0.0
        %4370 = vmatmul.mubr.f32.gmra.mrb[0].mxu0 %v4035
        %v4371 = vpop.f32.mrb[0].mxu0
        %v4372 = vadd.f32 0.0, %v4371
        %v4373 = vpop.f32.mrb[0].mxu0
        %4374 = vmatprep.mubr.f32.mxu0 0.0
        %4375 = vmatmul.mubr.f32.gmra.mrb[0].mxu0 %v4038
        %v4376 = vpop.f32.mrb[0].mxu0
        %v4377 = vadd.f32 0.0, %v4376
        %v4378 = vpop.f32.mrb[0].mxu0
        %4379 = vdwg.mxu0
        %4380 = vmatprep.subr.mxu0 0.0
        %4381 = vmatpush1.msra.mxu0 %v1950
        %4382 = vmatprep.subr.mxu0 0.0
        %4383 = vmatpush1.msra.mxu0 0.0
        %4384 = vmatprep.subr.mxu0 0.0
        %4385 = vmatpush1.msra.mxu0 0.0
        %4386 = vmatprep.subr.mxu0 0.0
        %4387 = vmatpush1.msra.mxu0 0.0
        %4388 = vmatprep.subr.mxu0 0.0
        %4389 = vmatpush1.msra.mxu0 0.0
        %4390 = vmatprep.subr.mxu0 0.0
        %4391 = vmatpush1.msra.mxu0 0.0
        %4392 = vmatprep.subr.mxu0 0.0
        %4393 = vmatpush1.msra.mxu0 0.0
        %4394 = vmatprep.subr.mxu0 0.0
        %4395 = vmatpush1.msra.mxu0 0.0
        %4396 = vmatprep.subr.mxu0 0.0
        %4397 = vmatpush1.msra.mxu0 0.0
        %4398 = vmatprep.subr.mxu0 0.0
        %4399 = vmatpush1.msra.mxu0 0.0
        %4400 = vmatprep.subr.mxu0 0.0
        %4401 = vmatpush1.msra.mxu0 0.0
        %4402 = vmatprep.subr.mxu0 0.0
        %4403 = vmatpush1.msra.mxu0 0.0
        %4404 = vmatprep.subr.mxu0 0.0
        %4405 = vmatpush1.msra.mxu0 0.0
        %4406 = vmatprep.subr.mxu0 0.0
        %4407 = vmatpush1.msra.mxu0 0.0
        %4408 = vmatprep.subr.mxu0 0.0
        %4409 = vmatpush1.msra.mxu0 0.0
        %4410 = vmatprep.subr.mxu0 0.0
        %4411 = vmatpush1.msra.mxu0 0.0
        %4412 = vmatprep.subr.mxu0 0.0
        %4413 = vmatpush1.msra.mxu0 0.0
        %4414 = vmatprep.subr.mxu0 0.0
        %4415 = vmatpush1.msra.mxu0 0.0
        %4416 = vmatprep.subr.mxu0 0.0
        %4417 = vmatpush1.msra.mxu0 0.0
        %4418 = vmatprep.subr.mxu0 0.0
        %4419 = vmatpush1.msra.mxu0 0.0
        %4420 = vmatprep.subr.mxu0 0.0
        %4421 = vmatpush1.msra.mxu0 0.0
        %4422 = vmatprep.subr.mxu0 0.0
        %4423 = vmatpush1.msra.mxu0 0.0
        %4424 = vmatprep.subr.mxu0 0.0
        %4425 = vmatpush1.msra.mxu0 0.0
        %4426 = vmatprep.subr.mxu0 0.0
        %4427 = vmatpush1.msra.mxu0 0.0
        %4428 = vmatprep.subr.mxu0 0.0
        %4429 = vmatpush1.msra.mxu0 0.0
        %4430 = vmatprep.subr.mxu0 0.0
        %4431 = vmatpush1.msra.mxu0 0.0
        %4432 = vmatprep.subr.mxu0 0.0
        %4433 = vmatpush1.msra.mxu0 0.0
        %4434 = vmatprep.subr.mxu0 0.0
        %4435 = vmatpush1.msra.mxu0 0.0
        %4436 = vmatprep.subr.mxu0 0.0
        %4437 = vmatpush1.msra.mxu0 0.0
        %4438 = vmatprep.subr.mxu0 0.0
        %4439 = vmatpush1.msra.mxu0 0.0
        %4440 = vmatprep.subr.mxu0 0.0
        %4441 = vmatpush1.msra.mxu0 0.0
        %4442 = vmatprep.subr.mxu0 0.0
        %4443 = vmatpush1.msra.mxu0 0.0
        %4444 = vmatprep.mubr.f32.mxu0 0.0
        %4445 = vmatmul.mubr.f32.gmra.mrb[0].mxu0 %v4029
        %v4446 = vpop.f32.mrb[0].mxu0
        %v4447 = vadd.f32 0.0, %v4446
        %v4448 = vpop.f32.mrb[0].mxu0
        %4449 = vmatprep.mubr.f32.mxu0 0.0
        %4450 = vmatmul.mubr.f32.gmra.mrb[0].mxu0 %v4032
        %v4451 = vpop.f32.mrb[0].mxu0
        %v4452 = vadd.f32 0.0, %v4451
        %v4453 = vpop.f32.mrb[0].mxu0
        %4454 = vmatprep.mubr.f32.mxu0 0.0
        %4455 = vmatmul.mubr.f32.gmra.mrb[0].mxu0 %v4035
        %v4456 = vpop.f32.mrb[0].mxu0
        %v4457 = vadd.f32 0.0, %v4456
        %v4458 = vpop.f32.mrb[0].mxu0
        %4459 = vmatprep.mubr.f32.mxu0 0.0
        %4460 = vmatmul.mubr.f32.gmra.mrb[0].mxu0 %v4038
        %v4461 = vpop.f32.mrb[0].mxu0
        %v4462 = vadd.f32 0.0, %v4461
        %v4463 = vpop.f32.mrb[0].mxu0
        %4464 = vdwg.mxu0
        %4465 = vmatprep.subr.mxu0 0.0
        %4466 = vmatpush1.msra.mxu0 %v1955
        %4467 = vmatprep.subr.mxu0 0.0
        %4468 = vmatpush1.msra.mxu0 0.0
        %4469 = vmatprep.subr.mxu0 0.0
        %4470 = vmatpush1.msra.mxu0 0.0
        %4471 = vmatprep.subr.mxu0 0.0
        %4472 = vmatpush1.msra.mxu0 0.0
        %4473 = vmatprep.subr.mxu0 0.0
        %4474 = vmatpush1.msra.mxu0 0.0
        %4475 = vmatprep.subr.mxu0 0.0
        %4476 = vmatpush1.msra.mxu0 0.0
        %4477 = vmatprep.subr.mxu0 0.0
        %4478 = vmatpush1.msra.mxu0 0.0
        %4479 = vmatprep.subr.mxu0 0.0
        %4480 = vmatpush1.msra.mxu0 0.0
        %4481 = vmatprep.subr.mxu0 0.0
        %4482 = vmatpush1.msra.mxu0 0.0
        %4483 = vmatprep.subr.mxu0 0.0
        %4484 = vmatpush1.msra.mxu0 0.0
        %4485 = vmatprep.subr.mxu0 0.0
        %4486 = vmatpush1.msra.mxu0 0.0
        %4487 = vmatprep.subr.mxu0 0.0
        %4488 = vmatpush1.msra.mxu0 0.0
        %4489 = vmatprep.subr.mxu0 0.0
        %4490 = vmatpush1.msra.mxu0 0.0
        %4491 = vmatprep.subr.mxu0 0.0
        %4492 = vmatpush1.msra.mxu0 0.0
        %4493 = vmatprep.subr.mxu0 0.0
        %4494 = vmatpush1.msra.mxu0 0.0
        %4495 = vmatprep.subr.mxu0 0.0
        %4496 = vmatpush1.msra.mxu0 0.0
        %4497 = vmatprep.subr.mxu0 0.0
        %4498 = vmatpush1.msra.mxu0 0.0
        %4499 = vmatprep.subr.mxu0 0.0
        %4500 = vmatpush1.msra.mxu0 0.0
        %4501 = vmatprep.subr.mxu0 0.0
        %4502 = vmatpush1.msra.mxu0 0.0
        %4503 = vmatprep.subr.mxu0 0.0
        %4504 = vmatpush1.msra.mxu0 0.0
        %4505 = vmatprep.subr.mxu0 0.0
        %4506 = vmatpush1.msra.mxu0 0.0
        %4507 = vmatprep.subr.mxu0 0.0
        %4508 = vmatpush1.msra.mxu0 0.0
        %4509 = vmatprep.subr.mxu0 0.0
        %4510 = vmatpush1.msra.mxu0 0.0
        %4511 = vmatprep.subr.mxu0 0.0
        %4512 = vmatpush1.msra.mxu0 0.0
        %4513 = vmatprep.subr.mxu0 0.0
        %4514 = vmatpush1.msra.mxu0 0.0
        %4515 = vmatprep.subr.mxu0 0.0
        %4516 = vmatpush1.msra.mxu0 0.0
        %4517 = vmatprep.subr.mxu0 0.0
        %4518 = vmatpush1.msra.mxu0 0.0
        %4519 = vmatprep.subr.mxu0 0.0
        %4520 = vmatpush1.msra.mxu0 0.0
        %4521 = vmatprep.subr.mxu0 0.0
        %4522 = vmatpush1.msra.mxu0 0.0
        %4523 = vmatprep.subr.mxu0 0.0
        %4524 = vmatpush1.msra.mxu0 0.0
        %4525 = vmatprep.subr.mxu0 0.0
        %4526 = vmatpush1.msra.mxu0 0.0
        %4527 = vmatprep.subr.mxu0 0.0
        %4528 = vmatpush1.msra.mxu0 0.0
        %4529 = vmatprep.mubr.f32.mxu0 0.0
        %4530 = vmatmul.mubr.f32.gmra.mrb[0].mxu0 %v4029
        %v4531 = vpop.f32.mrb[0].mxu0
        %v4532 = vadd.f32 0.0, %v4531
        %v4533 = vpop.f32.mrb[0].mxu0
        %4534 = vmatprep.mubr.f32.mxu0 0.0
        %4535 = vmatmul.mubr.f32.gmra.mrb[0].mxu0 %v4032
        %v4536 = vpop.f32.mrb[0].mxu0
        %v4537 = vadd.f32 0.0, %v4536
        %v4538 = vpop.f32.mrb[0].mxu0
        %4539 = vmatprep.mubr.f32.mxu0 0.0
        %4540 = vmatmul.mubr.f32.gmra.mrb[0].mxu0 %v4035
        %v4541 = vpop.f32.mrb[0].mxu0
        %v4542 = vadd.f32 0.0, %v4541
        %v4543 = vpop.f32.mrb[0].mxu0
        %4544 = vmatprep.mubr.f32.mxu0 0.0
        %4545 = vmatmul.mubr.f32.gmra.mrb[0].mxu0 %v4038
        %v4546 = vpop.f32.mrb[0].mxu0
        %v4547 = vadd.f32 0.0, %v4546
        %v4548 = vpop.f32.mrb[0].mxu0
        %4549 = vdwg.mxu0
        %4550 = vmatprep.subr.mxu0 0.0
        %4551 = vmatpush1.msra.mxu0 %v1960
        %4552 = vmatprep.subr.mxu0 0.0
        %4553 = vmatpush1.msra.mxu0 0.0
        %4554 = vmatprep.subr.mxu0 0.0
        %4555 = vmatpush1.msra.mxu0 0.0
        %4556 = vmatprep.subr.mxu0 0.0
        %4557 = vmatpush1.msra.mxu0 0.0
        %4558 = vmatprep.subr.mxu0 0.0
        %4559 = vmatpush1.msra.mxu0 0.0
        %4560 = vmatprep.subr.mxu0 0.0
        %4561 = vmatpush1.msra.mxu0 0.0
        %4562 = vmatprep.subr.mxu0 0.0
        %4563 = vmatpush1.msra.mxu0 0.0
        %4564 = vmatprep.subr.mxu0 0.0
        %4565 = vmatpush1.msra.mxu0 0.0
        %4566 = vmatprep.subr.mxu0 0.0
        %4567 = vmatpush1.msra.mxu0 0.0
        %4568 = vmatprep.subr.mxu0 0.0
        %4569 = vmatpush1.msra.mxu0 0.0
        %4570 = vmatprep.subr.mxu0 0.0
        %4571 = vmatpush1.msra.mxu0 0.0
        %4572 = vmatprep.subr.mxu0 0.0
        %4573 = vmatpush1.msra.mxu0 0.0
        %4574 = vmatprep.subr.mxu0 0.0
        %4575 = vmatpush1.msra.mxu0 0.0
        %4576 = vmatprep.subr.mxu0 0.0
        %4577 = vmatpush1.msra.mxu0 0.0
        %4578 = vmatprep.subr.mxu0 0.0
        %4579 = vmatpush1.msra.mxu0 0.0
        %4580 = vmatprep.subr.mxu0 0.0
        %4581 = vmatpush1.msra.mxu0 0.0
        %4582 = vmatprep.subr.mxu0 0.0
        %4583 = vmatpush1.msra.mxu0 0.0
        %4584 = vmatprep.subr.mxu0 0.0
        %4585 = vmatpush1.msra.mxu0 0.0
        %4586 = vmatprep.subr.mxu0 0.0
        %4587 = vmatpush1.msra.mxu0 0.0
        %4588 = vmatprep.subr.mxu0 0.0
        %4589 = vmatpush1.msra.mxu0 0.0
        %4590 = vmatprep.subr.mxu0 0.0
        %4591 = vmatpush1.msra.mxu0 0.0
        %4592 = vmatprep.subr.mxu0 0.0
        %4593 = vmatpush1.msra.mxu0 0.0
        %4594 = vmatprep.subr.mxu0 0.0
        %4595 = vmatpush1.msra.mxu0 0.0
        %4596 = vmatprep.subr.mxu0 0.0
        %4597 = vmatpush1.msra.mxu0 0.0
        %4598 = vmatprep.subr.mxu0 0.0
        %4599 = vmatpush1.msra.mxu0 0.0
        %4600 = vmatprep.subr.mxu0 0.0
        %4601 = vmatpush1.msra.mxu0 0.0
        %4602 = vmatprep.subr.mxu0 0.0
        %4603 = vmatpush1.msra.mxu0 0.0
        %4604 = vmatprep.subr.mxu0 0.0
        %4605 = vmatpush1.msra.mxu0 0.0
        %4606 = vmatprep.subr.mxu0 0.0
        %4607 = vmatpush1.msra.mxu0 0.0
        %4608 = vmatprep.subr.mxu0 0.0
        %4609 = vmatpush1.msra.mxu0 0.0
        %4610 = vmatprep.subr.mxu0 0.0
        %4611 = vmatpush1.msra.mxu0 0.0
        %4612 = vmatprep.subr.mxu0 0.0
        %4613 = vmatpush1.msra.mxu0 0.0
        %4614 = vmatprep.mubr.f32.mxu0 0.0
        %4615 = vmatmul.mubr.f32.gmra.mrb[0].mxu0 %v4029
        %v4616 = vpop.f32.mrb[0].mxu0
        %v4617 = vadd.f32 0.0, %v4616
        %v4618 = vpop.f32.mrb[0].mxu0
        %4619 = vmatprep.mubr.f32.mxu0 0.0
        %4620 = vmatmul.mubr.f32.gmra.mrb[0].mxu0 %v4032
        %v4621 = vpop.f32.mrb[0].mxu0
        %v4622 = vadd.f32 0.0, %v4621
        %v4623 = vpop.f32.mrb[0].mxu0
        %4624 = vmatprep.mubr.f32.mxu0 0.0
        %4625 = vmatmul.mubr.f32.gmra.mrb[0].mxu0 %v4035
        %v4626 = vpop.f32.mrb[0].mxu0
        %v4627 = vadd.f32 0.0, %v4626
        %v4628 = vpop.f32.mrb[0].mxu0
        %4629 = vmatprep.mubr.f32.mxu0 0.0
        %4630 = vmatmul.mubr.f32.gmra.mrb[0].mxu0 %v4038
        %v4631 = vpop.f32.mrb[0].mxu0
        %v4632 = vadd.f32 0.0, %v4631
        %v4633 = vpop.f32.mrb[0].mxu0
        %4634 = vdwg.mxu0
        %4635 = vmatprep.subr.mxu0 0.0
        %4636 = vmatpush1.msra.mxu0 %v1965
        %4637 = vmatprep.subr.mxu0 0.0
        %4638 = vmatpush1.msra.mxu0 0.0
        %4639 = vmatprep.subr.mxu0 0.0
        %4640 = vmatpush1.msra.mxu0 0.0
        %4641 = vmatprep.subr.mxu0 0.0
        %4642 = vmatpush1.msra.mxu0 0.0
        %4643 = vmatprep.subr.mxu0 0.0
        %4644 = vmatpush1.msra.mxu0 0.0
        %4645 = vmatprep.subr.mxu0 0.0
        %4646 = vmatpush1.msra.mxu0 0.0
        %4647 = vmatprep.subr.mxu0 0.0
        %4648 = vmatpush1.msra.mxu0 0.0
        %4649 = vmatprep.subr.mxu0 0.0
        %4650 = vmatpush1.msra.mxu0 0.0
        %4651 = vmatprep.subr.mxu0 0.0
        %4652 = vmatpush1.msra.mxu0 0.0
        %4653 = vmatprep.subr.mxu0 0.0
        %4654 = vmatpush1.msra.mxu0 0.0
        %4655 = vmatprep.subr.mxu0 0.0
        %4656 = vmatpush1.msra.mxu0 0.0
        %4657 = vmatprep.subr.mxu0 0.0
        %4658 = vmatpush1.msra.mxu0 0.0
        %4659 = vmatprep.subr.mxu0 0.0
        %4660 = vmatpush1.msra.mxu0 0.0
        %4661 = vmatprep.subr.mxu0 0.0
        %4662 = vmatpush1.msra.mxu0 0.0
        %4663 = vmatprep.subr.mxu0 0.0
        %4664 = vmatpush1.msra.mxu0 0.0
        %4665 = vmatprep.subr.mxu0 0.0
        %4666 = vmatpush1.msra.mxu0 0.0
        %4667 = vmatprep.subr.mxu0 0.0
        %4668 = vmatpush1.msra.mxu0 0.0
        %4669 = vmatprep.subr.mxu0 0.0
        %4670 = vmatpush1.msra.mxu0 0.0
        %4671 = vmatprep.subr.mxu0 0.0
        %4672 = vmatpush1.msra.mxu0 0.0
        %4673 = vmatprep.subr.mxu0 0.0
        %4674 = vmatpush1.msra.mxu0 0.0
        %4675 = vmatprep.subr.mxu0 0.0
        %4676 = vmatpush1.msra.mxu0 0.0
        %4677 = vmatprep.subr.mxu0 0.0
        %4678 = vmatpush1.msra.mxu0 0.0
        %4679 = vmatprep.subr.mxu0 0.0
        %4680 = vmatpush1.msra.mxu0 0.0
        %4681 = vmatprep.subr.mxu0 0.0
        %4682 = vmatpush1.msra.mxu0 0.0
        %4683 = vmatprep.subr.mxu0 0.0
        %4684 = vmatpush1.msra.mxu0 0.0
        %4685 = vmatprep.subr.mxu0 0.0
        %4686 = vmatpush1.msra.mxu0 0.0
        %4687 = vmatprep.subr.mxu0 0.0
        %4688 = vmatpush1.msra.mxu0 0.0
        %4689 = vmatprep.subr.mxu0 0.0
        %4690 = vmatpush1.msra.mxu0 0.0
        %4691 = vmatprep.subr.mxu0 0.0
        %4692 = vmatpush1.msra.mxu0 0.0
        %4693 = vmatprep.subr.mxu0 0.0
        %4694 = vmatpush1.msra.mxu0 0.0
        %4695 = vmatprep.subr.mxu0 0.0
        %4696 = vmatpush1.msra.mxu0 0.0
        %4697 = vmatprep.subr.mxu0 0.0
        %4698 = vmatpush1.msra.mxu0 0.0
        %4699 = vmatprep.mubr.f32.mxu0 0.0
        %4700 = vmatmul.mubr.f32.gmra.mrb[0].mxu0 %v4029
        %v4701 = vpop.f32.mrb[0].mxu0
        %v4702 = vadd.f32 0.0, %v4701
        %v4703 = vpop.f32.mrb[0].mxu0
        %4704 = vmatprep.mubr.f32.mxu0 0.0
        %4705 = vmatmul.mubr.f32.gmra.mrb[0].mxu0 %v4032
        %v4706 = vpop.f32.mrb[0].mxu0
        %v4707 = vadd.f32 0.0, %v4706
        %v4708 = vpop.f32.mrb[0].mxu0
        %4709 = vmatprep.mubr.f32.mxu0 0.0
        %4710 = vmatmul.mubr.f32.gmra.mrb[0].mxu0 %v4035
        %v4711 = vpop.f32.mrb[0].mxu0
        %v4712 = vadd.f32 0.0, %v4711
        %v4713 = vpop.f32.mrb[0].mxu0
        %4714 = vmatprep.mubr.f32.mxu0 0.0
        %4715 = vmatmul.mubr.f32.gmra.mrb[0].mxu0 %v4038
        %v4716 = vpop.f32.mrb[0].mxu0
        %v4717 = vadd.f32 0.0, %v4716
        %v4718 = vpop.f32.mrb[0].mxu0
        %4719 = vdwg.mxu0
        %v4720 = vsub.f32 %v2273, %v2035
        %v4721 = vsub.f32 %v2278, %v2040
        %v4722 = vsub.f32 %v2283, %v2045
        %v4723 = vsub.f32 %v2288, %v2050
        %v4724 = vsub.f32 %v2358, %v2055
        %v4725 = vsub.f32 %v2363, %v2060
        %v4726 = vsub.f32 %v2368, %v2065
        %v4727 = vsub.f32 %v2373, %v2070
        %v4728 = vsub.f32 %v2443, %v2075
        %v4729 = vsub.f32 %v2448, %v2080
        %v4730 = vsub.f32 %v2453, %v2085
        %v4731 = vsub.f32 %v2458, %v2090
        %v4732 = vsub.f32 %v2528, %v2095
        %v4733 = vsub.f32 %v2533, %v2100
        %v4734 = vsub.f32 %v2538, %v2105
        %v4735 = vsub.f32 %v2543, %v2110
        %v4736 = vsub.f32 %v2613, %v2115
        %v4737 = vsub.f32 %v2618, %v2120
        %v4738 = vsub.f32 %v2623, %v2125
        %v4739 = vsub.f32 %v2628, %v2130
        %v4740 = vsub.f32 %v2698, %v2135
        %v4741 = vsub.f32 %v2703, %v2140
        %v4742 = vsub.f32 %v2708, %v2145
        %v4743 = vsub.f32 %v2713, %v2150
        %v4744 = vsub.f32 %v2783, %v2155
        %v4745 = vsub.f32 %v2788, %v2160
        %v4746 = vsub.f32 %v2793, %v2165
        %v4747 = vsub.f32 %v2798, %v2170
        %v4748 = vsub.f32 %v2868, %v2175
        %v4749 = vsub.f32 %v2873, %v2180
        %v4750 = vsub.f32 %v2878, %v2185
        %v4751 = vsub.f32 %v2883, %v2190
        %v4752 = vadd.f32 %v4720, %v442
        %v4753 = vadd.f32 %v4721, %v443
        %v4754 = vadd.f32 %v4722, %v444
        %v4755 = vadd.f32 %v4723, %v445
        %v4756 = vadd.f32 %v4724, %v446
        %v4757 = vadd.f32 %v4725, %v447
        %v4758 = vadd.f32 %v4726, %v448
        %v4759 = vadd.f32 %v4727, %v449
        %v4760 = vadd.f32 %v4728, %v450
        %v4761 = vadd.f32 %v4729, %v451
        %v4762 = vadd.f32 %v4730, %v452
        %v4763 = vadd.f32 %v4731, %v453
        %v4764 = vadd.f32 %v4732, %v454
        %v4765 = vadd.f32 %v4733, %v455
        %v4766 = vadd.f32 %v4734, %v456
        %v4767 = vadd.f32 %v4735, %v457
        %v4768 = vadd.f32 %v4736, %v458
        %v4769 = vadd.f32 %v4737, %v459
        %v4770 = vadd.f32 %v4738, %v460
        %v4771 = vadd.f32 %v4739, %v461
        %v4772 = vadd.f32 %v4740, %v462
        %v4773 = vadd.f32 %v4741, %v463
        %v4774 = vadd.f32 %v4742, %v464
        %v4775 = vadd.f32 %v4743, %v465
        %v4776 = vadd.f32 %v4744, %v466
        %v4777 = vadd.f32 %v4745, %v467
        %v4778 = vadd.f32 %v4746, %v468
        %v4779 = vadd.f32 %v4747, %v469
        %v4780 = vadd.f32 %v4748, %v470
        %v4781 = vadd.f32 %v4749, %v471
        %v4782 = vadd.f32 %v4750, %v472
        %v4783 = vadd.f32 %v4751, %v473
        %v4784 = vadd.f32 %v4752, %v584
        %v4785 = vadd.f32 %v4753, %v585
        %v4786 = vadd.f32 %v4754, %v586
        %v4787 = vadd.f32 %v4755, %v587
        %v4788 = vadd.f32 %v4756, %v588
        %v4789 = vadd.f32 %v4757, %v589
        %v4790 = vadd.f32 %v4758, %v590
        %v4791 = vadd.f32 %v4759, %v591
        %v4792 = vadd.f32 %v4760, %v592
        %v4793 = vadd.f32 %v4761, %v593
        %v4794 = vadd.f32 %v4762, %v594
        %v4795 = vadd.f32 %v4763, %v595
        %v4796 = vadd.f32 %v4764, %v596
        %v4797 = vadd.f32 %v4765, %v597
        %v4798 = vadd.f32 %v4766, %v598
        %v4799 = vadd.f32 %v4767, %v599
        %v4800 = vadd.f32 %v4768, %v600
        %v4801 = vadd.f32 %v4769, %v601
        %v4802 = vadd.f32 %v4770, %v602
        %v4803 = vadd.f32 %v4771, %v603
        %v4804 = vadd.f32 %v4772, %v604
        %v4805 = vadd.f32 %v4773, %v605
        %v4806 = vadd.f32 %v4774, %v606
        %v4807 = vadd.f32 %v4775, %v607
        %v4808 = vadd.f32 %v4776, %v608
        %v4809 = vadd.f32 %v4777, %v609
        %v4810 = vadd.f32 %v4778, %v610
        %v4811 = vadd.f32 %v4779, %v611
        %v4812 = vadd.f32 %v4780, %v612
        %v4813 = vadd.f32 %v4781, %v613
        %v4814 = vadd.f32 %v4782, %v614
        %v4815 = vadd.f32 %v4783, %v615
        %v4816 = vadd.f32 %v3190, %v2953
        %v4817 = vadd.f32 %v3195, %v2958
        %v4818 = vadd.f32 %v3200, %v2963
        %v4819 = vadd.f32 %v3205, %v2968
        %v4820 = vadd.f32 %v3275, %v2973
        %v4821 = vadd.f32 %v3280, %v2978
        %v4822 = vadd.f32 %v3285, %v2983
        %v4823 = vadd.f32 %v3290, %v2988
        %v4824 = vadd.f32 %v3360, %v2993
        %v4825 = vadd.f32 %v3365, %v2998
        %v4826 = vadd.f32 %v3370, %v3003
        %v4827 = vadd.f32 %v3375, %v3008
        %v4828 = vadd.f32 %v3445, %v3013
        %v4829 = vadd.f32 %v3450, %v3018
        %v4830 = vadd.f32 %v3455, %v3023
        %v4831 = vadd.f32 %v3460, %v3028
        %v4832 = vadd.f32 %v3530, %v3033
        %v4833 = vadd.f32 %v3535, %v3038
        %v4834 = vadd.f32 %v3540, %v3043
        %v4835 = vadd.f32 %v3545, %v3048
        %v4836 = vadd.f32 %v3615, %v3053
        %v4837 = vadd.f32 %v3620, %v3058
        %v4838 = vadd.f32 %v3625, %v3063
        %v4839 = vadd.f32 %v3630, %v3068
        %v4840 = vadd.f32 %v3700, %v3073
        %v4841 = vadd.f32 %v3705, %v3078
        %v4842 = vadd.f32 %v3710, %v3083
        %v4843 = vadd.f32 %v3715, %v3088
        %v4844 = vadd.f32 %v3785, %v3093
        %v4845 = vadd.f32 %v3790, %v3098
        %v4846 = vadd.f32 %v3795, %v3103
        %v4847 = vadd.f32 %v3800, %v3108
        %v4848 = vadd.f32 %v4816, %v616
        %v4849 = vadd.f32 %v4817, %v617
        %v4850 = vadd.f32 %v4818, %v618
        %v4851 = vadd.f32 %v4819, %v619
        %v4852 = vadd.f32 %v4820, %v620
        %v4853 = vadd.f32 %v4821, %v621
        %v4854 = vadd.f32 %v4822, %v622
        %v4855 = vadd.f32 %v4823, %v623
        %v4856 = vadd.f32 %v4824, %v624
        %v4857 = vadd.f32 %v4825, %v625
        %v4858 = vadd.f32 %v4826, %v626
        %v4859 = vadd.f32 %v4827, %v627
        %v4860 = vadd.f32 %v4828, %v628
        %v4861 = vadd.f32 %v4829, %v629
        %v4862 = vadd.f32 %v4830, %v630
        %v4863 = vadd.f32 %v4831, %v631
        %v4864 = vadd.f32 %v4832, %v632
        %v4865 = vadd.f32 %v4833, %v633
        %v4866 = vadd.f32 %v4834, %v634
        %v4867 = vadd.f32 %v4835, %v635
        %v4868 = vadd.f32 %v4836, %v636
        %v4869 = vadd.f32 %v4837, %v637
        %v4870 = vadd.f32 %v4838, %v638
        %v4871 = vadd.f32 %v4839, %v639
        %v4872 = vadd.f32 %v4840, %v640
        %v4873 = vadd.f32 %v4841, %v641
        %v4874 = vadd.f32 %v4842, %v642
        %v4875 = vadd.f32 %v4843, %v643
        %v4876 = vadd.f32 %v4844, %v644
        %v4877 = vadd.f32 %v4845, %v645
        %v4878 = vadd.f32 %v4846, %v646
        %v4879 = vadd.f32 %v4847, %v647
        %v4880 = vxor.u32 %v4848, 2147483648
        %v4881 = vxor.u32 %v4849, 2147483648
        %v4882 = vxor.u32 %v4850, 2147483648
        %v4883 = vxor.u32 %v4851, 2147483648
        %v4884 = vxor.u32 %v4852, 2147483648
        %v4885 = vxor.u32 %v4853, 2147483648
        %v4886 = vxor.u32 %v4854, 2147483648
        %v4887 = vxor.u32 %v4855, 2147483648
        %v4888 = vxor.u32 %v4856, 2147483648
        %v4889 = vxor.u32 %v4857, 2147483648
        %v4890 = vxor.u32 %v4858, 2147483648
        %v4891 = vxor.u32 %v4859, 2147483648
        %v4892 = vxor.u32 %v4860, 2147483648
        %v4893 = vxor.u32 %v4861, 2147483648
        %v4894 = vxor.u32 %v4862, 2147483648
        %v4895 = vxor.u32 %v4863, 2147483648
        %v4896 = vxor.u32 %v4864, 2147483648
        %v4897 = vxor.u32 %v4865, 2147483648
        %v4898 = vxor.u32 %v4866, 2147483648
        %v4899 = vxor.u32 %v4867, 2147483648
        %v4900 = vxor.u32 %v4868, 2147483648
        %v4901 = vxor.u32 %v4869, 2147483648
        %v4902 = vxor.u32 %v4870, 2147483648
        %v4903 = vxor.u32 %v4871, 2147483648
        %v4904 = vxor.u32 %v4872, 2147483648
        %v4905 = vxor.u32 %v4873, 2147483648
        %v4906 = vxor.u32 %v4874, 2147483648
        %v4907 = vxor.u32 %v4875, 2147483648
        %v4908 = vxor.u32 %v4876, 2147483648
        %v4909 = vxor.u32 %v4877, 2147483648
        %v4910 = vxor.u32 %v4878, 2147483648
        %v4911 = vxor.u32 %v4879, 2147483648
        %v4912 = vmul.f32 %v4880, 1.442695
        %v4913 = vpow.pop %v4912
        %v4914 = vmul.f32 %v4881, 1.442695
        %v4915 = vpow.pop %v4914
        %v4916 = vmul.f32 %v4882, 1.442695
        %v4917 = vpow.pop %v4916
        %v4918 = vmul.f32 %v4883, 1.442695
        %v4919 = vpow.pop %v4918
        %v4920 = vmul.f32 %v4884, 1.442695
        %v4921 = vpow.pop %v4920
        %v4922 = vmul.f32 %v4885, 1.442695
        %v4923 = vpow.pop %v4922
        %v4924 = vmul.f32 %v4886, 1.442695
        %v4925 = vpow.pop %v4924
        %v4926 = vmul.f32 %v4887, 1.442695
        %v4927 = vpow.pop %v4926
        %v4928 = vmul.f32 %v4888, 1.442695
        %v4929 = vpow.pop %v4928
        %v4930 = vmul.f32 %v4889, 1.442695
        %v4931 = vpow.pop %v4930
        %v4932 = vmul.f32 %v4890, 1.442695
        %v4933 = vpow.pop %v4932
        %v4934 = vmul.f32 %v4891, 1.442695
        %v4935 = vpow.pop %v4934
        %v4936 = vmul.f32 %v4892, 1.442695
        %v4937 = vpow.pop %v4936
        %v4938 = vmul.f32 %v4893, 1.442695
        %v4939 = vpow.pop %v4938
        %v4940 = vmul.f32 %v4894, 1.442695
        %v4941 = vpow.pop %v4940
        %v4942 = vmul.f32 %v4895, 1.442695
        %v4943 = vpow.pop %v4942
        %v4944 = vmul.f32 %v4896, 1.442695
        %v4945 = vpow.pop %v4944
        %v4946 = vmul.f32 %v4897, 1.442695
        %v4947 = vpow.pop %v4946
        %v4948 = vmul.f32 %v4898, 1.442695
        %v4949 = vpow.pop %v4948
        %v4950 = vmul.f32 %v4899, 1.442695
        %v4951 = vpow.pop %v4950
        %v4952 = vmul.f32 %v4900, 1.442695
        %v4953 = vpow.pop %v4952
        %v4954 = vmul.f32 %v4901, 1.442695
        %v4955 = vpow.pop %v4954
        %v4956 = vmul.f32 %v4902, 1.442695
        %v4957 = vpow.pop %v4956
        %v4958 = vmul.f32 %v4903, 1.442695
        %v4959 = vpow.pop %v4958
        %v4960 = vmul.f32 %v4904, 1.442695
        %v4961 = vpow.pop %v4960
        %v4962 = vmul.f32 %v4905, 1.442695
        %v4963 = vpow.pop %v4962
        %v4964 = vmul.f32 %v4906, 1.442695
        %v4965 = vpow.pop %v4964
        %v4966 = vmul.f32 %v4907, 1.442695
        %v4967 = vpow.pop %v4966
        %v4968 = vmul.f32 %v4908, 1.442695
        %v4969 = vpow.pop %v4968
        %v4970 = vmul.f32 %v4909, 1.442695
        %v4971 = vpow.pop %v4970
        %v4972 = vmul.f32 %v4910, 1.442695
        %v4973 = vpow.pop %v4972
        %v4974 = vmul.f32 %v4911, 1.442695
        %v4975 = vpow.pop %v4974
        %v4976 = vadd.f32 %v4913, 1.0
        %v4977 = vadd.f32 %v4915, 1.0
        %v4978 = vadd.f32 %v4917, 1.0
        %v4979 = vadd.f32 %v4919, 1.0
        %v4980 = vadd.f32 %v4921, 1.0
        %v4981 = vadd.f32 %v4923, 1.0
        %v4982 = vadd.f32 %v4925, 1.0
        %v4983 = vadd.f32 %v4927, 1.0
        %v4984 = vadd.f32 %v4929, 1.0
        %v4985 = vadd.f32 %v4931, 1.0
        %v4986 = vadd.f32 %v4933, 1.0
        %v4987 = vadd.f32 %v4935, 1.0
        %v4988 = vadd.f32 %v4937, 1.0
        %v4989 = vadd.f32 %v4939, 1.0
        %v4990 = vadd.f32 %v4941, 1.0
        %v4991 = vadd.f32 %v4943, 1.0
        %v4992 = vadd.f32 %v4945, 1.0
        %v4993 = vadd.f32 %v4947, 1.0
        %v4994 = vadd.f32 %v4949, 1.0
        %v4995 = vadd.f32 %v4951, 1.0
        %v4996 = vadd.f32 %v4953, 1.0
        %v4997 = vadd.f32 %v4955, 1.0
        %v4998 = vadd.f32 %v4957, 1.0
        %v4999 = vadd.f32 %v4959, 1.0
        %v5000 = vadd.f32 %v4961, 1.0
        %v5001 = vadd.f32 %v4963, 1.0
        %v5002 = vadd.f32 %v4965, 1.0
        %v5003 = vadd.f32 %v4967, 1.0
        %v5004 = vadd.f32 %v4969, 1.0
        %v5005 = vadd.f32 %v4971, 1.0
        %v5006 = vadd.f32 %v4973, 1.0
        %v5007 = vadd.f32 %v4975, 1.0
        %v5008 = vrcp.pop %v4976
        %v5009 = vmul.f32 1.0, %v5008
        %v5010 = vrcp.pop %v4977
        %v5011 = vmul.f32 1.0, %v5010
        %v5012 = vrcp.pop %v4978
        %v5013 = vmul.f32 1.0, %v5012
        %v5014 = vrcp.pop %v4979
        %v5015 = vmul.f32 1.0, %v5014
        %v5016 = vrcp.pop %v4980
        %v5017 = vmul.f32 1.0, %v5016
        %v5018 = vrcp.pop %v4981
        %v5019 = vmul.f32 1.0, %v5018
        %v5020 = vrcp.pop %v4982
        %v5021 = vmul.f32 1.0, %v5020
        %v5022 = vrcp.pop %v4983
        %v5023 = vmul.f32 1.0, %v5022
        %v5024 = vrcp.pop %v4984
        %v5025 = vmul.f32 1.0, %v5024
        %v5026 = vrcp.pop %v4985
        %v5027 = vmul.f32 1.0, %v5026
        %v5028 = vrcp.pop %v4986
        %v5029 = vmul.f32 1.0, %v5028
        %v5030 = vrcp.pop %v4987
        %v5031 = vmul.f32 1.0, %v5030
        %v5032 = vrcp.pop %v4988
        %v5033 = vmul.f32 1.0, %v5032
        %v5034 = vrcp.pop %v4989
        %v5035 = vmul.f32 1.0, %v5034
        %v5036 = vrcp.pop %v4990
        %v5037 = vmul.f32 1.0, %v5036
        %v5038 = vrcp.pop %v4991
        %v5039 = vmul.f32 1.0, %v5038
        %v5040 = vrcp.pop %v4992
        %v5041 = vmul.f32 1.0, %v5040
        %v5042 = vrcp.pop %v4993
        %v5043 = vmul.f32 1.0, %v5042
        %v5044 = vrcp.pop %v4994
        %v5045 = vmul.f32 1.0, %v5044
        %v5046 = vrcp.pop %v4995
        %v5047 = vmul.f32 1.0, %v5046
        %v5048 = vrcp.pop %v4996
        %v5049 = vmul.f32 1.0, %v5048
        %v5050 = vrcp.pop %v4997
        %v5051 = vmul.f32 1.0, %v5050
        %v5052 = vrcp.pop %v4998
        %v5053 = vmul.f32 1.0, %v5052
        %v5054 = vrcp.pop %v4999
        %v5055 = vmul.f32 1.0, %v5054
        %v5056 = vrcp.pop %v5000
        %v5057 = vmul.f32 1.0, %v5056
        %v5058 = vrcp.pop %v5001
        %v5059 = vmul.f32 1.0, %v5058
        %v5060 = vrcp.pop %v5002
        %v5061 = vmul.f32 1.0, %v5060
        %v5062 = vrcp.pop %v5003
        %v5063 = vmul.f32 1.0, %v5062
        %v5064 = vrcp.pop %v5004
        %v5065 = vmul.f32 1.0, %v5064
        %v5066 = vrcp.pop %v5005
        %v5067 = vmul.f32 1.0, %v5066
        %v5068 = vrcp.pop %v5006
        %v5069 = vmul.f32 1.0, %v5068
        %v5070 = vrcp.pop %v5007
        %v5071 = vmul.f32 1.0, %v5070
        %v5072 = vadd.f32 %v4107, %v3870
        %v5073 = vadd.f32 %v4112, %v3875
        %v5074 = vadd.f32 %v4117, %v3880
        %v5075 = vadd.f32 %v4122, %v3885
        %v5076 = vadd.f32 %v4192, %v3890
        %v5077 = vadd.f32 %v4197, %v3895
        %v5078 = vadd.f32 %v4202, %v3900
        %v5079 = vadd.f32 %v4207, %v3905
        %v5080 = vadd.f32 %v4277, %v3910
        %v5081 = vadd.f32 %v4282, %v3915
        %v5082 = vadd.f32 %v4287, %v3920
        %v5083 = vadd.f32 %v4292, %v3925
        %v5084 = vadd.f32 %v4362, %v3930
        %v5085 = vadd.f32 %v4367, %v3935
        %v5086 = vadd.f32 %v4372, %v3940
        %v5087 = vadd.f32 %v4377, %v3945
        %v5088 = vadd.f32 %v4447, %v3950
        %v5089 = vadd.f32 %v4452, %v3955
        %v5090 = vadd.f32 %v4457, %v3960
        %v5091 = vadd.f32 %v4462, %v3965
        %v5092 = vadd.f32 %v4532, %v3970
        %v5093 = vadd.f32 %v4537, %v3975
        %v5094 = vadd.f32 %v4542, %v3980
        %v5095 = vadd.f32 %v4547, %v3985
        %v5096 = vadd.f32 %v4617, %v3990
        %v5097 = vadd.f32 %v4622, %v3995
        %v5098 = vadd.f32 %v4627, %v4000
        %v5099 = vadd.f32 %v4632, %v4005
        %v5100 = vadd.f32 %v4702, %v4010
        %v5101 = vadd.f32 %v4707, %v4015
        %v5102 = vadd.f32 %v4712, %v4020
        %v5103 = vadd.f32 %v4717, %v4025
        %v5104 = vadd.f32 %v5072, %v648
        %v5105 = vadd.f32 %v5073, %v649
        %v5106 = vadd.f32 %v5074, %v650
        %v5107 = vadd.f32 %v5075, %v651
        %v5108 = vadd.f32 %v5076, %v652
        %v5109 = vadd.f32 %v5077, %v653
        %v5110 = vadd.f32 %v5078, %v654
        %v5111 = vadd.f32 %v5079, %v655
        %v5112 = vadd.f32 %v5080, %v656
        %v5113 = vadd.f32 %v5081, %v657
        %v5114 = vadd.f32 %v5082, %v658
        %v5115 = vadd.f32 %v5083, %v659
        %v5116 = vadd.f32 %v5084, %v660
        %v5117 = vadd.f32 %v5085, %v661
        %v5118 = vadd.f32 %v5086, %v662
        %v5119 = vadd.f32 %v5087, %v663
        %v5120 = vadd.f32 %v5088, %v664
        %v5121 = vadd.f32 %v5089, %v665
        %v5122 = vadd.f32 %v5090, %v666
        %v5123 = vadd.f32 %v5091, %v667
        %v5124 = vadd.f32 %v5092, %v668
        %v5125 = vadd.f32 %v5093, %v669
        %v5126 = vadd.f32 %v5094, %v670
        %v5127 = vadd.f32 %v5095, %v671
        %v5128 = vadd.f32 %v5096, %v672
        %v5129 = vadd.f32 %v5097, %v673
        %v5130 = vadd.f32 %v5098, %v674
        %v5131 = vadd.f32 %v5099, %v675
        %v5132 = vadd.f32 %v5100, %v676
        %v5133 = vadd.f32 %v5101, %v677
        %v5134 = vadd.f32 %v5102, %v678
        %v5135 = vadd.f32 %v5103, %v679
        %v5136 = vxor.u32 %v5104, 2147483648
        %v5137 = vxor.u32 %v5105, 2147483648
        %v5138 = vxor.u32 %v5106, 2147483648
        %v5139 = vxor.u32 %v5107, 2147483648
        %v5140 = vxor.u32 %v5108, 2147483648
        %v5141 = vxor.u32 %v5109, 2147483648
        %v5142 = vxor.u32 %v5110, 2147483648
        %v5143 = vxor.u32 %v5111, 2147483648
        %v5144 = vxor.u32 %v5112, 2147483648
        %v5145 = vxor.u32 %v5113, 2147483648
        %v5146 = vxor.u32 %v5114, 2147483648
        %v5147 = vxor.u32 %v5115, 2147483648
        %v5148 = vxor.u32 %v5116, 2147483648
        %v5149 = vxor.u32 %v5117, 2147483648
        %v5150 = vxor.u32 %v5118, 2147483648
        %v5151 = vxor.u32 %v5119, 2147483648
        %v5152 = vxor.u32 %v5120, 2147483648
        %v5153 = vxor.u32 %v5121, 2147483648
        %v5154 = vxor.u32 %v5122, 2147483648
        %v5155 = vxor.u32 %v5123, 2147483648
        %v5156 = vxor.u32 %v5124, 2147483648
        %v5157 = vxor.u32 %v5125, 2147483648
        %v5158 = vxor.u32 %v5126, 2147483648
        %v5159 = vxor.u32 %v5127, 2147483648
        %v5160 = vxor.u32 %v5128, 2147483648
        %v5161 = vxor.u32 %v5129, 2147483648
        %v5162 = vxor.u32 %v5130, 2147483648
        %v5163 = vxor.u32 %v5131, 2147483648
        %v5164 = vxor.u32 %v5132, 2147483648
        %v5165 = vxor.u32 %v5133, 2147483648
        %v5166 = vxor.u32 %v5134, 2147483648
        %v5167 = vxor.u32 %v5135, 2147483648
        %v5168 = vmul.f32 %v5136, 1.442695
        %v5169 = vpow.pop %v5168
        %v5170 = vmul.f32 %v5137, 1.442695
        %v5171 = vpow.pop %v5170
        %v5172 = vmul.f32 %v5138, 1.442695
        %v5173 = vpow.pop %v5172
        %v5174 = vmul.f32 %v5139, 1.442695
        %v5175 = vpow.pop %v5174
        %v5176 = vmul.f32 %v5140, 1.442695
        %v5177 = vpow.pop %v5176
        %v5178 = vmul.f32 %v5141, 1.442695
        %v5179 = vpow.pop %v5178
        %v5180 = vmul.f32 %v5142, 1.442695
        %v5181 = vpow.pop %v5180
        %v5182 = vmul.f32 %v5143, 1.442695
        %v5183 = vpow.pop %v5182
        %v5184 = vmul.f32 %v5144, 1.442695
        %v5185 = vpow.pop %v5184
        %v5186 = vmul.f32 %v5145, 1.442695
        %v5187 = vpow.pop %v5186
        %v5188 = vmul.f32 %v5146, 1.442695
        %v5189 = vpow.pop %v5188
        %v5190 = vmul.f32 %v5147, 1.442695
        %v5191 = vpow.pop %v5190
        %v5192 = vmul.f32 %v5148, 1.442695
        %v5193 = vpow.pop %v5192
        %v5194 = vmul.f32 %v5149, 1.442695
        %v5195 = vpow.pop %v5194
        %v5196 = vmul.f32 %v5150, 1.442695
        %v5197 = vpow.pop %v5196
        %v5198 = vmul.f32 %v5151, 1.442695
        %v5199 = vpow.pop %v5198
        %v5200 = vmul.f32 %v5152, 1.442695
        %v5201 = vpow.pop %v5200
        %v5202 = vmul.f32 %v5153, 1.442695
        %v5203 = vpow.pop %v5202
        %v5204 = vmul.f32 %v5154, 1.442695
        %v5205 = vpow.pop %v5204
        %v5206 = vmul.f32 %v5155, 1.442695
        %v5207 = vpow.pop %v5206
        %v5208 = vmul.f32 %v5156, 1.442695
        %v5209 = vpow.pop %v5208
        %v5210 = vmul.f32 %v5157, 1.442695
        %v5211 = vpow.pop %v5210
        %v5212 = vmul.f32 %v5158, 1.442695
        %v5213 = vpow.pop %v5212
        %v5214 = vmul.f32 %v5159, 1.442695
        %v5215 = vpow.pop %v5214
        %v5216 = vmul.f32 %v5160, 1.442695
        %v5217 = vpow.pop %v5216
        %v5218 = vmul.f32 %v5161, 1.442695
        %v5219 = vpow.pop %v5218
        %v5220 = vmul.f32 %v5162, 1.442695
        %v5221 = vpow.pop %v5220
        %v5222 = vmul.f32 %v5163, 1.442695
        %v5223 = vpow.pop %v5222
        %v5224 = vmul.f32 %v5164, 1.442695
        %v5225 = vpow.pop %v5224
        %v5226 = vmul.f32 %v5165, 1.442695
        %v5227 = vpow.pop %v5226
        %v5228 = vmul.f32 %v5166, 1.442695
        %v5229 = vpow.pop %v5228
        %v5230 = vmul.f32 %v5167, 1.442695
        %v5231 = vpow.pop %v5230
        %v5232 = vadd.f32 %v5169, 1.0
        %v5233 = vadd.f32 %v5171, 1.0
        %v5234 = vadd.f32 %v5173, 1.0
        %v5235 = vadd.f32 %v5175, 1.0
        %v5236 = vadd.f32 %v5177, 1.0
        %v5237 = vadd.f32 %v5179, 1.0
        %v5238 = vadd.f32 %v5181, 1.0
        %v5239 = vadd.f32 %v5183, 1.0
        %v5240 = vadd.f32 %v5185, 1.0
        %v5241 = vadd.f32 %v5187, 1.0
        %v5242 = vadd.f32 %v5189, 1.0
        %v5243 = vadd.f32 %v5191, 1.0
        %v5244 = vadd.f32 %v5193, 1.0
        %v5245 = vadd.f32 %v5195, 1.0
        %v5246 = vadd.f32 %v5197, 1.0
        %v5247 = vadd.f32 %v5199, 1.0
        %v5248 = vadd.f32 %v5201, 1.0
        %v5249 = vadd.f32 %v5203, 1.0
        %v5250 = vadd.f32 %v5205, 1.0
        %v5251 = vadd.f32 %v5207, 1.0
        %v5252 = vadd.f32 %v5209, 1.0
        %v5253 = vadd.f32 %v5211, 1.0
        %v5254 = vadd.f32 %v5213, 1.0
        %v5255 = vadd.f32 %v5215, 1.0
        %v5256 = vadd.f32 %v5217, 1.0
        %v5257 = vadd.f32 %v5219, 1.0
        %v5258 = vadd.f32 %v5221, 1.0
        %v5259 = vadd.f32 %v5223, 1.0
        %v5260 = vadd.f32 %v5225, 1.0
        %v5261 = vadd.f32 %v5227, 1.0
        %v5262 = vadd.f32 %v5229, 1.0
        %v5263 = vadd.f32 %v5231, 1.0
        %v5264 = vrcp.pop %v5232
        %v5265 = vmul.f32 1.0, %v5264
        %v5266 = vrcp.pop %v5233
        %v5267 = vmul.f32 1.0, %v5266
        %v5268 = vrcp.pop %v5234
        %v5269 = vmul.f32 1.0, %v5268
        %v5270 = vrcp.pop %v5235
        %v5271 = vmul.f32 1.0, %v5270
        %v5272 = vrcp.pop %v5236
        %v5273 = vmul.f32 1.0, %v5272
        %v5274 = vrcp.pop %v5237
        %v5275 = vmul.f32 1.0, %v5274
        %v5276 = vrcp.pop %v5238
        %v5277 = vmul.f32 1.0, %v5276
        %v5278 = vrcp.pop %v5239
        %v5279 = vmul.f32 1.0, %v5278
        %v5280 = vrcp.pop %v5240
        %v5281 = vmul.f32 1.0, %v5280
        %v5282 = vrcp.pop %v5241
        %v5283 = vmul.f32 1.0, %v5282
        %v5284 = vrcp.pop %v5242
        %v5285 = vmul.f32 1.0, %v5284
        %v5286 = vrcp.pop %v5243
        %v5287 = vmul.f32 1.0, %v5286
        %v5288 = vrcp.pop %v5244
        %v5289 = vmul.f32 1.0, %v5288
        %v5290 = vrcp.pop %v5245
        %v5291 = vmul.f32 1.0, %v5290
        %v5292 = vrcp.pop %v5246
        %v5293 = vmul.f32 1.0, %v5292
        %v5294 = vrcp.pop %v5247
        %v5295 = vmul.f32 1.0, %v5294
        %v5296 = vrcp.pop %v5248
        %v5297 = vmul.f32 1.0, %v5296
        %v5298 = vrcp.pop %v5249
        %v5299 = vmul.f32 1.0, %v5298
        %v5300 = vrcp.pop %v5250
        %v5301 = vmul.f32 1.0, %v5300
        %v5302 = vrcp.pop %v5251
        %v5303 = vmul.f32 1.0, %v5302
        %v5304 = vrcp.pop %v5252
        %v5305 = vmul.f32 1.0, %v5304
        %v5306 = vrcp.pop %v5253
        %v5307 = vmul.f32 1.0, %v5306
        %v5308 = vrcp.pop %v5254
        %v5309 = vmul.f32 1.0, %v5308
        %v5310 = vrcp.pop %v5255
        %v5311 = vmul.f32 1.0, %v5310
        %v5312 = vrcp.pop %v5256
        %v5313 = vmul.f32 1.0, %v5312
        %v5314 = vrcp.pop %v5257
        %v5315 = vmul.f32 1.0, %v5314
        %v5316 = vrcp.pop %v5258
        %v5317 = vmul.f32 1.0, %v5316
        %v5318 = vrcp.pop %v5259
        %v5319 = vmul.f32 1.0, %v5318
        %v5320 = vrcp.pop %v5260
        %v5321 = vmul.f32 1.0, %v5320
        %v5322 = vrcp.pop %v5261
        %v5323 = vmul.f32 1.0, %v5322
        %v5324 = vrcp.pop %v5262
        %v5325 = vmul.f32 1.0, %v5324
        %v5326 = vrcp.pop %v5263
        %v5327 = vmul.f32 1.0, %v5326
        %v5328 = vmul.f32 %v5009, %v474
        %v5329 = vmul.f32 %v5011, %v475
        %v5330 = vmul.f32 %v5013, %v476
        %v5331 = vmul.f32 %v5015, %v477
        %v5332 = vmul.f32 %v5017, %v478
        %v5333 = vmul.f32 %v5019, %v479
        %v5334 = vmul.f32 %v5021, %v480
        %v5335 = vmul.f32 %v5023, %v481
        %v5336 = vmul.f32 %v5025, %v482
        %v5337 = vmul.f32 %v5027, %v483
        %v5338 = vmul.f32 %v5029, %v484
        %v5339 = vmul.f32 %v5031, %v485
        %v5340 = vmul.f32 %v5033, %v486
        %v5341 = vmul.f32 %v5035, %v487
        %v5342 = vmul.f32 %v5037, %v488
        %v5343 = vmul.f32 %v5039, %v489
        %v5344 = vmul.f32 %v5041, %v490
        %v5345 = vmul.f32 %v5043, %v491
        %v5346 = vmul.f32 %v5045, %v492
        %v5347 = vmul.f32 %v5047, %v493
        %v5348 = vmul.f32 %v5049, %v494
        %v5349 = vmul.f32 %v5051, %v495
        %v5350 = vmul.f32 %v5053, %v496
        %v5351 = vmul.f32 %v5055, %v497
        %v5352 = vmul.f32 %v5057, %v498
        %v5353 = vmul.f32 %v5059, %v499
        %v5354 = vmul.f32 %v5061, %v500
        %v5355 = vmul.f32 %v5063, %v501
        %v5356 = vmul.f32 %v5065, %v502
        %v5357 = vmul.f32 %v5067, %v503
        %v5358 = vmul.f32 %v5069, %v504
        %v5359 = vmul.f32 %v5071, %v505
        %v5360 = vmul.f32 %v5265, %v4784
        %v5361 = vmul.f32 %v5267, %v4785
        %v5362 = vmul.f32 %v5269, %v4786
        %v5363 = vmul.f32 %v5271, %v4787
        %v5364 = vmul.f32 %v5273, %v4788
        %v5365 = vmul.f32 %v5275, %v4789
        %v5366 = vmul.f32 %v5277, %v4790
        %v5367 = vmul.f32 %v5279, %v4791
        %v5368 = vmul.f32 %v5281, %v4792
        %v5369 = vmul.f32 %v5283, %v4793
        %v5370 = vmul.f32 %v5285, %v4794
        %v5371 = vmul.f32 %v5287, %v4795
        %v5372 = vmul.f32 %v5289, %v4796
        %v5373 = vmul.f32 %v5291, %v4797
        %v5374 = vmul.f32 %v5293, %v4798
        %v5375 = vmul.f32 %v5295, %v4799
        %v5376 = vmul.f32 %v5297, %v4800
        %v5377 = vmul.f32 %v5299, %v4801
        %v5378 = vmul.f32 %v5301, %v4802
        %v5379 = vmul.f32 %v5303, %v4803
        %v5380 = vmul.f32 %v5305, %v4804
        %v5381 = vmul.f32 %v5307, %v4805
        %v5382 = vmul.f32 %v5309, %v4806
        %v5383 = vmul.f32 %v5311, %v4807
        %v5384 = vmul.f32 %v5313, %v4808
        %v5385 = vmul.f32 %v5315, %v4809
        %v5386 = vmul.f32 %v5317, %v4810
        %v5387 = vmul.f32 %v5319, %v4811
        %v5388 = vmul.f32 %v5321, %v4812
        %v5389 = vmul.f32 %v5323, %v4813
        %v5390 = vmul.f32 %v5325, %v4814
        %v5391 = vmul.f32 %v5327, %v4815
        %v5392 = vadd.f32 %v5328, %v5360
        %v5393 = vadd.f32 %v5329, %v5361
        %v5394 = vadd.f32 %v5330, %v5362
        %v5395 = vadd.f32 %v5331, %v5363
        %v5396 = vadd.f32 %v5332, %v5364
        %v5397 = vadd.f32 %v5333, %v5365
        %v5398 = vadd.f32 %v5334, %v5366
        %v5399 = vadd.f32 %v5335, %v5367
        %v5400 = vadd.f32 %v5336, %v5368
        %v5401 = vadd.f32 %v5337, %v5369
        %v5402 = vadd.f32 %v5338, %v5370
        %v5403 = vadd.f32 %v5339, %v5371
        %v5404 = vadd.f32 %v5340, %v5372
        %v5405 = vadd.f32 %v5341, %v5373
        %v5406 = vadd.f32 %v5342, %v5374
        %v5407 = vadd.f32 %v5343, %v5375
        %v5408 = vadd.f32 %v5344, %v5376
        %v5409 = vadd.f32 %v5345, %v5377
        %v5410 = vadd.f32 %v5346, %v5378
        %v5411 = vadd.f32 %v5347, %v5379
        %v5412 = vadd.f32 %v5348, %v5380
        %v5413 = vadd.f32 %v5349, %v5381
        %v5414 = vadd.f32 %v5350, %v5382
        %v5415 = vadd.f32 %v5351, %v5383
        %v5416 = vadd.f32 %v5352, %v5384
        %v5417 = vadd.f32 %v5353, %v5385
        %v5418 = vadd.f32 %v5354, %v5386
        %v5419 = vadd.f32 %v5355, %v5387
        %v5420 = vadd.f32 %v5356, %v5388
        %v5421 = vadd.f32 %v5357, %v5389
        %v5422 = vadd.f32 %v5358, %v5390
        %v5423 = vadd.f32 %v5359, %v5391
        %vm5424 = vcmp.gt.f32.partialorder %v5392, 0.01
        %vm5425 = vcmp.gt.f32.partialorder %v5393, 0.01
        %vm5426 = vcmp.gt.f32.partialorder %v5394, 0.01
        %vm5427 = vcmp.gt.f32.partialorder %v5395, 0.01
        %vm5428 = vcmp.gt.f32.partialorder %v5396, 0.01
        %vm5429 = vcmp.gt.f32.partialorder %v5397, 0.01
        %vm5430 = vcmp.gt.f32.partialorder %v5398, 0.01
        %vm5431 = vcmp.gt.f32.partialorder %v5399, 0.01
        %vm5432 = vcmp.gt.f32.partialorder %v5400, 0.01
        %vm5433 = vcmp.gt.f32.partialorder %v5401, 0.01
        %vm5434 = vcmp.gt.f32.partialorder %v5402, 0.01
        %vm5435 = vcmp.gt.f32.partialorder %v5403, 0.01
        %vm5436 = vcmp.gt.f32.partialorder %v5404, 0.01
        %vm5437 = vcmp.gt.f32.partialorder %v5405, 0.01
        %vm5438 = vcmp.gt.f32.partialorder %v5406, 0.01
        %vm5439 = vcmp.gt.f32.partialorder %v5407, 0.01
        %vm5440 = vcmp.gt.f32.partialorder %v5408, 0.01
        %vm5441 = vcmp.gt.f32.partialorder %v5409, 0.01
        %vm5442 = vcmp.gt.f32.partialorder %v5410, 0.01
        %vm5443 = vcmp.gt.f32.partialorder %v5411, 0.01
        %vm5444 = vcmp.gt.f32.partialorder %v5412, 0.01
        %vm5445 = vcmp.gt.f32.partialorder %v5413, 0.01
        %vm5446 = vcmp.gt.f32.partialorder %v5414, 0.01
        %vm5447 = vcmp.gt.f32.partialorder %v5415, 0.01
        %vm5448 = vcmp.gt.f32.partialorder %v5416, 0.01
        %vm5449 = vcmp.gt.f32.partialorder %v5417, 0.01
        %vm5450 = vcmp.gt.f32.partialorder %v5418, 0.01
        %vm5451 = vcmp.gt.f32.partialorder %v5419, 0.01
        %vm5452 = vcmp.gt.f32.partialorder %v5420, 0.01
        %vm5453 = vcmp.gt.f32.partialorder %v5421, 0.01
        %vm5454 = vcmp.gt.f32.partialorder %v5422, 0.01
        %vm5455 = vcmp.gt.f32.partialorder %v5423, 0.01
        %v5456 = vsel %vm5424, %v5392, 0.0
        %v5457 = vsel %vm5425, %v5393, 0.0
        %v5458 = vsel %vm5426, %v5394, 0.0
        %v5459 = vsel %vm5427, %v5395, 0.0
        %v5460 = vsel %vm5428, %v5396, 0.0
        %v5461 = vsel %vm5429, %v5397, 0.0
        %v5462 = vsel %vm5430, %v5398, 0.0
        %v5463 = vsel %vm5431, %v5399, 0.0
        %v5464 = vsel %vm5432, %v5400, 0.0
        %v5465 = vsel %vm5433, %v5401, 0.0
        %v5466 = vsel %vm5434, %v5402, 0.0
        %v5467 = vsel %vm5435, %v5403, 0.0
        %v5468 = vsel %vm5436, %v5404, 0.0
        %v5469 = vsel %vm5437, %v5405, 0.0
        %v5470 = vsel %vm5438, %v5406, 0.0
        %v5471 = vsel %vm5439, %v5407, 0.0
        %v5472 = vsel %vm5440, %v5408, 0.0
        %v5473 = vsel %vm5441, %v5409, 0.0
        %v5474 = vsel %vm5442, %v5410, 0.0
        %v5475 = vsel %vm5443, %v5411, 0.0
        %v5476 = vsel %vm5444, %v5412, 0.0
        %v5477 = vsel %vm5445, %v5413, 0.0
        %v5478 = vsel %vm5446, %v5414, 0.0
        %v5479 = vsel %vm5447, %v5415, 0.0
        %v5480 = vsel %vm5448, %v5416, 0.0
        %v5481 = vsel %vm5449, %v5417, 0.0
        %v5482 = vsel %vm5450, %v5418, 0.0
        %v5483 = vsel %vm5451, %v5419, 0.0
        %v5484 = vsel %vm5452, %v5420, 0.0
        %v5485 = vsel %vm5453, %v5421, 0.0
        %v5486 = vsel %vm5454, %v5422, 0.0
        %v5487 = vsel %vm5455, %v5423, 0.0
        %5488 = vst [vmem:[%s424] sm:$0xff] %v5456
        %5489 = vst [vmem:[%s424 + $0x8] sm:$0xff] %v5457
        %5490 = vst [vmem:[%s424 + $0x10] sm:$0xff] %v5458
        %5491 = vst [vmem:[%s424 + $0x18] sm:$0xff] %v5459
        %5492 = vst [vmem:[%s424 + $0x20] sm:$0xff] %v5460
        %5493 = vst [vmem:[%s424 + $0x28] sm:$0xff] %v5461
        %5494 = vst [vmem:[%s424 + $0x30] sm:$0xff] %v5462
        %5495 = vst [vmem:[%s424 + $0x38] sm:$0xff] %v5463
        %5496 = vst [vmem:[%s424 + $0x40] sm:$0xff] %v5464
        %5497 = vst [vmem:[%s424 + $0x48] sm:$0xff] %v5465
        %5498 = vst [vmem:[%s424 + $0x50] sm:$0xff] %v5466
        %5499 = vst [vmem:[%s424 + $0x58] sm:$0xff] %v5467
        %5500 = vst [vmem:[%s424 + $0x60] sm:$0xff] %v5468
        %5501 = vst [vmem:[%s424 + $0x68] sm:$0xff] %v5469
        %5502 = vst [vmem:[%s424 + $0x70] sm:$0xff] %v5470
        %5503 = vst [vmem:[%s424 + $0x78] sm:$0xff] %v5471
        %5504 = vst [vmem:[%s424 + $0x80] sm:$0xff] %v5472
        %5505 = vst [vmem:[%s424 + $0x88] sm:$0xff] %v5473
        %5506 = vst [vmem:[%s424 + $0x90] sm:$0xff] %v5474
        %5507 = vst [vmem:[%s424 + $0x98] sm:$0xff] %v5475
        %5508 = vst [vmem:[%s424 + $0xa0] sm:$0xff] %v5476
        %5509 = vst [vmem:[%s424 + $0xa8] sm:$0xff] %v5477
        %5510 = vst [vmem:[%s424 + $0xb0] sm:$0xff] %v5478
        %5511 = vst [vmem:[%s424 + $0xb8] sm:$0xff] %v5479
        %5512 = vst [vmem:[%s424 + $0xc0] sm:$0xff] %v5480
        %5513 = vst [vmem:[%s424 + $0xc8] sm:$0xff] %v5481
        %5514 = vst [vmem:[%s424 + $0xd0] sm:$0xff] %v5482
        %5515 = vst [vmem:[%s424 + $0xd8] sm:$0xff] %v5483
        %5516 = vst [vmem:[%s424 + $0xe0] sm:$0xff] %v5484
        %5517 = vst [vmem:[%s424 + $0xe8] sm:$0xff] %v5485
        %5518 = vst [vmem:[%s424 + $0xf0] sm:$0xff] %v5486
        %5519 = vst [vmem:[%s424 + $0xf8] sm:$0xff] %v5487
        %5520 = vst [vmem:[%s431] sm:$0xff] %v5392
        %5521 = vst [vmem:[%s431 + $0x8] sm:$0xff] %v5393
        %5522 = vst [vmem:[%s431 + $0x10] sm:$0xff] %v5394
        %5523 = vst [vmem:[%s431 + $0x18] sm:$0xff] %v5395
        %5524 = vst [vmem:[%s431 + $0x20] sm:$0xff] %v5396
        %5525 = vst [vmem:[%s431 + $0x28] sm:$0xff] %v5397
        %5526 = vst [vmem:[%s431 + $0x30] sm:$0xff] %v5398
        %5527 = vst [vmem:[%s431 + $0x38] sm:$0xff] %v5399
        %5528 = vst [vmem:[%s431 + $0x40] sm:$0xff] %v5400
        %5529 = vst [vmem:[%s431 + $0x48] sm:$0xff] %v5401
        %5530 = vst [vmem:[%s431 + $0x50] sm:$0xff] %v5402
        %5531 = vst [vmem:[%s431 + $0x58] sm:$0xff] %v5403
        %5532 = vst [vmem:[%s431 + $0x60] sm:$0xff] %v5404
        %5533 = vst [vmem:[%s431 + $0x68] sm:$0xff] %v5405
        %5534 = vst [vmem:[%s431 + $0x70] sm:$0xff] %v5406
        %5535 = vst [vmem:[%s431 + $0x78] sm:$0xff] %v5407
        %5536 = vst [vmem:[%s431 + $0x80] sm:$0xff] %v5408
        %5537 = vst [vmem:[%s431 + $0x88] sm:$0xff] %v5409
        %5538 = vst [vmem:[%s431 + $0x90] sm:$0xff] %v5410
        %5539 = vst [vmem:[%s431 + $0x98] sm:$0xff] %v5411
        %5540 = vst [vmem:[%s431 + $0xa0] sm:$0xff] %v5412
        %5541 = vst [vmem:[%s431 + $0xa8] sm:$0xff] %v5413
        %5542 = vst [vmem:[%s431 + $0xb0] sm:$0xff] %v5414
        %5543 = vst [vmem:[%s431 + $0xb8] sm:$0xff] %v5415
        %5544 = vst [vmem:[%s431 + $0xc0] sm:$0xff] %v5416
        %5545 = vst [vmem:[%s431 + $0xc8] sm:$0xff] %v5417
        %5546 = vst [vmem:[%s431 + $0xd0] sm:$0xff] %v5418
        %5547 = vst [vmem:[%s431 + $0xd8] sm:$0xff] %v5419
        %5548 = vst [vmem:[%s431 + $0xe0] sm:$0xff] %v5420
        %5549 = vst [vmem:[%s431 + $0xe8] sm:$0xff] %v5421
        %5550 = vst [vmem:[%s431 + $0xf0] sm:$0xff] %v5422
        %5551 = vst [vmem:[%s431 + $0xf8] sm:$0xff] %v5423
        %s5552 = sand.u32 %s224, 1
        %s5553 = scalar_lea.sflag [#allocation4], %s5552
        %s5554 = sand.u32 %s224, 1
        %s5555 = smul.addr %s5554, 256
        %s5556 = scalar_lea.vmem [#allocation8], %s5555
        %s5557 = sand.u32 %s250, 1
        %s5558 = scalar_lea.sflag [#allocation10], %s5557
        %s5559 = sand.u32 %s250, 1
        %s5560 = smul.addr %s5559, 256
        %s5561 = scalar_lea.vmem [#allocation9], %s5560
        // Predicated region
        $region65: #{tpu_custom_call.1} parent=51 // pred_check
          %p5562 = pneg %p234
        $region66: #{tpu_custom_call.1} parent=51 // pred_check_branch
          %5564 = sbr.rel (%p5562) target = $region68
        $region67: #{tpu_custom_call.1} parent=51 // pred_region
          %s5565 = smul.u32 32, %s33
          %s5567 = ssub.s32 4096, 4096
          %5568 = vsyncadd %s5553, %s5567
          %s5569 = smul.addr %s5565, 128
          %s5570 = scalar_lea.hbm %s8, %s5569
          %s5571 = sshll.u32 %s5556, 4
          %s5572 = int_to_ptr.vmem [resolvable:$true] %s5571
          %5577 = dma.vmem_to_hbm [thread:$0]  %s5572, 4096, %s5570, %s5553, 128, 128, 8
        $region68: #{tpu_custom_call.1} parent=51 // pred_fallthru
          _
        // Predicated region
        $region69: #{tpu_custom_call.1} parent=51 // pred_check
          %p5578 = pneg %p260
        $region70: #{tpu_custom_call.1} parent=51 // pred_check_branch
          %5580 = sbr.rel (%p5578) target = $region72
        $region71: #{tpu_custom_call.1} parent=51 // pred_region
          %s5581 = smul.u32 32, %s33
          %s5583 = ssub.s32 4096, 4096
          %5584 = vsyncadd %s5558, %s5583
          %s5585 = smul.addr %s5581, 128
          %s5586 = scalar_lea.hbm %s9, %s5585
          %s5587 = sshll.u32 %s5561, 4
          %s5588 = int_to_ptr.vmem [resolvable:$true] %s5587
          %5593 = dma.vmem_to_hbm [thread:$0]  %s5588, 4096, %s5586, %s5558, 128, 128, 8
        $region72: #{tpu_custom_call.1} parent=51 // pred_fallthru
          _
      $region52: #{tpu_custom_call.1} parent=5 // pred_fallthru
        _
      %p5594 = scmp.le.s32.totalorder 2, %s28
      // Predicated region
      $region73: #{tpu_custom_call.1} parent=5 // pred_check
        %p5595 = pneg %p5594
      $region74: #{tpu_custom_call.1} parent=5 // pred_check_branch
        %5597 = sbr.rel (%p5595) target = $region76
      $region75: #{tpu_custom_call.1} parent=5 // pred_region
        %s5598 = ssub.s32 %s28, 2
        // Predicated region
        $region77: #{tpu_custom_call.1} parent=75 // pred_check
          %p5599 = pneg %p240
        $region78: #{tpu_custom_call.1} parent=75 // pred_check_branch
          %5601 = sbr.rel (%p5599) target = $region80
        $region79: #{tpu_custom_call.1} parent=75 // pred_region
          %s5602 = sand.u32 %s225, 1
          %s5603 = scalar_lea.sflag [#allocation4], %s5602
          %s5604 = sand.u32 %s225, 1
          %s5605 = smul.addr %s5604, 256
          %s5606 = scalar_lea.vmem [#allocation8], %s5605
          %5607 = dma.done %s5603, 4096
        $region80: #{tpu_custom_call.1} parent=75 // pred_fallthru
          _
        // Predicated region
        $region81: #{tpu_custom_call.1} parent=75 // pred_check
          %p5608 = pneg %p266
        $region82: #{tpu_custom_call.1} parent=75 // pred_check_branch
          %5610 = sbr.rel (%p5608) target = $region84
        $region83: #{tpu_custom_call.1} parent=75 // pred_region
          %s5611 = sand.u32 %s251, 1
          %s5612 = scalar_lea.sflag [#allocation10], %s5611
          %s5613 = sand.u32 %s251, 1
          %s5614 = smul.addr %s5613, 256
          %s5615 = scalar_lea.vmem [#allocation9], %s5614
          %5616 = dma.done %s5612, 4096
        $region84: #{tpu_custom_call.1} parent=75 // pred_fallthru
          _
      $region76: #{tpu_custom_call.1} parent=5 // pred_fallthru
        _
    $region6: #{tpu_custom_call.1} parent=1 // loop_footer
      %s32 = sadd.s32 1, %s28
    $region7: #{tpu_custom_call.1} parent=1 // loop_footer_branch
      %27 = sbr.rel target = $region3
    $region8: #{tpu_custom_call.1} parent=1 // loop_exit
      _
    %5617 = vsyncpa [#allocation3], 1
    %s5618 = scalar_lea.sflag [#allocation3], 1
    %5619 = vsyncpa %s5618, 1
    %5620 = vsyncpa [#allocation6], 1
    %s5621 = scalar_lea.sflag [#allocation6], 1
    %5622 = vsyncpa %s5621, 1
    %5623 = vsyncpa [#allocation4], 1
    %s5624 = scalar_lea.sflag [#allocation4], 1
    %5625 = vsyncpa %s5624, 1
    %5626 = vsyncpa [#allocation10], 1
    %s5627 = scalar_lea.sflag [#allocation10], 1
    %5628 = vsyncpa %s5627, 1

</llo_original>
